<compile_context>
chip_gen: v6e
topology: v6e:2x2x1
jax: 0.10.0
libtpu: 0.0.40
codegen_flags: <defaults>
</compile_context>

<pallas_src>
import functools

import jax
import jax.numpy as jnp
import numpy as np
from jax.experimental import pallas as pl
from jax.experimental.pallas import tpu as pltpu

VOCAB_SIZE = 40     # len(vocab) in the original script (synthetic here)
EMBED_SIZE = 128
LATENT_DIM = 56
PAD_IDX = 0         # char_to_idx[pad_token]

P0 = 8              # valid-sequence row offset inside each SP-row batch block (>= max pad, mult of 8)
SP = 32             # padded per-sequence row count (>= S + P0, power of two, mult of 8)
OUTW = 128          # lane-dense fused fc output width (mu | logvar | zero pad)


# ----------------------------- Pallas kernel ------------------------------- #
def encoder_kernel(B, S,
                   tok_ref, w1_ref, b1_ref, w2_ref, b2_ref, w3_ref, b3_ref,
                   wfc_ref, bfc_ref, out_ref):
    N = B * SP
    V = w1_ref.shape[1]

    # Valid-row mask: rows [P0, P0+S) inside each SP-row batch block.
    ridx = jax.lax.broadcasted_iota(jnp.int32, (N, 1), 0)
    pos = ridx & (SP - 1)                                   # SP is a power of two
    rowmask = jnp.logical_and(pos >= P0, pos < P0 + S).astype(jnp.float32)

    # --- embedding as zero-padded one-hot (pad rows carry token == -1 -> all-zero) ---
    tok = tok_ref[...]                                      # [N, 1] int32
    vids = jax.lax.broadcasted_iota(jnp.int32, (N, V), 1)   # [N, V]
    x = (vids == tok).astype(jnp.float32)                   # [N, V]

    def conv_relu(xin, w_ref, b_ref, K, p):
        n, cin = xin.shape
        cout = b_ref.shape[1]
        zp = jnp.zeros((8, cin), jnp.float32)
        xe = jnp.concatenate([zp, xin, zp], axis=0)         # [n+16, cin], 8-row aligned blocks
        acc = jnp.zeros((n, cout), jnp.float32)
        for k in range(K):                                  # static unroll, one matmul per tap
            off = 8 - p + k
            acc = acc + jnp.dot(xe[off:off + n, :], w_ref[k],
                                preferred_element_type=jnp.float32)
        return jnp.maximum(acc + b_ref[...], 0.0) * rowmask

    h1 = conv_relu(x,  w1_ref, b1_ref, K=9,  p=4)           # [N, 9]  (embedding folded in)
    h2 = conv_relu(h1, w2_ref, b2_ref, K=9,  p=4)           # [N, 9]
    h3 = conv_relu(h2, w3_ref, b3_ref, K=11, p=5)           # [N, 10]

    # AdaptiveMaxPool1d(1): invalid rows are masked to 0 and relu output >= 0,
    # so max over the full SP rows equals max over the valid S positions.
    pooled = jnp.max(h3.reshape(B, SP, h3.shape[1]), axis=1)            # [B, 10]

    # Fused fc_mu | fc_logvar, lane-dense 128-wide output.
    out_ref[...] = (jnp.dot(pooled, wfc_ref[...],
                            preferred_element_type=jnp.float32) + bfc_ref[...])


# ------------------------------- wrapper ----------------------------------- #
def encoder_forward(tokens, params):
    """tokens: int32 [B, S].  Returns (mu, logvar), each [B, LATENT_DIM] f32."""
    B, S = tokens.shape
    emb, w1, b1, w2, b2, w3, b3, wmu, bmu, wlv, blv = params
    L = wmu.shape[0]
    assert S + P0 <= SP and (SP & (SP - 1)) == 0 and 2 * L <= OUTW

    # ---- layout plumbing / offline algebra (outside the kernel) ----
    # Per-sequence padded tokens; sentinel -1 makes the one-hot rows all-zero.
    tok_pad = jnp.full((B, SP), -1, jnp.int32)
    tok_pad = tok_pad.at[:, P0:P0 + S].set(tokens.astype(jnp.int32))
    tok_pad = tok_pad.reshape(B * SP, 1)

    # Conv weights to [K, Cin, Cout]; fold the embedding into conv1:
    #   (onehot @ emb) @ w1_k == onehot @ (emb @ w1_k)
    w1k = jnp.transpose(w1, (2, 1, 0))                      # [9, E, 9]
    w1f = jnp.einsum('ve,keo->kvo', emb, w1k)               # [9, V, 9]
    w2k = jnp.transpose(w2, (2, 1, 0))                      # [9, 9, 9]
    w3k = jnp.transpose(w3, (2, 1, 0))                      # [11, 9, 10]
    b1r, b2r, b3r = b1.reshape(1, -1), b2.reshape(1, -1), b3.reshape(1, -1)

    # fc_mu | fc_logvar packed into one [10, 128] weight (zero padded lanes).
    wfc = jnp.zeros((wmu.shape[1], OUTW), jnp.float32)
    wfc = wfc.at[:, :L].set(wmu.T).at[:, L:2 * L].set(wlv.T)
    bfc = jnp.zeros((1, OUTW), jnp.float32)
    bfc = bfc.at[0, :L].set(bmu).at[0, L:2 * L].set(blv)

    vmem = pl.BlockSpec(memory_space=pltpu.MemorySpace.VMEM)
    kernel = functools.partial(encoder_kernel, B, S)

    out = pl.pallas_call(
        kernel,
        out_shape=jax.ShapeDtypeStruct((B, OUTW), jnp.float32),
        in_specs=[vmem] * 9,
        out_specs=vmem,
    )(tok_pad, w1f, b1r, w2k, b2r, w3k, b3r, wfc, bfc)

    return out[:, :L], out[:, L:2 * L]


# ---------------------------- pure-JAX reference ---------------------------- #
def encoder_reference(tokens, params):
    emb, w1, b1, w2, b2, w3, b3, wmu, bmu, wlv, blv = params
    x = emb[tokens]                              # [B, S, E]
    x = jnp.transpose(x, (0, 2, 1))              # [B, E, S]  (NCW)

    def conv(x, w, b, pad):
        y = jax.lax.conv_general_dilated(
            x, w, window_strides=(1,), padding=[(pad, pad)],
            dimension_numbers=("NCH", "OIH", "NCH"))
        return jax.nn.relu(y + b[None, :, None])

    x = conv(x, w1, b1, 4)
    x = conv(x, w2, b2, 4)
    x = conv(x, w3, b3, 5)
    p = jnp.max(x, axis=2)                       # [B, 10]
    return p @ wmu.T + bmu, p @ wlv.T + blv


# ----------------------------- parameter init ------------------------------ #
def init_params(key):
    ks = jax.random.split(key, 11)
    emb = 0.5 * jax.random.normal(ks[0], (VOCAB_SIZE, EMBED_SIZE), jnp.float32)
    emb = emb.at[PAD_IDX].set(0.0)               # nn.Embedding padding_idx row is zero
    w1 = jax.random.normal(ks[1], (9, EMBED_SIZE, 9), jnp.float32) / np.sqrt(EMBED_SIZE * 9)
    b1 = 0.1 * jax.random.normal(ks[2], (9,), jnp.float32)
    w2 = jax.random.normal(ks[3], (9, 9, 9), jnp.float32) / np.sqrt(9 * 9)
    b2 = 0.1 * jax.random.normal(ks[4], (9,), jnp.float32)
    w3 = jax.random.normal(ks[5], (10, 9, 11), jnp.float32) / np.sqrt(9 * 11)
    b3 = 0.1 * jax.random.normal(ks[6], (10,), jnp.float32)
    wmu = jax.random.normal(ks[7], (LATENT_DIM, 10), jnp.float32) / np.sqrt(10)
    bmu = 0.1 * jax.random.normal(ks[8], (LATENT_DIM,), jnp.float32)
    wlv = jax.random.normal(ks[9], (LATENT_DIM, 10), jnp.float32) / np.sqrt(10)
    blv = 0.1 * jax.random.normal(ks[10], (LATENT_DIM,), jnp.float32)
    return (emb, w1, b1, w2, b2, w3, b3, wmu, bmu, wlv, blv)


if __name__ == "__main__":
    key = jax.random.PRNGKey(0)
    pkey, tkey = jax.random.split(key)
    params = init_params(pkey)

    B, S = 2, 16
    tokens = jax.random.randint(tkey, (B, S), 0, VOCAB_SIZE, dtype=jnp.int32)

    mu, logvar = encoder_forward(tokens, params)
    jax.block_until_ready((mu, logvar))

    mu_ref, lv_ref = encoder_reference(tokens, params)
    assert mu.shape == (B, LATENT_DIM) and logvar.shape == (B, LATENT_DIM)
    assert bool(jnp.all(jnp.isfinite(mu))) and bool(jnp.all(jnp.isfinite(logvar)))
    np.testing.assert_allclose(np.asarray(mu), np.asarray(mu_ref), rtol=3e-2, atol=3e-2)
    np.testing.assert_allclose(np.asarray(logvar), np.asarray(lv_ref), rtol=3e-2, atol=3e-2)

    print("KERNEL_OK")
</pallas_src>

<mosaic_0001>
module attributes {stable_mosaic.version = 11 : i64} {
  func.func @encoder_kernel(%arg0: memref<64x1xi32, #tpu.memory_space<vmem>>, %arg1: memref<9x40x9xf32, #tpu.memory_space<vmem>>, %arg2: memref<1x9xf32, #tpu.memory_space<vmem>>, %arg3: memref<9x9x9xf32, #tpu.memory_space<vmem>>, %arg4: memref<1x9xf32, #tpu.memory_space<vmem>>, %arg5: memref<11x9x10xf32, #tpu.memory_space<vmem>>, %arg6: memref<1x10xf32, #tpu.memory_space<vmem>>, %arg7: memref<10x128xf32, #tpu.memory_space<vmem>>, %arg8: memref<1x128xf32, #tpu.memory_space<vmem>>, %arg9: memref<2x128xf32, #tpu.memory_space<vmem>>) attributes {dimension_semantics = [], scalar_prefetch = 0 : i64, scratch_operands = 0 : i64, tpu.core_type = #tpu.core_type<tc>} {
    %0 = tpu.iota {dimensions = array<i32: 0>} : vector<64x1xi32>
    %c31_i32 = arith.constant 31 : i32
    %1 = vector.broadcast %c31_i32 : i32 to vector<64x1xi32>
    %2 = arith.andi %0, %1 : vector<64x1xi32>
    %c8_i32 = arith.constant 8 : i32
    %3 = vector.broadcast %c8_i32 : i32 to vector<64x1xi32>
    %4 = arith.cmpi sge, %2, %3 : vector<64x1xi32>
    %c24_i32 = arith.constant 24 : i32
    %5 = vector.broadcast %c24_i32 : i32 to vector<64x1xi32>
    %6 = arith.cmpi slt, %2, %5 : vector<64x1xi32>
    %7 = arith.andi %4, %6 : vector<64x1xi1>
    %8 = arith.extui %7 : vector<64x1xi1> to vector<64x1xi32>
    %9 = arith.sitofp %8 : vector<64x1xi32> to vector<64x1xf32>
    %c0 = arith.constant 0 : index
    %c0_0 = arith.constant 0 : index
    %10 = vector.load %arg0[%c0, %c0_0] : memref<64x1xi32, #tpu.memory_space<vmem>>, vector<64x1xi32>
    %11 = tpu.iota {dimensions = array<i32: 1>} : vector<64x40xi32>
    %12 = vector.broadcast %10 : vector<64x1xi32> to vector<64x40xi32>
    %13 = arith.cmpi eq, %11, %12 : vector<64x40xi32>
    %14 = arith.extui %13 : vector<64x40xi1> to vector<64x40xi32>
    %15 = arith.sitofp %14 : vector<64x40xi32> to vector<64x40xf32>
    %cst = arith.constant 0.000000e+00 : f32
    %16 = vector.broadcast %cst : f32 to vector<8x40xf32>
    %17 = tpu.concatenate %16, %15, %16 in 0 : vector<8x40xf32>, vector<64x40xf32>, vector<8x40xf32> -> vector<80x40xf32>
    %cst_1 = arith.constant 0.000000e+00 : f32
    %18 = vector.broadcast %cst_1 : f32 to vector<64x9xf32>
    %19 = vector.extract_strided_slice %17 {offsets = [4, 0], sizes = [64, 40], strides = [1, 1]} : vector<80x40xf32> to vector<64x40xf32>
    %c0_2 = arith.constant 0 : index
    %c0_3 = arith.constant 0 : index
    %c0_4 = arith.constant 0 : index
    %20 = vector.load %arg1[%c0_2, %c0_3, %c0_4] : memref<9x40x9xf32, #tpu.memory_space<vmem>>, vector<1x40x9xf32>
    %21 = vector.shape_cast %20 : vector<1x40x9xf32> to vector<40x9xf32>
    %cst_5 = arith.constant dense<0.000000e+00> : vector<64x9xf32>
    %22 = tpu.matmul %19, %21, %cst_5 {dimension_numbers = #tpu.dot_dimension_numbers<[1], [0], [0], [1], [0, 0, 1, 1], [], []>} : vector<64x40xf32>, vector<40x9xf32>, vector<64x9xf32> -> vector<64x9xf32>
    %23 = arith.addf %18, %22 : vector<64x9xf32>
    %24 = vector.extract_strided_slice %17 {offsets = [5, 0], sizes = [64, 40], strides = [1, 1]} : vector<80x40xf32> to vector<64x40xf32>
    %c1 = arith.constant 1 : index
    %c0_6 = arith.constant 0 : index
    %c0_7 = arith.constant 0 : index
    %25 = vector.load %arg1[%c1, %c0_6, %c0_7] : memref<9x40x9xf32, #tpu.memory_space<vmem>>, vector<1x40x9xf32>
    %26 = vector.shape_cast %25 : vector<1x40x9xf32> to vector<40x9xf32>
    %cst_8 = arith.constant dense<0.000000e+00> : vector<64x9xf32>
    %27 = tpu.matmul %24, %26, %cst_8 {dimension_numbers = #tpu.dot_dimension_numbers<[1], [0], [0], [1], [0, 0, 1, 1], [], []>} : vector<64x40xf32>, vector<40x9xf32>, vector<64x9xf32> -> vector<64x9xf32>
    %28 = arith.addf %23, %27 : vector<64x9xf32>
    %29 = vector.extract_strided_slice %17 {offsets = [6, 0], sizes = [64, 40], strides = [1, 1]} : vector<80x40xf32> to vector<64x40xf32>
    %c2 = arith.constant 2 : index
    %c0_9 = arith.constant 0 : index
    %c0_10 = arith.constant 0 : index
    %30 = vector.load %arg1[%c2, %c0_9, %c0_10] : memref<9x40x9xf32, #tpu.memory_space<vmem>>, vector<1x40x9xf32>
    %31 = vector.shape_cast %30 : vector<1x40x9xf32> to vector<40x9xf32>
    %cst_11 = arith.constant dense<0.000000e+00> : vector<64x9xf32>
    %32 = tpu.matmul %29, %31, %cst_11 {dimension_numbers = #tpu.dot_dimension_numbers<[1], [0], [0], [1], [0, 0, 1, 1], [], []>} : vector<64x40xf32>, vector<40x9xf32>, vector<64x9xf32> -> vector<64x9xf32>
    %33 = arith.addf %28, %32 : vector<64x9xf32>
    %34 = vector.extract_strided_slice %17 {offsets = [7, 0], sizes = [64, 40], strides = [1, 1]} : vector<80x40xf32> to vector<64x40xf32>
    %c3 = arith.constant 3 : index
    %c0_12 = arith.constant 0 : index
    %c0_13 = arith.constant 0 : index
    %35 = vector.load %arg1[%c3, %c0_12, %c0_13] : memref<9x40x9xf32, #tpu.memory_space<vmem>>, vector<1x40x9xf32>
    %36 = vector.shape_cast %35 : vector<1x40x9xf32> to vector<40x9xf32>
    %cst_14 = arith.constant dense<0.000000e+00> : vector<64x9xf32>
    %37 = tpu.matmul %34, %36, %cst_14 {dimension_numbers = #tpu.dot_dimension_numbers<[1], [0], [0], [1], [0, 0, 1, 1], [], []>} : vector<64x40xf32>, vector<40x9xf32>, vector<64x9xf32> -> vector<64x9xf32>
    %38 = arith.addf %33, %37 : vector<64x9xf32>
    %39 = vector.extract_strided_slice %17 {offsets = [8, 0], sizes = [64, 40], strides = [1, 1]} : vector<80x40xf32> to vector<64x40xf32>
    %c4 = arith.constant 4 : index
    %c0_15 = arith.constant 0 : index
    %c0_16 = arith.constant 0 : index
    %40 = vector.load %arg1[%c4, %c0_15, %c0_16] : memref<9x40x9xf32, #tpu.memory_space<vmem>>, vector<1x40x9xf32>
    %41 = vector.shape_cast %40 : vector<1x40x9xf32> to vector<40x9xf32>
    %cst_17 = arith.constant dense<0.000000e+00> : vector<64x9xf32>
    %42 = tpu.matmul %39, %41, %cst_17 {dimension_numbers = #tpu.dot_dimension_numbers<[1], [0], [0], [1], [0, 0, 1, 1], [], []>} : vector<64x40xf32>, vector<40x9xf32>, vector<64x9xf32> -> vector<64x9xf32>
    %43 = arith.addf %38, %42 : vector<64x9xf32>
    %44 = vector.extract_strided_slice %17 {offsets = [9, 0], sizes = [64, 40], strides = [1, 1]} : vector<80x40xf32> to vector<64x40xf32>
    %c5 = arith.constant 5 : index
    %c0_18 = arith.constant 0 : index
    %c0_19 = arith.constant 0 : index
    %45 = vector.load %arg1[%c5, %c0_18, %c0_19] : memref<9x40x9xf32, #tpu.memory_space<vmem>>, vector<1x40x9xf32>
    %46 = vector.shape_cast %45 : vector<1x40x9xf32> to vector<40x9xf32>
    %cst_20 = arith.constant dense<0.000000e+00> : vector<64x9xf32>
    %47 = tpu.matmul %44, %46, %cst_20 {dimension_numbers = #tpu.dot_dimension_numbers<[1], [0], [0], [1], [0, 0, 1, 1], [], []>} : vector<64x40xf32>, vector<40x9xf32>, vector<64x9xf32> -> vector<64x9xf32>
    %48 = arith.addf %43, %47 : vector<64x9xf32>
    %49 = vector.extract_strided_slice %17 {offsets = [10, 0], sizes = [64, 40], strides = [1, 1]} : vector<80x40xf32> to vector<64x40xf32>
    %c6 = arith.constant 6 : index
    %c0_21 = arith.constant 0 : index
    %c0_22 = arith.constant 0 : index
    %50 = vector.load %arg1[%c6, %c0_21, %c0_22] : memref<9x40x9xf32, #tpu.memory_space<vmem>>, vector<1x40x9xf32>
    %51 = vector.shape_cast %50 : vector<1x40x9xf32> to vector<40x9xf32>
    %cst_23 = arith.constant dense<0.000000e+00> : vector<64x9xf32>
    %52 = tpu.matmul %49, %51, %cst_23 {dimension_numbers = #tpu.dot_dimension_numbers<[1], [0], [0], [1], [0, 0, 1, 1], [], []>} : vector<64x40xf32>, vector<40x9xf32>, vector<64x9xf32> -> vector<64x9xf32>
    %53 = arith.addf %48, %52 : vector<64x9xf32>
    %54 = vector.extract_strided_slice %17 {offsets = [11, 0], sizes = [64, 40], strides = [1, 1]} : vector<80x40xf32> to vector<64x40xf32>
    %c7 = arith.constant 7 : index
    %c0_24 = arith.constant 0 : index
    %c0_25 = arith.constant 0 : index
    %55 = vector.load %arg1[%c7, %c0_24, %c0_25] : memref<9x40x9xf32, #tpu.memory_space<vmem>>, vector<1x40x9xf32>
    %56 = vector.shape_cast %55 : vector<1x40x9xf32> to vector<40x9xf32>
    %cst_26 = arith.constant dense<0.000000e+00> : vector<64x9xf32>
    %57 = tpu.matmul %54, %56, %cst_26 {dimension_numbers = #tpu.dot_dimension_numbers<[1], [0], [0], [1], [0, 0, 1, 1], [], []>} : vector<64x40xf32>, vector<40x9xf32>, vector<64x9xf32> -> vector<64x9xf32>
    %58 = arith.addf %53, %57 : vector<64x9xf32>
    %59 = vector.extract_strided_slice %17 {offsets = [12, 0], sizes = [64, 40], strides = [1, 1]} : vector<80x40xf32> to vector<64x40xf32>
    %c8 = arith.constant 8 : index
    %c0_27 = arith.constant 0 : index
    %c0_28 = arith.constant 0 : index
    %60 = vector.load %arg1[%c8, %c0_27, %c0_28] : memref<9x40x9xf32, #tpu.memory_space<vmem>>, vector<1x40x9xf32>
    %61 = vector.shape_cast %60 : vector<1x40x9xf32> to vector<40x9xf32>
    %cst_29 = arith.constant dense<0.000000e+00> : vector<64x9xf32>
    %62 = tpu.matmul %59, %61, %cst_29 {dimension_numbers = #tpu.dot_dimension_numbers<[1], [0], [0], [1], [0, 0, 1, 1], [], []>} : vector<64x40xf32>, vector<40x9xf32>, vector<64x9xf32> -> vector<64x9xf32>
    %63 = arith.addf %58, %62 : vector<64x9xf32>
    %c0_30 = arith.constant 0 : index
    %c0_31 = arith.constant 0 : index
    %64 = vector.load %arg2[%c0_30, %c0_31] : memref<1x9xf32, #tpu.memory_space<vmem>>, vector<1x9xf32>
    %65 = vector.broadcast %64 : vector<1x9xf32> to vector<64x9xf32>
    %66 = arith.addf %63, %65 : vector<64x9xf32>
    %cst_32 = arith.constant 0.000000e+00 : f32
    %67 = vector.broadcast %cst_32 : f32 to vector<64x9xf32>
    %68 = arith.maximumf %66, %67 : vector<64x9xf32>
    %69 = vector.broadcast %9 : vector<64x1xf32> to vector<64x9xf32>
    %70 = arith.mulf %68, %69 : vector<64x9xf32>
    %cst_33 = arith.constant 0.000000e+00 : f32
    %71 = vector.broadcast %cst_33 : f32 to vector<8x9xf32>
    %72 = tpu.concatenate %71, %70, %71 in 0 : vector<8x9xf32>, vector<64x9xf32>, vector<8x9xf32> -> vector<80x9xf32>
    %cst_34 = arith.constant 0.000000e+00 : f32
    %73 = vector.broadcast %cst_34 : f32 to vector<64x9xf32>
    %74 = vector.extract_strided_slice %72 {offsets = [4, 0], sizes = [64, 9], strides = [1, 1]} : vector<80x9xf32> to vector<64x9xf32>
    %c0_35 = arith.constant 0 : index
    %c0_36 = arith.constant 0 : index
    %c0_37 = arith.constant 0 : index
    %75 = vector.load %arg3[%c0_35, %c0_36, %c0_37] : memref<9x9x9xf32, #tpu.memory_space<vmem>>, vector<1x9x9xf32>
    %76 = vector.shape_cast %75 : vector<1x9x9xf32> to vector<9x9xf32>
    %cst_38 = arith.constant dense<0.000000e+00> : vector<64x9xf32>
    %77 = tpu.matmul %74, %76, %cst_38 {dimension_numbers = #tpu.dot_dimension_numbers<[1], [0], [0], [1], [0, 0, 1, 1], [], []>} : vector<64x9xf32>, vector<9x9xf32>, vector<64x9xf32> -> vector<64x9xf32>
    %78 = arith.addf %73, %77 : vector<64x9xf32>
    %79 = vector.extract_strided_slice %72 {offsets = [5, 0], sizes = [64, 9], strides = [1, 1]} : vector<80x9xf32> to vector<64x9xf32>
    %c1_39 = arith.constant 1 : index
    %c0_40 = arith.constant 0 : index
    %c0_41 = arith.constant 0 : index
    %80 = vector.load %arg3[%c1_39, %c0_40, %c0_41] : memref<9x9x9xf32, #tpu.memory_space<vmem>>, vector<1x9x9xf32>
    %81 = vector.shape_cast %80 : vector<1x9x9xf32> to vector<9x9xf32>
    %cst_42 = arith.constant dense<0.000000e+00> : vector<64x9xf32>
    %82 = tpu.matmul %79, %81, %cst_42 {dimension_numbers = #tpu.dot_dimension_numbers<[1], [0], [0], [1], [0, 0, 1, 1], [], []>} : vector<64x9xf32>, vector<9x9xf32>, vector<64x9xf32> -> vector<64x9xf32>
    %83 = arith.addf %78, %82 : vector<64x9xf32>
    %84 = vector.extract_strided_slice %72 {offsets = [6, 0], sizes = [64, 9], strides = [1, 1]} : vector<80x9xf32> to vector<64x9xf32>
    %c2_43 = arith.constant 2 : index
    %c0_44 = arith.constant 0 : index
    %c0_45 = arith.constant 0 : index
    %85 = vector.load %arg3[%c2_43, %c0_44, %c0_45] : memref<9x9x9xf32, #tpu.memory_space<vmem>>, vector<1x9x9xf32>
    %86 = vector.shape_cast %85 : vector<1x9x9xf32> to vector<9x9xf32>
    %cst_46 = arith.constant dense<0.000000e+00> : vector<64x9xf32>
    %87 = tpu.matmul %84, %86, %cst_46 {dimension_numbers = #tpu.dot_dimension_numbers<[1], [0], [0], [1], [0, 0, 1, 1], [], []>} : vector<64x9xf32>, vector<9x9xf32>, vector<64x9xf32> -> vector<64x9xf32>
    %88 = arith.addf %83, %87 : vector<64x9xf32>
    %89 = vector.extract_strided_slice %72 {offsets = [7, 0], sizes = [64, 9], strides = [1, 1]} : vector<80x9xf32> to vector<64x9xf32>
    %c3_47 = arith.constant 3 : index
    %c0_48 = arith.constant 0 : index
    %c0_49 = arith.constant 0 : index
    %90 = vector.load %arg3[%c3_47, %c0_48, %c0_49] : memref<9x9x9xf32, #tpu.memory_space<vmem>>, vector<1x9x9xf32>
    %91 = vector.shape_cast %90 : vector<1x9x9xf32> to vector<9x9xf32>
    %cst_50 = arith.constant dense<0.000000e+00> : vector<64x9xf32>
    %92 = tpu.matmul %89, %91, %cst_50 {dimension_numbers = #tpu.dot_dimension_numbers<[1], [0], [0], [1], [0, 0, 1, 1], [], []>} : vector<64x9xf32>, vector<9x9xf32>, vector<64x9xf32> -> vector<64x9xf32>
    %93 = arith.addf %88, %92 : vector<64x9xf32>
    %94 = vector.extract_strided_slice %72 {offsets = [8, 0], sizes = [64, 9], strides = [1, 1]} : vector<80x9xf32> to vector<64x9xf32>
    %c4_51 = arith.constant 4 : index
    %c0_52 = arith.constant 0 : index
    %c0_53 = arith.constant 0 : index
    %95 = vector.load %arg3[%c4_51, %c0_52, %c0_53] : memref<9x9x9xf32, #tpu.memory_space<vmem>>, vector<1x9x9xf32>
    %96 = vector.shape_cast %95 : vector<1x9x9xf32> to vector<9x9xf32>
    %cst_54 = arith.constant dense<0.000000e+00> : vector<64x9xf32>
    %97 = tpu.matmul %94, %96, %cst_54 {dimension_numbers = #tpu.dot_dimension_numbers<[1], [0], [0], [1], [0, 0, 1, 1], [], []>} : vector<64x9xf32>, vector<9x9xf32>, vector<64x9xf32> -> vector<64x9xf32>
    %98 = arith.addf %93, %97 : vector<64x9xf32>
    %99 = vector.extract_strided_slice %72 {offsets = [9, 0], sizes = [64, 9], strides = [1, 1]} : vector<80x9xf32> to vector<64x9xf32>
    %c5_55 = arith.constant 5 : index
    %c0_56 = arith.constant 0 : index
    %c0_57 = arith.constant 0 : index
    %100 = vector.load %arg3[%c5_55, %c0_56, %c0_57] : memref<9x9x9xf32, #tpu.memory_space<vmem>>, vector<1x9x9xf32>
    %101 = vector.shape_cast %100 : vector<1x9x9xf32> to vector<9x9xf32>
    %cst_58 = arith.constant dense<0.000000e+00> : vector<64x9xf32>
    %102 = tpu.matmul %99, %101, %cst_58 {dimension_numbers = #tpu.dot_dimension_numbers<[1], [0], [0], [1], [0, 0, 1, 1], [], []>} : vector<64x9xf32>, vector<9x9xf32>, vector<64x9xf32> -> vector<64x9xf32>
    %103 = arith.addf %98, %102 : vector<64x9xf32>
    %104 = vector.extract_strided_slice %72 {offsets = [10, 0], sizes = [64, 9], strides = [1, 1]} : vector<80x9xf32> to vector<64x9xf32>
    %c6_59 = arith.constant 6 : index
    %c0_60 = arith.constant 0 : index
    %c0_61 = arith.constant 0 : index
    %105 = vector.load %arg3[%c6_59, %c0_60, %c0_61] : memref<9x9x9xf32, #tpu.memory_space<vmem>>, vector<1x9x9xf32>
    %106 = vector.shape_cast %105 : vector<1x9x9xf32> to vector<9x9xf32>
    %cst_62 = arith.constant dense<0.000000e+00> : vector<64x9xf32>
    %107 = tpu.matmul %104, %106, %cst_62 {dimension_numbers = #tpu.dot_dimension_numbers<[1], [0], [0], [1], [0, 0, 1, 1], [], []>} : vector<64x9xf32>, vector<9x9xf32>, vector<64x9xf32> -> vector<64x9xf32>
    %108 = arith.addf %103, %107 : vector<64x9xf32>
    %109 = vector.extract_strided_slice %72 {offsets = [11, 0], sizes = [64, 9], strides = [1, 1]} : vector<80x9xf32> to vector<64x9xf32>
    %c7_63 = arith.constant 7 : index
    %c0_64 = arith.constant 0 : index
    %c0_65 = arith.constant 0 : index
    %110 = vector.load %arg3[%c7_63, %c0_64, %c0_65] : memref<9x9x9xf32, #tpu.memory_space<vmem>>, vector<1x9x9xf32>
    %111 = vector.shape_cast %110 : vector<1x9x9xf32> to vector<9x9xf32>
    %cst_66 = arith.constant dense<0.000000e+00> : vector<64x9xf32>
    %112 = tpu.matmul %109, %111, %cst_66 {dimension_numbers = #tpu.dot_dimension_numbers<[1], [0], [0], [1], [0, 0, 1, 1], [], []>} : vector<64x9xf32>, vector<9x9xf32>, vector<64x9xf32> -> vector<64x9xf32>
    %113 = arith.addf %108, %112 : vector<64x9xf32>
    %114 = vector.extract_strided_slice %72 {offsets = [12, 0], sizes = [64, 9], strides = [1, 1]} : vector<80x9xf32> to vector<64x9xf32>
    %c8_67 = arith.constant 8 : index
    %c0_68 = arith.constant 0 : index
    %c0_69 = arith.constant 0 : index
    %115 = vector.load %arg3[%c8_67, %c0_68, %c0_69] : memref<9x9x9xf32, #tpu.memory_space<vmem>>, vector<1x9x9xf32>
    %116 = vector.shape_cast %115 : vector<1x9x9xf32> to vector<9x9xf32>
    %cst_70 = arith.constant dense<0.000000e+00> : vector<64x9xf32>
    %117 = tpu.matmul %114, %116, %cst_70 {dimension_numbers = #tpu.dot_dimension_numbers<[1], [0], [0], [1], [0, 0, 1, 1], [], []>} : vector<64x9xf32>, vector<9x9xf32>, vector<64x9xf32> -> vector<64x9xf32>
    %118 = arith.addf %113, %117 : vector<64x9xf32>
    %c0_71 = arith.constant 0 : index
    %c0_72 = arith.constant 0 : index
    %119 = vector.load %arg4[%c0_71, %c0_72] : memref<1x9xf32, #tpu.memory_space<vmem>>, vector<1x9xf32>
    %120 = vector.broadcast %119 : vector<1x9xf32> to vector<64x9xf32>
    %121 = arith.addf %118, %120 : vector<64x9xf32>
    %cst_73 = arith.constant 0.000000e+00 : f32
    %122 = vector.broadcast %cst_73 : f32 to vector<64x9xf32>
    %123 = arith.maximumf %121, %122 : vector<64x9xf32>
    %124 = vector.broadcast %9 : vector<64x1xf32> to vector<64x9xf32>
    %125 = arith.mulf %123, %124 : vector<64x9xf32>
    %cst_74 = arith.constant 0.000000e+00 : f32
    %126 = vector.broadcast %cst_74 : f32 to vector<8x9xf32>
    %127 = tpu.concatenate %126, %125, %126 in 0 : vector<8x9xf32>, vector<64x9xf32>, vector<8x9xf32> -> vector<80x9xf32>
    %cst_75 = arith.constant 0.000000e+00 : f32
    %128 = vector.broadcast %cst_75 : f32 to vector<64x10xf32>
    %129 = vector.extract_strided_slice %127 {offsets = [3, 0], sizes = [64, 9], strides = [1, 1]} : vector<80x9xf32> to vector<64x9xf32>
    %c0_76 = arith.constant 0 : index
    %c0_77 = arith.constant 0 : index
    %c0_78 = arith.constant 0 : index
    %130 = vector.load %arg5[%c0_76, %c0_77, %c0_78] : memref<11x9x10xf32, #tpu.memory_space<vmem>>, vector<1x9x10xf32>
    %131 = vector.shape_cast %130 : vector<1x9x10xf32> to vector<9x10xf32>
    %cst_79 = arith.constant dense<0.000000e+00> : vector<64x10xf32>
    %132 = tpu.matmul %129, %131, %cst_79 {dimension_numbers = #tpu.dot_dimension_numbers<[1], [0], [0], [1], [0, 0, 1, 1], [], []>} : vector<64x9xf32>, vector<9x10xf32>, vector<64x10xf32> -> vector<64x10xf32>
    %133 = arith.addf %128, %132 : vector<64x10xf32>
    %134 = vector.extract_strided_slice %127 {offsets = [4, 0], sizes = [64, 9], strides = [1, 1]} : vector<80x9xf32> to vector<64x9xf32>
    %c1_80 = arith.constant 1 : index
    %c0_81 = arith.constant 0 : index
    %c0_82 = arith.constant 0 : index
    %135 = vector.load %arg5[%c1_80, %c0_81, %c0_82] : memref<11x9x10xf32, #tpu.memory_space<vmem>>, vector<1x9x10xf32>
    %136 = vector.shape_cast %135 : vector<1x9x10xf32> to vector<9x10xf32>
    %cst_83 = arith.constant dense<0.000000e+00> : vector<64x10xf32>
    %137 = tpu.matmul %134, %136, %cst_83 {dimension_numbers = #tpu.dot_dimension_numbers<[1], [0], [0], [1], [0, 0, 1, 1], [], []>} : vector<64x9xf32>, vector<9x10xf32>, vector<64x10xf32> -> vector<64x10xf32>
    %138 = arith.addf %133, %137 : vector<64x10xf32>
    %139 = vector.extract_strided_slice %127 {offsets = [5, 0], sizes = [64, 9], strides = [1, 1]} : vector<80x9xf32> to vector<64x9xf32>
    %c2_84 = arith.constant 2 : index
    %c0_85 = arith.constant 0 : index
    %c0_86 = arith.constant 0 : index
    %140 = vector.load %arg5[%c2_84, %c0_85, %c0_86] : memref<11x9x10xf32, #tpu.memory_space<vmem>>, vector<1x9x10xf32>
    %141 = vector.shape_cast %140 : vector<1x9x10xf32> to vector<9x10xf32>
    %cst_87 = arith.constant dense<0.000000e+00> : vector<64x10xf32>
    %142 = tpu.matmul %139, %141, %cst_87 {dimension_numbers = #tpu.dot_dimension_numbers<[1], [0], [0], [1], [0, 0, 1, 1], [], []>} : vector<64x9xf32>, vector<9x10xf32>, vector<64x10xf32> -> vector<64x10xf32>
    %143 = arith.addf %138, %142 : vector<64x10xf32>
    %144 = vector.extract_strided_slice %127 {offsets = [6, 0], sizes = [64, 9], strides = [1, 1]} : vector<80x9xf32> to vector<64x9xf32>
    %c3_88 = arith.constant 3 : index
    %c0_89 = arith.constant 0 : index
    %c0_90 = arith.constant 0 : index
    %145 = vector.load %arg5[%c3_88, %c0_89, %c0_90] : memref<11x9x10xf32, #tpu.memory_space<vmem>>, vector<1x9x10xf32>
    %146 = vector.shape_cast %145 : vector<1x9x10xf32> to vector<9x10xf32>
    %cst_91 = arith.constant dense<0.000000e+00> : vector<64x10xf32>
    %147 = tpu.matmul %144, %146, %cst_91 {dimension_numbers = #tpu.dot_dimension_numbers<[1], [0], [0], [1], [0, 0, 1, 1], [], []>} : vector<64x9xf32>, vector<9x10xf32>, vector<64x10xf32> -> vector<64x10xf32>
    %148 = arith.addf %143, %147 : vector<64x10xf32>
    %149 = vector.extract_strided_slice %127 {offsets = [7, 0], sizes = [64, 9], strides = [1, 1]} : vector<80x9xf32> to vector<64x9xf32>
    %c4_92 = arith.constant 4 : index
    %c0_93 = arith.constant 0 : index
    %c0_94 = arith.constant 0 : index
    %150 = vector.load %arg5[%c4_92, %c0_93, %c0_94] : memref<11x9x10xf32, #tpu.memory_space<vmem>>, vector<1x9x10xf32>
    %151 = vector.shape_cast %150 : vector<1x9x10xf32> to vector<9x10xf32>
    %cst_95 = arith.constant dense<0.000000e+00> : vector<64x10xf32>
    %152 = tpu.matmul %149, %151, %cst_95 {dimension_numbers = #tpu.dot_dimension_numbers<[1], [0], [0], [1], [0, 0, 1, 1], [], []>} : vector<64x9xf32>, vector<9x10xf32>, vector<64x10xf32> -> vector<64x10xf32>
    %153 = arith.addf %148, %152 : vector<64x10xf32>
    %154 = vector.extract_strided_slice %127 {offsets = [8, 0], sizes = [64, 9], strides = [1, 1]} : vector<80x9xf32> to vector<64x9xf32>
    %c5_96 = arith.constant 5 : index
    %c0_97 = arith.constant 0 : index
    %c0_98 = arith.constant 0 : index
    %155 = vector.load %arg5[%c5_96, %c0_97, %c0_98] : memref<11x9x10xf32, #tpu.memory_space<vmem>>, vector<1x9x10xf32>
    %156 = vector.shape_cast %155 : vector<1x9x10xf32> to vector<9x10xf32>
    %cst_99 = arith.constant dense<0.000000e+00> : vector<64x10xf32>
    %157 = tpu.matmul %154, %156, %cst_99 {dimension_numbers = #tpu.dot_dimension_numbers<[1], [0], [0], [1], [0, 0, 1, 1], [], []>} : vector<64x9xf32>, vector<9x10xf32>, vector<64x10xf32> -> vector<64x10xf32>
    %158 = arith.addf %153, %157 : vector<64x10xf32>
    %159 = vector.extract_strided_slice %127 {offsets = [9, 0], sizes = [64, 9], strides = [1, 1]} : vector<80x9xf32> to vector<64x9xf32>
    %c6_100 = arith.constant 6 : index
    %c0_101 = arith.constant 0 : index
    %c0_102 = arith.constant 0 : index
    %160 = vector.load %arg5[%c6_100, %c0_101, %c0_102] : memref<11x9x10xf32, #tpu.memory_space<vmem>>, vector<1x9x10xf32>
    %161 = vector.shape_cast %160 : vector<1x9x10xf32> to vector<9x10xf32>
    %cst_103 = arith.constant dense<0.000000e+00> : vector<64x10xf32>
    %162 = tpu.matmul %159, %161, %cst_103 {dimension_numbers = #tpu.dot_dimension_numbers<[1], [0], [0], [1], [0, 0, 1, 1], [], []>} : vector<64x9xf32>, vector<9x10xf32>, vector<64x10xf32> -> vector<64x10xf32>
    %163 = arith.addf %158, %162 : vector<64x10xf32>
    %164 = vector.extract_strided_slice %127 {offsets = [10, 0], sizes = [64, 9], strides = [1, 1]} : vector<80x9xf32> to vector<64x9xf32>
    %c7_104 = arith.constant 7 : index
    %c0_105 = arith.constant 0 : index
    %c0_106 = arith.constant 0 : index
    %165 = vector.load %arg5[%c7_104, %c0_105, %c0_106] : memref<11x9x10xf32, #tpu.memory_space<vmem>>, vector<1x9x10xf32>
    %166 = vector.shape_cast %165 : vector<1x9x10xf32> to vector<9x10xf32>
    %cst_107 = arith.constant dense<0.000000e+00> : vector<64x10xf32>
    %167 = tpu.matmul %164, %166, %cst_107 {dimension_numbers = #tpu.dot_dimension_numbers<[1], [0], [0], [1], [0, 0, 1, 1], [], []>} : vector<64x9xf32>, vector<9x10xf32>, vector<64x10xf32> -> vector<64x10xf32>
    %168 = arith.addf %163, %167 : vector<64x10xf32>
    %169 = vector.extract_strided_slice %127 {offsets = [11, 0], sizes = [64, 9], strides = [1, 1]} : vector<80x9xf32> to vector<64x9xf32>
    %c8_108 = arith.constant 8 : index
    %c0_109 = arith.constant 0 : index
    %c0_110 = arith.constant 0 : index
    %170 = vector.load %arg5[%c8_108, %c0_109, %c0_110] : memref<11x9x10xf32, #tpu.memory_space<vmem>>, vector<1x9x10xf32>
    %171 = vector.shape_cast %170 : vector<1x9x10xf32> to vector<9x10xf32>
    %cst_111 = arith.constant dense<0.000000e+00> : vector<64x10xf32>
    %172 = tpu.matmul %169, %171, %cst_111 {dimension_numbers = #tpu.dot_dimension_numbers<[1], [0], [0], [1], [0, 0, 1, 1], [], []>} : vector<64x9xf32>, vector<9x10xf32>, vector<64x10xf32> -> vector<64x10xf32>
    %173 = arith.addf %168, %172 : vector<64x10xf32>
    %174 = vector.extract_strided_slice %127 {offsets = [12, 0], sizes = [64, 9], strides = [1, 1]} : vector<80x9xf32> to vector<64x9xf32>
    %c9 = arith.constant 9 : index
    %c0_112 = arith.constant 0 : index
    %c0_113 = arith.constant 0 : index
    %175 = vector.load %arg5[%c9, %c0_112, %c0_113] : memref<11x9x10xf32, #tpu.memory_space<vmem>>, vector<1x9x10xf32>
    %176 = vector.shape_cast %175 : vector<1x9x10xf32> to vector<9x10xf32>
    %cst_114 = arith.constant dense<0.000000e+00> : vector<64x10xf32>
    %177 = tpu.matmul %174, %176, %cst_114 {dimension_numbers = #tpu.dot_dimension_numbers<[1], [0], [0], [1], [0, 0, 1, 1], [], []>} : vector<64x9xf32>, vector<9x10xf32>, vector<64x10xf32> -> vector<64x10xf32>
    %178 = arith.addf %173, %177 : vector<64x10xf32>
    %179 = vector.extract_strided_slice %127 {offsets = [13, 0], sizes = [64, 9], strides = [1, 1]} : vector<80x9xf32> to vector<64x9xf32>
    %c10 = arith.constant 10 : index
    %c0_115 = arith.constant 0 : index
    %c0_116 = arith.constant 0 : index
    %180 = vector.load %arg5[%c10, %c0_115, %c0_116] : memref<11x9x10xf32, #tpu.memory_space<vmem>>, vector<1x9x10xf32>
    %181 = vector.shape_cast %180 : vector<1x9x10xf32> to vector<9x10xf32>
    %cst_117 = arith.constant dense<0.000000e+00> : vector<64x10xf32>
    %182 = tpu.matmul %179, %181, %cst_117 {dimension_numbers = #tpu.dot_dimension_numbers<[1], [0], [0], [1], [0, 0, 1, 1], [], []>} : vector<64x9xf32>, vector<9x10xf32>, vector<64x10xf32> -> vector<64x10xf32>
    %183 = arith.addf %178, %182 : vector<64x10xf32>
    %c0_118 = arith.constant 0 : index
    %c0_119 = arith.constant 0 : index
    %184 = vector.load %arg6[%c0_118, %c0_119] : memref<1x10xf32, #tpu.memory_space<vmem>>, vector<1x10xf32>
    %185 = vector.broadcast %184 : vector<1x10xf32> to vector<64x10xf32>
    %186 = arith.addf %183, %185 : vector<64x10xf32>
    %cst_120 = arith.constant 0.000000e+00 : f32
    %187 = vector.broadcast %cst_120 : f32 to vector<64x10xf32>
    %188 = arith.maximumf %186, %187 : vector<64x10xf32>
    %189 = vector.broadcast %9 : vector<64x1xf32> to vector<64x10xf32>
    %190 = arith.mulf %188, %189 : vector<64x10xf32>
    %191 = vector.shape_cast %190 : vector<64x10xf32> to vector<2x32x10xf32>
    %cst_121 = arith.constant dense<0xFF800000> : vector<2x10xf32>
    %192 = vector.multi_reduction <maximumf>, %191, %cst_121 [1] : vector<2x32x10xf32> to vector<2x10xf32>
    %c0_122 = arith.constant 0 : index
    %c0_123 = arith.constant 0 : index
    %193 = vector.load %arg7[%c0_122, %c0_123] : memref<10x128xf32, #tpu.memory_space<vmem>>, vector<10x128xf32>
    %cst_124 = arith.constant dense<0.000000e+00> : vector<2x128xf32>
    %194 = tpu.matmul %192, %193, %cst_124 {dimension_numbers = #tpu.dot_dimension_numbers<[1], [0], [0], [1], [0, 0, 1, 1], [], []>} : vector<2x10xf32>, vector<10x128xf32>, vector<2x128xf32> -> vector<2x128xf32>
    %c0_125 = arith.constant 0 : index
    %c0_126 = arith.constant 0 : index
    %195 = vector.load %arg8[%c0_125, %c0_126] : memref<1x128xf32, #tpu.memory_space<vmem>>, vector<1x128xf32>
    %196 = vector.broadcast %195 : vector<1x128xf32> to vector<2x128xf32>
    %197 = arith.addf %194, %196 : vector<2x128xf32>
    %c0_127 = arith.constant 0 : index
    %c0_128 = arith.constant 0 : index
    %198 = vector.load %arg9[%c0_127, %c0_128] : memref<2x128xf32, #tpu.memory_space<vmem>>, vector<2x128xf32>
    tpu.vector_store %arg9[%c0_127, %c0_128], %197 {strides = array<i32>} : memref<2x128xf32, #tpu.memory_space<vmem>>, vector<2x128xf32>,
    return
  }
}

</mosaic_0001>

<llo_original>
// kernel: tpu_custom_call.1
$region0: #{tpu_custom_call.1}
  #allocation0 [shape = 'u32[]', space=smem, size = 0x4, offset = 0x4, fixed_abs, tag = 'smem constant byte address 0x4 - core index']
  #allocation1 [shape = 'u32[144,128]{1,0:T(1,128)}', space=vmem, size = 0x12000, scoped, tag = 'internal scratch']
  %s0 = inlined_call_operand.vmem [shape: s32[64,1], index: 0, kind: input, shape index: {}]
  %s1 = inlined_call_operand.vmem [shape: f32[9,40,9], index: 1, kind: input, shape index: {}]
  %s2 = inlined_call_operand.vmem [shape: f32[1,9], index: 2, kind: input, shape index: {}]
  %s3 = inlined_call_operand.vmem [shape: f32[9,9,9], index: 3, kind: input, shape index: {}]
  %s4 = inlined_call_operand.vmem [shape: f32[1,9], index: 4, kind: input, shape index: {}]
  %s5 = inlined_call_operand.vmem [shape: f32[11,9,10], index: 5, kind: input, shape index: {}]
  %s6 = inlined_call_operand.vmem [shape: f32[1,10], index: 6, kind: input, shape index: {}]
  %s7 = inlined_call_operand.vmem [shape: f32[10,128], index: 7, kind: input, shape index: {}]
  %s8 = inlined_call_operand.vmem [shape: f32[1,128], index: 8, kind: input, shape index: {}]
  %s9 = inlined_call_operand.hbm [shape: f32[2,128], index: 9, kind: output, shape index: {}]
  %s10 = sld [smem:[#allocation0]]
  $region46: #{tpu_custom_call.1} parent=0
    _
  %s12 = ssub.s32 1, %s10
  %s13 = scalar_select 0, %s12, %s10
  $region1: #{tpu_custom_call.1} parent=0
    #allocation2 [shape = 'u8[1024]{0}', space=vmem, size = 0x400, scoped, tag = 'output window, operand 0, single buffered']
    #allocation3 [shape = 's32[1]{0}', space=sflag, size = 0x4, scoped, tag = 'scoped memory for tpu_custom_call.1']
    %14 = vsyncpa [#allocation3], 0
    // Predicated region
    $region2: #{tpu_custom_call.1} parent=1 // pred_check
      _
    $region3: #{tpu_custom_call.1} parent=1 // pred_check_branch
      %16 = sbr.rel (0) target = $region5
    $region4: #{tpu_custom_call.1} parent=1 // pred_region
      _
    $region5: #{tpu_custom_call.1} parent=1 // pred_fallthru
      _
    // Predicated region
    $region6: #{tpu_custom_call.1} parent=1 // pred_check
      _
    $region7: #{tpu_custom_call.1} parent=1 // pred_check_branch
      %18 = sbr.rel (0) target = $region9
    $region8: #{tpu_custom_call.1} parent=1 // pred_region
      _
    $region9: #{tpu_custom_call.1} parent=1 // pred_fallthru
      _
    // Predicated region
    $region10: #{tpu_custom_call.1} parent=1 // pred_check
      _
    $region11: #{tpu_custom_call.1} parent=1 // pred_check_branch
      %20 = sbr.rel (0) target = $region13
    $region12: #{tpu_custom_call.1} parent=1 // pred_region
      _
    $region13: #{tpu_custom_call.1} parent=1 // pred_fallthru
      _
    // Predicated region
    $region14: #{tpu_custom_call.1} parent=1 // pred_check
      _
    $region15: #{tpu_custom_call.1} parent=1 // pred_check_branch
      %22 = sbr.rel (0) target = $region17
    $region16: #{tpu_custom_call.1} parent=1 // pred_region
      _
    $region17: #{tpu_custom_call.1} parent=1 // pred_fallthru
      _
    // Predicated region
    $region18: #{tpu_custom_call.1} parent=1 // pred_check
      _
    $region19: #{tpu_custom_call.1} parent=1 // pred_check_branch
      %24 = sbr.rel (0) target = $region21
    $region20: #{tpu_custom_call.1} parent=1 // pred_region
      _
    $region21: #{tpu_custom_call.1} parent=1 // pred_fallthru
      _
    // Predicated region
    $region22: #{tpu_custom_call.1} parent=1 // pred_check
      _
    $region23: #{tpu_custom_call.1} parent=1 // pred_check_branch
      %26 = sbr.rel (0) target = $region25
    $region24: #{tpu_custom_call.1} parent=1 // pred_region
      _
    $region25: #{tpu_custom_call.1} parent=1 // pred_fallthru
      _
    // Predicated region
    $region26: #{tpu_custom_call.1} parent=1 // pred_check
      _
    $region27: #{tpu_custom_call.1} parent=1 // pred_check_branch
      %28 = sbr.rel (0) target = $region29
    $region28: #{tpu_custom_call.1} parent=1 // pred_region
      _
    $region29: #{tpu_custom_call.1} parent=1 // pred_fallthru
      _
    // Predicated region
    $region30: #{tpu_custom_call.1} parent=1 // pred_check
      _
    $region31: #{tpu_custom_call.1} parent=1 // pred_check_branch
      %30 = sbr.rel (0) target = $region33
    $region32: #{tpu_custom_call.1} parent=1 // pred_region
      _
    $region33: #{tpu_custom_call.1} parent=1 // pred_fallthru
      _
    // Predicated region
    $region34: #{tpu_custom_call.1} parent=1 // pred_check
      _
    $region35: #{tpu_custom_call.1} parent=1 // pred_check_branch
      %32 = sbr.rel (0) target = $region37
    $region36: #{tpu_custom_call.1} parent=1 // pred_region
      _
    $region37: #{tpu_custom_call.1} parent=1 // pred_fallthru
      _
    %v33 = vlaneseq
    %v34 = vshrl.u32 %v33, 7
    %v35 = vadd.s32 %v34, 8
    %v36 = vadd.s32 %v34, 16
    %v37 = vadd.s32 %v34, 24
    %v38 = vadd.s32 %v34, 32
    %v39 = vadd.s32 %v34, 40
    %v40 = vadd.s32 %v34, 48
    %v41 = vadd.s32 %v34, 56
    %v42 = vand.u32 %v34, 31
    %v43 = vand.u32 %v35, 31
    %v44 = vand.u32 %v36, 31
    %v45 = vand.u32 %v37, 31
    %v46 = vand.u32 %v38, 31
    %v47 = vand.u32 %v39, 31
    %v48 = vand.u32 %v40, 31
    %v49 = vand.u32 %v41, 31
    %vm50 = vcmp.ge.s32.totalorder %v42, 8
    %vm51 = vcmp.ge.s32.totalorder %v43, 8
    %vm52 = vcmp.ge.s32.totalorder %v44, 8
    %vm53 = vcmp.ge.s32.totalorder %v45, 8
    %vm54 = vcmp.ge.s32.totalorder %v46, 8
    %vm55 = vcmp.ge.s32.totalorder %v47, 8
    %vm56 = vcmp.ge.s32.totalorder %v48, 8
    %vm57 = vcmp.ge.s32.totalorder %v49, 8
    %vm58 = vcmp.lt.s32.totalorder %v42, 24
    %vm59 = vcmp.lt.s32.totalorder %v43, 24
    %vm60 = vcmp.lt.s32.totalorder %v44, 24
    %vm61 = vcmp.lt.s32.totalorder %v45, 24
    %vm62 = vcmp.lt.s32.totalorder %v46, 24
    %vm63 = vcmp.lt.s32.totalorder %v47, 24
    %vm64 = vcmp.lt.s32.totalorder %v48, 24
    %vm65 = vcmp.lt.s32.totalorder %v49, 24
    %vm66 = vmand %vm50, %vm58
    %vm67 = vmand %vm51, %vm59
    %vm68 = vmand %vm52, %vm60
    %vm69 = vmand %vm53, %vm61
    %vm70 = vmand %vm54, %vm62
    %vm71 = vmand %vm55, %vm63
    %vm72 = vmand %vm56, %vm64
    %vm73 = vmand %vm57, %vm65
    %v74 = vsel %vm66, 1, 0
    %v75 = vsel %vm67, 1, 0
    %v76 = vsel %vm68, 1, 0
    %v77 = vsel %vm69, 1, 0
    %v78 = vsel %vm70, 1, 0
    %v79 = vsel %vm71, 1, 0
    %v80 = vsel %vm72, 1, 0
    %v81 = vsel %vm73, 1, 0
    %v82 = vcvt.s32.f32 %v74
    %v83 = vcvt.s32.f32 %v75
    %v84 = vcvt.s32.f32 %v76
    %v85 = vcvt.s32.f32 %v77
    %v86 = vcvt.s32.f32 %v78
    %v87 = vcvt.s32.f32 %v79
    %v88 = vcvt.s32.f32 %v80
    %v89 = vcvt.s32.f32 %v81
    %v90 = vld [vmem:[%s0] sm:$0xff]
    %v91 = vld [vmem:[%s0 + $0x8] sm:$0xff]
    %v92 = vld [vmem:[%s0 + $0x10] sm:$0xff]
    %v93 = vld [vmem:[%s0 + $0x18] sm:$0xff]
    %v94 = vld [vmem:[%s0 + $0x20] sm:$0xff]
    %v95 = vld [vmem:[%s0 + $0x28] sm:$0xff]
    %v96 = vld [vmem:[%s0 + $0x30] sm:$0xff]
    %v97 = vld [vmem:[%s0 + $0x38] sm:$0xff]
    %v98 = vlaneseq
    %v99 = vand.u32 %v98, 127
    %100 = vset.pattern.permute.xlu0 0
    %101 = vperm.xlu0 %100, %v90
    %v102 = vpop.permute.xlu0 %101
    %103 = vset.pattern.permute.xlu0 0
    %104 = vperm.xlu0 %103, %v91
    %v105 = vpop.permute.xlu0 %104
    %106 = vset.pattern.permute.xlu0 0
    %107 = vperm.xlu0 %106, %v92
    %v108 = vpop.permute.xlu0 %107
    %109 = vset.pattern.permute.xlu0 0
    %110 = vperm.xlu0 %109, %v93
    %v111 = vpop.permute.xlu0 %110
    %112 = vset.pattern.permute.xlu0 0
    %113 = vperm.xlu0 %112, %v94
    %v114 = vpop.permute.xlu0 %113
    %115 = vset.pattern.permute.xlu0 0
    %116 = vperm.xlu0 %115, %v95
    %v117 = vpop.permute.xlu0 %116
    %118 = vset.pattern.permute.xlu0 0
    %119 = vperm.xlu0 %118, %v96
    %v120 = vpop.permute.xlu0 %119
    %121 = vset.pattern.permute.xlu0 0
    %122 = vperm.xlu0 %121, %v97
    %v123 = vpop.permute.xlu0 %122
    %vm124 = vcmp.eq.s32.totalorder %v99, %v102
    %vm125 = vcmp.eq.s32.totalorder %v99, %v105
    %vm126 = vcmp.eq.s32.totalorder %v99, %v108
    %vm127 = vcmp.eq.s32.totalorder %v99, %v111
    %vm128 = vcmp.eq.s32.totalorder %v99, %v114
    %vm129 = vcmp.eq.s32.totalorder %v99, %v117
    %vm130 = vcmp.eq.s32.totalorder %v99, %v120
    %vm131 = vcmp.eq.s32.totalorder %v99, %v123
    %v132 = vsel %vm124, 1, 0
    %v133 = vsel %vm125, 1, 0
    %v134 = vsel %vm126, 1, 0
    %v135 = vsel %vm127, 1, 0
    %v136 = vsel %vm128, 1, 0
    %v137 = vsel %vm129, 1, 0
    %v138 = vsel %vm130, 1, 0
    %v139 = vsel %vm131, 1, 0
    %v140 = vcvt.s32.f32 %v132
    %v141 = vcvt.s32.f32 %v133
    %v142 = vcvt.s32.f32 %v134
    %v143 = vcvt.s32.f32 %v135
    %v144 = vcvt.s32.f32 %v136
    %v145 = vcvt.s32.f32 %v137
    %v146 = vcvt.s32.f32 %v138
    %v147 = vcvt.s32.f32 %v139
    %v148 = vld [vmem:[%s1] sm:$0xff]
    %v149 = vld [vmem:[%s1 + $0x8] sm:$0xff]
    %v150 = vld [vmem:[%s1 + $0x10] sm:$0xff]
    %v151 = vld [vmem:[%s1 + $0x18] sm:$0xff]
    %v152 = vld [vmem:[%s1 + $0x20] sm:$0xff]
    %s153 = scalar_lea.vmem %s1, 40
    %v154 = vld [vmem:[%s153] sm:$0xff]
    %v155 = vld [vmem:[%s153 + $0x8] sm:$0xff]
    %v156 = vld [vmem:[%s153 + $0x10] sm:$0xff]
    %v157 = vld [vmem:[%s153 + $0x18] sm:$0xff]
    %v158 = vld [vmem:[%s153 + $0x20] sm:$0xff]
    %vm168 = vcmask 1042432
    %v169 = vrot.slane 0.0, 5
    %v170 = vrot.slane %v140, 5
    %v171 = vsel %vm168, %v169, %v170
    %v172 = vrot.slane %v141, 5
    %v173 = vsel %vm168, %v170, %v172
    %v174 = vrot.slane %v142, 5
    %v175 = vsel %vm168, %v172, %v174
    %v176 = vrot.slane %v143, 5
    %v177 = vsel %vm168, %v174, %v176
    %v178 = vrot.slane %v144, 5
    %v179 = vsel %vm168, %v176, %v178
    %v180 = vrot.slane %v145, 5
    %v181 = vsel %vm168, %v178, %v180
    %v182 = vrot.slane %v146, 5
    %v183 = vsel %vm168, %v180, %v182
    %v184 = vrot.slane %v147, 5
    %v185 = vsel %vm168, %v182, %v184
    %vm186 = vcmask 326656
    %v187 = vsel %vm186, %v171, 0
    %v189 = vsel %vm186, %v173, 0
    %v191 = vsel %vm186, %v175, 0
    %v193 = vsel %vm186, %v177, 0
    %v195 = vsel %vm186, %v179, 0
    %v197 = vsel %vm186, %v181, 0
    %v199 = vsel %vm186, %v183, 0
    %v201 = vsel %vm186, %v185, 0
    %203 = vmatprep.subr.mxu0 0.0
    %204 = vmatpush1.msra.mxu0 0.0
    %205 = vmatprep.subr.mxu0 0.0
    %206 = vmatpush1.msra.mxu0 0.0
    %207 = vmatprep.subr.mxu0 0.0
    %208 = vmatpush1.msra.mxu0 0.0
    %209 = vmatprep.subr.mxu0 0.0
    %210 = vmatpush1.msra.mxu0 0.0
    %211 = vmatprep.subr.mxu0 0.0
    %212 = vmatpush1.msra.mxu0 0.0
    %213 = vmatprep.subr.mxu0 0.0
    %214 = vmatpush1.msra.mxu0 0.0
    %215 = vmatprep.subr.mxu0 0.0
    %216 = vmatpush1.msra.mxu0 0.0
    %217 = vmatprep.subr.mxu0 0.0
    %218 = vmatpush1.msra.mxu0 0.0
    %219 = vmatprep.subr.mxu0 0.0
    %220 = vmatpush1.msra.mxu0 0.0
    %221 = vmatprep.subr.mxu0 0.0
    %222 = vmatpush1.msra.mxu0 0.0
    %223 = vmatprep.subr.mxu0 0.0
    %224 = vmatpush1.msra.mxu0 0.0
    %225 = vmatprep.subr.mxu0 0.0
    %226 = vmatpush1.msra.mxu0 %v158
    %227 = vmatprep.subr.mxu0 0.0
    %228 = vmatpush1.msra.mxu0 %v157
    %229 = vmatprep.subr.mxu0 0.0
    %230 = vmatpush1.msra.mxu0 %v156
    %231 = vmatprep.subr.mxu0 0.0
    %232 = vmatpush1.msra.mxu0 %v155
    %233 = vmatprep.subr.mxu0 0.0
    %234 = vmatpush1.msra.mxu0 %v154
    %235 = vmatprep.subr.mxu0 0.0
    %236 = vmatpush2.msra.mxu0 0.0
    %237 = vmatprep.subr.mxu0 0.0
    %238 = vmatpush2.msra.mxu0 0.0
    %239 = vmatprep.subr.mxu0 0.0
    %240 = vmatpush2.msra.mxu0 0.0
    %241 = vmatprep.subr.mxu0 0.0
    %242 = vmatpush2.msra.mxu0 0.0
    %243 = vmatprep.subr.mxu0 0.0
    %244 = vmatpush2.msra.mxu0 0.0
    %245 = vmatprep.subr.mxu0 0.0
    %246 = vmatpush2.msra.mxu0 0.0
    %247 = vmatprep.subr.mxu0 0.0
    %248 = vmatpush2.msra.mxu0 0.0
    %249 = vmatprep.subr.mxu0 0.0
    %250 = vmatpush2.msra.mxu0 0.0
    %251 = vmatprep.subr.mxu0 0.0
    %252 = vmatpush2.msra.mxu0 0.0
    %253 = vmatprep.subr.mxu0 0.0
    %254 = vmatpush2.msra.mxu0 0.0
    %255 = vmatprep.subr.mxu0 0.0
    %256 = vmatpush2.msra.mxu0 0.0
    %257 = vmatprep.subr.mxu0 0.0
    %258 = vmatpush2.msra.mxu0 0.0
    %259 = vmatprep.subr.mxu0 0.0
    %260 = vmatpush2.msra.mxu0 0.0
    %261 = vmatprep.subr.mxu0 0.0
    %262 = vmatpush2.msra.mxu0 0.0
    %263 = vmatprep.subr.mxu0 0.0
    %264 = vmatpush2.msra.mxu0 0.0
    %265 = vmatprep.subr.mxu0 0.0
    %266 = vmatpush2.msra.mxu0 0.0
    %267 = vmatprep.mubr.f32.mxu0 0.0
    %268 = vmatmul.mubr.f32.gmra.mxu0 %v187
    %v269 = vpop.f32.mrf.mxu0
    %v270 = vadd.f32 0.0, %v269
    %v271 = vpop.f32.mrf.mxu0
    %272 = vmatprep.mubr.f32.mxu0 0.0
    %273 = vmatmul.mubr.f32.gmra.mxu0 %v189
    %v274 = vpop.f32.mrf.mxu0
    %v275 = vadd.f32 0.0, %v274
    %v276 = vpop.f32.mrf.mxu0
    %277 = vmatprep.mubr.f32.mxu0 0.0
    %278 = vmatmul.mubr.f32.gmra.mxu0 %v191
    %v279 = vpop.f32.mrf.mxu0
    %v280 = vadd.f32 0.0, %v279
    %v281 = vpop.f32.mrf.mxu0
    %282 = vmatprep.mubr.f32.mxu0 0.0
    %283 = vmatmul.mubr.f32.gmra.mxu0 %v193
    %v284 = vpop.f32.mrf.mxu0
    %v285 = vadd.f32 0.0, %v284
    %v286 = vpop.f32.mrf.mxu0
    %287 = vmatprep.mubr.f32.mxu0 0.0
    %288 = vmatmul.mubr.f32.gmra.mxu0 %v195
    %v289 = vpop.f32.mrf.mxu0
    %v290 = vadd.f32 0.0, %v289
    %v291 = vpop.f32.mrf.mxu0
    %292 = vmatprep.mubr.f32.mxu0 0.0
    %293 = vmatmul.mubr.f32.gmra.mxu0 %v197
    %v294 = vpop.f32.mrf.mxu0
    %v295 = vadd.f32 0.0, %v294
    %v296 = vpop.f32.mrf.mxu0
    %297 = vmatprep.mubr.f32.mxu0 0.0
    %298 = vmatmul.mubr.f32.gmra.mxu0 %v199
    %v299 = vpop.f32.mrf.mxu0
    %v300 = vadd.f32 0.0, %v299
    %v301 = vpop.f32.mrf.mxu0
    %302 = vmatprep.mubr.f32.mxu0 0.0
    %303 = vmatmul.mubr.f32.gmra.mxu0 %v201
    %v304 = vpop.f32.mrf.mxu0
    %v305 = vadd.f32 0.0, %v304
    %v306 = vpop.f32.mrf.mxu0
    %307 = vdwg.mxu0
    %vm308 = vcmask 1043456
    %v309 = vrot.slane 0.0, 4
    %v310 = vrot.slane %v140, 4
    %v311 = vsel %vm308, %v309, %v310
    %v312 = vrot.slane %v141, 4
    %v313 = vsel %vm308, %v310, %v312
    %v314 = vrot.slane %v142, 4
    %v315 = vsel %vm308, %v312, %v314
    %v316 = vrot.slane %v143, 4
    %v317 = vsel %vm308, %v314, %v316
    %v318 = vrot.slane %v144, 4
    %v319 = vsel %vm308, %v316, %v318
    %v320 = vrot.slane %v145, 4
    %v321 = vsel %vm308, %v318, %v320
    %v322 = vrot.slane %v146, 4
    %v323 = vsel %vm308, %v320, %v322
    %v324 = vrot.slane %v147, 4
    %v325 = vsel %vm308, %v322, %v324
    %v326 = vsel %vm186, %v311, 0
    %v328 = vsel %vm186, %v313, 0
    %v330 = vsel %vm186, %v315, 0
    %v332 = vsel %vm186, %v317, 0
    %v334 = vsel %vm186, %v319, 0
    %v336 = vsel %vm186, %v321, 0
    %v338 = vsel %vm186, %v323, 0
    %v340 = vsel %vm186, %v325, 0
    %342 = vmatprep.subr.mxu0 0.0
    %343 = vmatpush1.msra.mxu0 0.0
    %344 = vmatprep.subr.mxu0 0.0
    %345 = vmatpush1.msra.mxu0 0.0
    %346 = vmatprep.subr.mxu0 0.0
    %347 = vmatpush1.msra.mxu0 0.0
    %348 = vmatprep.subr.mxu0 0.0
    %349 = vmatpush1.msra.mxu0 0.0
    %350 = vmatprep.subr.mxu0 0.0
    %351 = vmatpush1.msra.mxu0 0.0
    %352 = vmatprep.subr.mxu0 0.0
    %353 = vmatpush1.msra.mxu0 0.0
    %354 = vmatprep.subr.mxu0 0.0
    %355 = vmatpush1.msra.mxu0 0.0
    %356 = vmatprep.subr.mxu0 0.0
    %357 = vmatpush1.msra.mxu0 0.0
    %358 = vmatprep.subr.mxu0 0.0
    %359 = vmatpush1.msra.mxu0 0.0
    %360 = vmatprep.subr.mxu0 0.0
    %361 = vmatpush1.msra.mxu0 0.0
    %362 = vmatprep.subr.mxu0 0.0
    %363 = vmatpush1.msra.mxu0 0.0
    %364 = vmatprep.subr.mxu0 0.0
    %365 = vmatpush1.msra.mxu0 %v152
    %366 = vmatprep.subr.mxu0 0.0
    %367 = vmatpush1.msra.mxu0 %v151
    %368 = vmatprep.subr.mxu0 0.0
    %369 = vmatpush1.msra.mxu0 %v150
    %370 = vmatprep.subr.mxu0 0.0
    %371 = vmatpush1.msra.mxu0 %v149
    %372 = vmatprep.subr.mxu0 0.0
    %373 = vmatpush1.msra.mxu0 %v148
    %374 = vmatprep.subr.mxu0 0.0
    %375 = vmatpush2.msra.mxu0 0.0
    %376 = vmatprep.subr.mxu0 0.0
    %377 = vmatpush2.msra.mxu0 0.0
    %378 = vmatprep.subr.mxu0 0.0
    %379 = vmatpush2.msra.mxu0 0.0
    %380 = vmatprep.subr.mxu0 0.0
    %381 = vmatpush2.msra.mxu0 0.0
    %382 = vmatprep.subr.mxu0 0.0
    %383 = vmatpush2.msra.mxu0 0.0
    %384 = vmatprep.subr.mxu0 0.0
    %385 = vmatpush2.msra.mxu0 0.0
    %386 = vmatprep.subr.mxu0 0.0
    %387 = vmatpush2.msra.mxu0 0.0
    %388 = vmatprep.subr.mxu0 0.0
    %389 = vmatpush2.msra.mxu0 0.0
    %390 = vmatprep.subr.mxu0 0.0
    %391 = vmatpush2.msra.mxu0 0.0
    %392 = vmatprep.subr.mxu0 0.0
    %393 = vmatpush2.msra.mxu0 0.0
    %394 = vmatprep.subr.mxu0 0.0
    %395 = vmatpush2.msra.mxu0 0.0
    %396 = vmatprep.subr.mxu0 0.0
    %397 = vmatpush2.msra.mxu0 0.0
    %398 = vmatprep.subr.mxu0 0.0
    %399 = vmatpush2.msra.mxu0 0.0
    %400 = vmatprep.subr.mxu0 0.0
    %401 = vmatpush2.msra.mxu0 0.0
    %402 = vmatprep.subr.mxu0 0.0
    %403 = vmatpush2.msra.mxu0 0.0
    %404 = vmatprep.subr.mxu0 0.0
    %405 = vmatpush2.msra.mxu0 0.0
    %406 = vmatprep.mubr.f32.mxu0 0.0
    %407 = vmatmul.mubr.f32.gmra.mxu0 %v326
    %v408 = vpop.f32.mrf.mxu0
    %v409 = vadd.f32 %v270, %v408
    %v410 = vpop.f32.mrf.mxu0
    %411 = vmatprep.mubr.f32.mxu0 0.0
    %412 = vmatmul.mubr.f32.gmra.mxu0 %v328
    %v413 = vpop.f32.mrf.mxu0
    %v414 = vadd.f32 %v275, %v413
    %v415 = vpop.f32.mrf.mxu0
    %416 = vmatprep.mubr.f32.mxu0 0.0
    %417 = vmatmul.mubr.f32.gmra.mxu0 %v330
    %v418 = vpop.f32.mrf.mxu0
    %v419 = vadd.f32 %v280, %v418
    %v420 = vpop.f32.mrf.mxu0
    %421 = vmatprep.mubr.f32.mxu0 0.0
    %422 = vmatmul.mubr.f32.gmra.mxu0 %v332
    %v423 = vpop.f32.mrf.mxu0
    %v424 = vadd.f32 %v285, %v423
    %v425 = vpop.f32.mrf.mxu0
    %426 = vmatprep.mubr.f32.mxu0 0.0
    %427 = vmatmul.mubr.f32.gmra.mxu0 %v334
    %v428 = vpop.f32.mrf.mxu0
    %v429 = vadd.f32 %v290, %v428
    %v430 = vpop.f32.mrf.mxu0
    %431 = vmatprep.mubr.f32.mxu0 0.0
    %432 = vmatmul.mubr.f32.gmra.mxu0 %v336
    %v433 = vpop.f32.mrf.mxu0
    %v434 = vadd.f32 %v295, %v433
    %v435 = vpop.f32.mrf.mxu0
    %436 = vmatprep.mubr.f32.mxu0 0.0
    %437 = vmatmul.mubr.f32.gmra.mxu0 %v338
    %v438 = vpop.f32.mrf.mxu0
    %v439 = vadd.f32 %v300, %v438
    %v440 = vpop.f32.mrf.mxu0
    %441 = vmatprep.mubr.f32.mxu0 0.0
    %442 = vmatmul.mubr.f32.gmra.mxu0 %v340
    %v443 = vpop.f32.mrf.mxu0
    %v444 = vadd.f32 %v305, %v443
    %v445 = vpop.f32.mrf.mxu0
    %446 = vdwg.mxu0
    %s447 = scalar_lea.vmem %s1, 80
    %v448 = vld [vmem:[%s447] sm:$0xff]
    %v449 = vld [vmem:[%s447 + $0x8] sm:$0xff]
    %v450 = vld [vmem:[%s447 + $0x10] sm:$0xff]
    %v451 = vld [vmem:[%s447 + $0x18] sm:$0xff]
    %v452 = vld [vmem:[%s447 + $0x20] sm:$0xff]
    %vm453 = vcmask 1041408
    %v454 = vrot.slane 0.0, 6
    %v455 = vrot.slane %v140, 6
    %v456 = vsel %vm453, %v454, %v455
    %v457 = vrot.slane %v141, 6
    %v458 = vsel %vm453, %v455, %v457
    %v459 = vrot.slane %v142, 6
    %v460 = vsel %vm453, %v457, %v459
    %v461 = vrot.slane %v143, 6
    %v462 = vsel %vm453, %v459, %v461
    %v463 = vrot.slane %v144, 6
    %v464 = vsel %vm453, %v461, %v463
    %v465 = vrot.slane %v145, 6
    %v466 = vsel %vm453, %v463, %v465
    %v467 = vrot.slane %v146, 6
    %v468 = vsel %vm453, %v465, %v467
    %v469 = vrot.slane %v147, 6
    %v470 = vsel %vm453, %v467, %v469
    %v471 = vsel %vm186, %v456, 0
    %v473 = vsel %vm186, %v458, 0
    %v475 = vsel %vm186, %v460, 0
    %v477 = vsel %vm186, %v462, 0
    %v479 = vsel %vm186, %v464, 0
    %v481 = vsel %vm186, %v466, 0
    %v483 = vsel %vm186, %v468, 0
    %v485 = vsel %vm186, %v470, 0
    %487 = vmatprep.subr.mxu0 0.0
    %488 = vmatpush1.msra.mxu0 0.0
    %489 = vmatprep.subr.mxu0 0.0
    %490 = vmatpush1.msra.mxu0 0.0
    %491 = vmatprep.subr.mxu0 0.0
    %492 = vmatpush1.msra.mxu0 0.0
    %493 = vmatprep.subr.mxu0 0.0
    %494 = vmatpush1.msra.mxu0 0.0
    %495 = vmatprep.subr.mxu0 0.0
    %496 = vmatpush1.msra.mxu0 0.0
    %497 = vmatprep.subr.mxu0 0.0
    %498 = vmatpush1.msra.mxu0 0.0
    %499 = vmatprep.subr.mxu0 0.0
    %500 = vmatpush1.msra.mxu0 0.0
    %501 = vmatprep.subr.mxu0 0.0
    %502 = vmatpush1.msra.mxu0 0.0
    %503 = vmatprep.subr.mxu0 0.0
    %504 = vmatpush1.msra.mxu0 0.0
    %505 = vmatprep.subr.mxu0 0.0
    %506 = vmatpush1.msra.mxu0 0.0
    %507 = vmatprep.subr.mxu0 0.0
    %508 = vmatpush1.msra.mxu0 0.0
    %509 = vmatprep.subr.mxu0 0.0
    %510 = vmatpush1.msra.mxu0 %v452
    %511 = vmatprep.subr.mxu0 0.0
    %512 = vmatpush1.msra.mxu0 %v451
    %513 = vmatprep.subr.mxu0 0.0
    %514 = vmatpush1.msra.mxu0 %v450
    %515 = vmatprep.subr.mxu0 0.0
    %516 = vmatpush1.msra.mxu0 %v449
    %517 = vmatprep.subr.mxu0 0.0
    %518 = vmatpush1.msra.mxu0 %v448
    %519 = vmatprep.subr.mxu0 0.0
    %520 = vmatpush2.msra.mxu0 0.0
    %521 = vmatprep.subr.mxu0 0.0
    %522 = vmatpush2.msra.mxu0 0.0
    %523 = vmatprep.subr.mxu0 0.0
    %524 = vmatpush2.msra.mxu0 0.0
    %525 = vmatprep.subr.mxu0 0.0
    %526 = vmatpush2.msra.mxu0 0.0
    %527 = vmatprep.subr.mxu0 0.0
    %528 = vmatpush2.msra.mxu0 0.0
    %529 = vmatprep.subr.mxu0 0.0
    %530 = vmatpush2.msra.mxu0 0.0
    %531 = vmatprep.subr.mxu0 0.0
    %532 = vmatpush2.msra.mxu0 0.0
    %533 = vmatprep.subr.mxu0 0.0
    %534 = vmatpush2.msra.mxu0 0.0
    %535 = vmatprep.subr.mxu0 0.0
    %536 = vmatpush2.msra.mxu0 0.0
    %537 = vmatprep.subr.mxu0 0.0
    %538 = vmatpush2.msra.mxu0 0.0
    %539 = vmatprep.subr.mxu0 0.0
    %540 = vmatpush2.msra.mxu0 0.0
    %541 = vmatprep.subr.mxu0 0.0
    %542 = vmatpush2.msra.mxu0 0.0
    %543 = vmatprep.subr.mxu0 0.0
    %544 = vmatpush2.msra.mxu0 0.0
    %545 = vmatprep.subr.mxu0 0.0
    %546 = vmatpush2.msra.mxu0 0.0
    %547 = vmatprep.subr.mxu0 0.0
    %548 = vmatpush2.msra.mxu0 0.0
    %549 = vmatprep.subr.mxu0 0.0
    %550 = vmatpush2.msra.mxu0 0.0
    %551 = vmatprep.mubr.f32.mxu0 0.0
    %552 = vmatmul.mubr.f32.gmra.mxu0 %v471
    %v553 = vpop.f32.mrf.mxu0
    %v554 = vadd.f32 0.0, %v553
    %v555 = vpop.f32.mrf.mxu0
    %556 = vmatprep.mubr.f32.mxu0 0.0
    %557 = vmatmul.mubr.f32.gmra.mxu0 %v473
    %v558 = vpop.f32.mrf.mxu0
    %v559 = vadd.f32 0.0, %v558
    %v560 = vpop.f32.mrf.mxu0
    %561 = vmatprep.mubr.f32.mxu0 0.0
    %562 = vmatmul.mubr.f32.gmra.mxu0 %v475
    %v563 = vpop.f32.mrf.mxu0
    %v564 = vadd.f32 0.0, %v563
    %v565 = vpop.f32.mrf.mxu0
    %566 = vmatprep.mubr.f32.mxu0 0.0
    %567 = vmatmul.mubr.f32.gmra.mxu0 %v477
    %v568 = vpop.f32.mrf.mxu0
    %v569 = vadd.f32 0.0, %v568
    %v570 = vpop.f32.mrf.mxu0
    %571 = vmatprep.mubr.f32.mxu0 0.0
    %572 = vmatmul.mubr.f32.gmra.mxu0 %v479
    %v573 = vpop.f32.mrf.mxu0
    %v574 = vadd.f32 0.0, %v573
    %v575 = vpop.f32.mrf.mxu0
    %576 = vmatprep.mubr.f32.mxu0 0.0
    %577 = vmatmul.mubr.f32.gmra.mxu0 %v481
    %v578 = vpop.f32.mrf.mxu0
    %v579 = vadd.f32 0.0, %v578
    %v580 = vpop.f32.mrf.mxu0
    %581 = vmatprep.mubr.f32.mxu0 0.0
    %582 = vmatmul.mubr.f32.gmra.mxu0 %v483
    %v583 = vpop.f32.mrf.mxu0
    %v584 = vadd.f32 0.0, %v583
    %v585 = vpop.f32.mrf.mxu0
    %586 = vmatprep.mubr.f32.mxu0 0.0
    %587 = vmatmul.mubr.f32.gmra.mxu0 %v485
    %v588 = vpop.f32.mrf.mxu0
    %v589 = vadd.f32 0.0, %v588
    %v590 = vpop.f32.mrf.mxu0
    %591 = vdwg.mxu0
    %v592 = vadd.f32 %v409, %v554
    %v593 = vadd.f32 %v414, %v559
    %v594 = vadd.f32 %v419, %v564
    %v595 = vadd.f32 %v424, %v569
    %v596 = vadd.f32 %v429, %v574
    %v597 = vadd.f32 %v434, %v579
    %v598 = vadd.f32 %v439, %v584
    %v599 = vadd.f32 %v444, %v589
    %s600 = scalar_lea.vmem %s1, 120
    %v601 = vld [vmem:[%s600] sm:$0xff]
    %v602 = vld [vmem:[%s600 + $0x8] sm:$0xff]
    %v603 = vld [vmem:[%s600 + $0x10] sm:$0xff]
    %v604 = vld [vmem:[%s600 + $0x18] sm:$0xff]
    %v605 = vld [vmem:[%s600 + $0x20] sm:$0xff]
    %vm606 = vcmask 1040384
    %v607 = vrot.slane 0.0, 7
    %v608 = vrot.slane %v140, 7
    %v609 = vsel %vm606, %v607, %v608
    %v610 = vrot.slane %v141, 7
    %v611 = vsel %vm606, %v608, %v610
    %v612 = vrot.slane %v142, 7
    %v613 = vsel %vm606, %v610, %v612
    %v614 = vrot.slane %v143, 7
    %v615 = vsel %vm606, %v612, %v614
    %v616 = vrot.slane %v144, 7
    %v617 = vsel %vm606, %v614, %v616
    %v618 = vrot.slane %v145, 7
    %v619 = vsel %vm606, %v616, %v618
    %v620 = vrot.slane %v146, 7
    %v621 = vsel %vm606, %v618, %v620
    %v622 = vrot.slane %v147, 7
    %v623 = vsel %vm606, %v620, %v622
    %v624 = vsel %vm186, %v609, 0
    %v626 = vsel %vm186, %v611, 0
    %v628 = vsel %vm186, %v613, 0
    %v630 = vsel %vm186, %v615, 0
    %v632 = vsel %vm186, %v617, 0
    %v634 = vsel %vm186, %v619, 0
    %v636 = vsel %vm186, %v621, 0
    %v638 = vsel %vm186, %v623, 0
    %640 = vmatprep.subr.mxu0 0.0
    %641 = vmatpush1.msra.mxu0 0.0
    %642 = vmatprep.subr.mxu0 0.0
    %643 = vmatpush1.msra.mxu0 0.0
    %644 = vmatprep.subr.mxu0 0.0
    %645 = vmatpush1.msra.mxu0 0.0
    %646 = vmatprep.subr.mxu0 0.0
    %647 = vmatpush1.msra.mxu0 0.0
    %648 = vmatprep.subr.mxu0 0.0
    %649 = vmatpush1.msra.mxu0 0.0
    %650 = vmatprep.subr.mxu0 0.0
    %651 = vmatpush1.msra.mxu0 0.0
    %652 = vmatprep.subr.mxu0 0.0
    %653 = vmatpush1.msra.mxu0 0.0
    %654 = vmatprep.subr.mxu0 0.0
    %655 = vmatpush1.msra.mxu0 0.0
    %656 = vmatprep.subr.mxu0 0.0
    %657 = vmatpush1.msra.mxu0 0.0
    %658 = vmatprep.subr.mxu0 0.0
    %659 = vmatpush1.msra.mxu0 0.0
    %660 = vmatprep.subr.mxu0 0.0
    %661 = vmatpush1.msra.mxu0 0.0
    %662 = vmatprep.subr.mxu0 0.0
    %663 = vmatpush1.msra.mxu0 %v605
    %664 = vmatprep.subr.mxu0 0.0
    %665 = vmatpush1.msra.mxu0 %v604
    %666 = vmatprep.subr.mxu0 0.0
    %667 = vmatpush1.msra.mxu0 %v603
    %668 = vmatprep.subr.mxu0 0.0
    %669 = vmatpush1.msra.mxu0 %v602
    %670 = vmatprep.subr.mxu0 0.0
    %671 = vmatpush1.msra.mxu0 %v601
    %672 = vmatprep.subr.mxu0 0.0
    %673 = vmatpush2.msra.mxu0 0.0
    %674 = vmatprep.subr.mxu0 0.0
    %675 = vmatpush2.msra.mxu0 0.0
    %676 = vmatprep.subr.mxu0 0.0
    %677 = vmatpush2.msra.mxu0 0.0
    %678 = vmatprep.subr.mxu0 0.0
    %679 = vmatpush2.msra.mxu0 0.0
    %680 = vmatprep.subr.mxu0 0.0
    %681 = vmatpush2.msra.mxu0 0.0
    %682 = vmatprep.subr.mxu0 0.0
    %683 = vmatpush2.msra.mxu0 0.0
    %684 = vmatprep.subr.mxu0 0.0
    %685 = vmatpush2.msra.mxu0 0.0
    %686 = vmatprep.subr.mxu0 0.0
    %687 = vmatpush2.msra.mxu0 0.0
    %688 = vmatprep.subr.mxu0 0.0
    %689 = vmatpush2.msra.mxu0 0.0
    %690 = vmatprep.subr.mxu0 0.0
    %691 = vmatpush2.msra.mxu0 0.0
    %692 = vmatprep.subr.mxu0 0.0
    %693 = vmatpush2.msra.mxu0 0.0
    %694 = vmatprep.subr.mxu0 0.0
    %695 = vmatpush2.msra.mxu0 0.0
    %696 = vmatprep.subr.mxu0 0.0
    %697 = vmatpush2.msra.mxu0 0.0
    %698 = vmatprep.subr.mxu0 0.0
    %699 = vmatpush2.msra.mxu0 0.0
    %700 = vmatprep.subr.mxu0 0.0
    %701 = vmatpush2.msra.mxu0 0.0
    %702 = vmatprep.subr.mxu0 0.0
    %703 = vmatpush2.msra.mxu0 0.0
    %704 = vmatprep.mubr.f32.mxu0 0.0
    %705 = vmatmul.mubr.f32.gmra.mxu0 %v624
    %v706 = vpop.f32.mrf.mxu0
    %v707 = vadd.f32 0.0, %v706
    %v708 = vpop.f32.mrf.mxu0
    %709 = vmatprep.mubr.f32.mxu0 0.0
    %710 = vmatmul.mubr.f32.gmra.mxu0 %v626
    %v711 = vpop.f32.mrf.mxu0
    %v712 = vadd.f32 0.0, %v711
    %v713 = vpop.f32.mrf.mxu0
    %714 = vmatprep.mubr.f32.mxu0 0.0
    %715 = vmatmul.mubr.f32.gmra.mxu0 %v628
    %v716 = vpop.f32.mrf.mxu0
    %v717 = vadd.f32 0.0, %v716
    %v718 = vpop.f32.mrf.mxu0
    %719 = vmatprep.mubr.f32.mxu0 0.0
    %720 = vmatmul.mubr.f32.gmra.mxu0 %v630
    %v721 = vpop.f32.mrf.mxu0
    %v722 = vadd.f32 0.0, %v721
    %v723 = vpop.f32.mrf.mxu0
    %724 = vmatprep.mubr.f32.mxu0 0.0
    %725 = vmatmul.mubr.f32.gmra.mxu0 %v632
    %v726 = vpop.f32.mrf.mxu0
    %v727 = vadd.f32 0.0, %v726
    %v728 = vpop.f32.mrf.mxu0
    %729 = vmatprep.mubr.f32.mxu0 0.0
    %730 = vmatmul.mubr.f32.gmra.mxu0 %v634
    %v731 = vpop.f32.mrf.mxu0
    %v732 = vadd.f32 0.0, %v731
    %v733 = vpop.f32.mrf.mxu0
    %734 = vmatprep.mubr.f32.mxu0 0.0
    %735 = vmatmul.mubr.f32.gmra.mxu0 %v636
    %v736 = vpop.f32.mrf.mxu0
    %v737 = vadd.f32 0.0, %v736
    %v738 = vpop.f32.mrf.mxu0
    %739 = vmatprep.mubr.f32.mxu0 0.0
    %740 = vmatmul.mubr.f32.gmra.mxu0 %v638
    %v741 = vpop.f32.mrf.mxu0
    %v742 = vadd.f32 0.0, %v741
    %v743 = vpop.f32.mrf.mxu0
    %744 = vdwg.mxu0
    %v745 = vadd.f32 %v592, %v707
    %v746 = vadd.f32 %v593, %v712
    %v747 = vadd.f32 %v594, %v717
    %v748 = vadd.f32 %v595, %v722
    %v749 = vadd.f32 %v596, %v727
    %v750 = vadd.f32 %v597, %v732
    %v751 = vadd.f32 %v598, %v737
    %v752 = vadd.f32 %v599, %v742
    %s753 = scalar_lea.vmem %s1, 160
    %v754 = vld [vmem:[%s753] sm:$0xff]
    %v755 = vld [vmem:[%s753 + $0x8] sm:$0xff]
    %v756 = vld [vmem:[%s753 + $0x10] sm:$0xff]
    %v757 = vld [vmem:[%s753 + $0x18] sm:$0xff]
    %v758 = vld [vmem:[%s753 + $0x20] sm:$0xff]
    %v759 = vsel %vm186, %v140, 0
    %v761 = vsel %vm186, %v141, 0
    %v763 = vsel %vm186, %v142, 0
    %v765 = vsel %vm186, %v143, 0
    %v767 = vsel %vm186, %v144, 0
    %v769 = vsel %vm186, %v145, 0
    %v771 = vsel %vm186, %v146, 0
    %v773 = vsel %vm186, %v147, 0
    %775 = vmatprep.subr.mxu0 0.0
    %776 = vmatpush1.msra.mxu0 0.0
    %777 = vmatprep.subr.mxu0 0.0
    %778 = vmatpush1.msra.mxu0 0.0
    %779 = vmatprep.subr.mxu0 0.0
    %780 = vmatpush1.msra.mxu0 0.0
    %781 = vmatprep.subr.mxu0 0.0
    %782 = vmatpush1.msra.mxu0 0.0
    %783 = vmatprep.subr.mxu0 0.0
    %784 = vmatpush1.msra.mxu0 0.0
    %785 = vmatprep.subr.mxu0 0.0
    %786 = vmatpush1.msra.mxu0 0.0
    %787 = vmatprep.subr.mxu0 0.0
    %788 = vmatpush1.msra.mxu0 0.0
    %789 = vmatprep.subr.mxu0 0.0
    %790 = vmatpush1.msra.mxu0 0.0
    %791 = vmatprep.subr.mxu0 0.0
    %792 = vmatpush1.msra.mxu0 0.0
    %793 = vmatprep.subr.mxu0 0.0
    %794 = vmatpush1.msra.mxu0 0.0
    %795 = vmatprep.subr.mxu0 0.0
    %796 = vmatpush1.msra.mxu0 0.0
    %797 = vmatprep.subr.mxu0 0.0
    %798 = vmatpush1.msra.mxu0 %v758
    %799 = vmatprep.subr.mxu0 0.0
    %800 = vmatpush1.msra.mxu0 %v757
    %801 = vmatprep.subr.mxu0 0.0
    %802 = vmatpush1.msra.mxu0 %v756
    %803 = vmatprep.subr.mxu0 0.0
    %804 = vmatpush1.msra.mxu0 %v755
    %805 = vmatprep.subr.mxu0 0.0
    %806 = vmatpush1.msra.mxu0 %v754
    %807 = vmatprep.subr.mxu0 0.0
    %808 = vmatpush2.msra.mxu0 0.0
    %809 = vmatprep.subr.mxu0 0.0
    %810 = vmatpush2.msra.mxu0 0.0
    %811 = vmatprep.subr.mxu0 0.0
    %812 = vmatpush2.msra.mxu0 0.0
    %813 = vmatprep.subr.mxu0 0.0
    %814 = vmatpush2.msra.mxu0 0.0
    %815 = vmatprep.subr.mxu0 0.0
    %816 = vmatpush2.msra.mxu0 0.0
    %817 = vmatprep.subr.mxu0 0.0
    %818 = vmatpush2.msra.mxu0 0.0
    %819 = vmatprep.subr.mxu0 0.0
    %820 = vmatpush2.msra.mxu0 0.0
    %821 = vmatprep.subr.mxu0 0.0
    %822 = vmatpush2.msra.mxu0 0.0
    %823 = vmatprep.subr.mxu0 0.0
    %824 = vmatpush2.msra.mxu0 0.0
    %825 = vmatprep.subr.mxu0 0.0
    %826 = vmatpush2.msra.mxu0 0.0
    %827 = vmatprep.subr.mxu0 0.0
    %828 = vmatpush2.msra.mxu0 0.0
    %829 = vmatprep.subr.mxu0 0.0
    %830 = vmatpush2.msra.mxu0 0.0
    %831 = vmatprep.subr.mxu0 0.0
    %832 = vmatpush2.msra.mxu0 0.0
    %833 = vmatprep.subr.mxu0 0.0
    %834 = vmatpush2.msra.mxu0 0.0
    %835 = vmatprep.subr.mxu0 0.0
    %836 = vmatpush2.msra.mxu0 0.0
    %837 = vmatprep.subr.mxu0 0.0
    %838 = vmatpush2.msra.mxu0 0.0
    %839 = vmatprep.mubr.f32.mxu0 0.0
    %840 = vmatmul.mubr.f32.gmra.mxu0 %v759
    %v841 = vpop.f32.mrf.mxu0
    %v842 = vadd.f32 0.0, %v841
    %v843 = vpop.f32.mrf.mxu0
    %844 = vmatprep.mubr.f32.mxu0 0.0
    %845 = vmatmul.mubr.f32.gmra.mxu0 %v761
    %v846 = vpop.f32.mrf.mxu0
    %v847 = vadd.f32 0.0, %v846
    %v848 = vpop.f32.mrf.mxu0
    %849 = vmatprep.mubr.f32.mxu0 0.0
    %850 = vmatmul.mubr.f32.gmra.mxu0 %v763
    %v851 = vpop.f32.mrf.mxu0
    %v852 = vadd.f32 0.0, %v851
    %v853 = vpop.f32.mrf.mxu0
    %854 = vmatprep.mubr.f32.mxu0 0.0
    %855 = vmatmul.mubr.f32.gmra.mxu0 %v765
    %v856 = vpop.f32.mrf.mxu0
    %v857 = vadd.f32 0.0, %v856
    %v858 = vpop.f32.mrf.mxu0
    %859 = vmatprep.mubr.f32.mxu0 0.0
    %860 = vmatmul.mubr.f32.gmra.mxu0 %v767
    %v861 = vpop.f32.mrf.mxu0
    %v862 = vadd.f32 0.0, %v861
    %v863 = vpop.f32.mrf.mxu0
    %864 = vmatprep.mubr.f32.mxu0 0.0
    %865 = vmatmul.mubr.f32.gmra.mxu0 %v769
    %v866 = vpop.f32.mrf.mxu0
    %v867 = vadd.f32 0.0, %v866
    %v868 = vpop.f32.mrf.mxu0
    %869 = vmatprep.mubr.f32.mxu0 0.0
    %870 = vmatmul.mubr.f32.gmra.mxu0 %v771
    %v871 = vpop.f32.mrf.mxu0
    %v872 = vadd.f32 0.0, %v871
    %v873 = vpop.f32.mrf.mxu0
    %874 = vmatprep.mubr.f32.mxu0 0.0
    %875 = vmatmul.mubr.f32.gmra.mxu0 %v773
    %v876 = vpop.f32.mrf.mxu0
    %v877 = vadd.f32 0.0, %v876
    %v878 = vpop.f32.mrf.mxu0
    %879 = vdwg.mxu0
    %v880 = vadd.f32 %v745, %v842
    %v881 = vadd.f32 %v746, %v847
    %v882 = vadd.f32 %v747, %v852
    %v883 = vadd.f32 %v748, %v857
    %v884 = vadd.f32 %v749, %v862
    %v885 = vadd.f32 %v750, %v867
    %v886 = vadd.f32 %v751, %v872
    %v887 = vadd.f32 %v752, %v877
    %s888 = scalar_lea.vmem %s1, 200
    %v889 = vld [vmem:[%s888] sm:$0xff]
    %v890 = vld [vmem:[%s888 + $0x8] sm:$0xff]
    %v891 = vld [vmem:[%s888 + $0x10] sm:$0xff]
    %v892 = vld [vmem:[%s888 + $0x18] sm:$0xff]
    %v893 = vld [vmem:[%s888 + $0x20] sm:$0xff]
    %vm894 = vcmask 1046528
    %v895 = vrot.slane %v140, 1
    %v896 = vrot.slane %v141, 1
    %v897 = vsel %vm894, %v895, %v896
    %v898 = vrot.slane %v142, 1
    %v899 = vsel %vm894, %v896, %v898
    %v900 = vrot.slane %v143, 1
    %v901 = vsel %vm894, %v898, %v900
    %v902 = vrot.slane %v144, 1
    %v903 = vsel %vm894, %v900, %v902
    %v904 = vrot.slane %v145, 1
    %v905 = vsel %vm894, %v902, %v904
    %v906 = vrot.slane %v146, 1
    %v907 = vsel %vm894, %v904, %v906
    %v908 = vrot.slane %v147, 1
    %v909 = vsel %vm894, %v906, %v908
    %v910 = vrot.slane 0.0, 1
    %v911 = vsel %vm894, %v908, %v910
    %v912 = vsel %vm186, %v897, 0
    %v914 = vsel %vm186, %v899, 0
    %v916 = vsel %vm186, %v901, 0
    %v918 = vsel %vm186, %v903, 0
    %v920 = vsel %vm186, %v905, 0
    %v922 = vsel %vm186, %v907, 0
    %v924 = vsel %vm186, %v909, 0
    %v926 = vsel %vm186, %v911, 0
    %928 = vmatprep.subr.mxu0 0.0
    %929 = vmatpush1.msra.mxu0 0.0
    %930 = vmatprep.subr.mxu0 0.0
    %931 = vmatpush1.msra.mxu0 0.0
    %932 = vmatprep.subr.mxu0 0.0
    %933 = vmatpush1.msra.mxu0 0.0
    %934 = vmatprep.subr.mxu0 0.0
    %935 = vmatpush1.msra.mxu0 0.0
    %936 = vmatprep.subr.mxu0 0.0
    %937 = vmatpush1.msra.mxu0 0.0
    %938 = vmatprep.subr.mxu0 0.0
    %939 = vmatpush1.msra.mxu0 0.0
    %940 = vmatprep.subr.mxu0 0.0
    %941 = vmatpush1.msra.mxu0 0.0
    %942 = vmatprep.subr.mxu0 0.0
    %943 = vmatpush1.msra.mxu0 0.0
    %944 = vmatprep.subr.mxu0 0.0
    %945 = vmatpush1.msra.mxu0 0.0
    %946 = vmatprep.subr.mxu0 0.0
    %947 = vmatpush1.msra.mxu0 0.0
    %948 = vmatprep.subr.mxu0 0.0
    %949 = vmatpush1.msra.mxu0 0.0
    %950 = vmatprep.subr.mxu0 0.0
    %951 = vmatpush1.msra.mxu0 %v893
    %952 = vmatprep.subr.mxu0 0.0
    %953 = vmatpush1.msra.mxu0 %v892
    %954 = vmatprep.subr.mxu0 0.0
    %955 = vmatpush1.msra.mxu0 %v891
    %956 = vmatprep.subr.mxu0 0.0
    %957 = vmatpush1.msra.mxu0 %v890
    %958 = vmatprep.subr.mxu0 0.0
    %959 = vmatpush1.msra.mxu0 %v889
    %960 = vmatprep.subr.mxu0 0.0
    %961 = vmatpush2.msra.mxu0 0.0
    %962 = vmatprep.subr.mxu0 0.0
    %963 = vmatpush2.msra.mxu0 0.0
    %964 = vmatprep.subr.mxu0 0.0
    %965 = vmatpush2.msra.mxu0 0.0
    %966 = vmatprep.subr.mxu0 0.0
    %967 = vmatpush2.msra.mxu0 0.0
    %968 = vmatprep.subr.mxu0 0.0
    %969 = vmatpush2.msra.mxu0 0.0
    %970 = vmatprep.subr.mxu0 0.0
    %971 = vmatpush2.msra.mxu0 0.0
    %972 = vmatprep.subr.mxu0 0.0
    %973 = vmatpush2.msra.mxu0 0.0
    %974 = vmatprep.subr.mxu0 0.0
    %975 = vmatpush2.msra.mxu0 0.0
    %976 = vmatprep.subr.mxu0 0.0
    %977 = vmatpush2.msra.mxu0 0.0
    %978 = vmatprep.subr.mxu0 0.0
    %979 = vmatpush2.msra.mxu0 0.0
    %980 = vmatprep.subr.mxu0 0.0
    %981 = vmatpush2.msra.mxu0 0.0
    %982 = vmatprep.subr.mxu0 0.0
    %983 = vmatpush2.msra.mxu0 0.0
    %984 = vmatprep.subr.mxu0 0.0
    %985 = vmatpush2.msra.mxu0 0.0
    %986 = vmatprep.subr.mxu0 0.0
    %987 = vmatpush2.msra.mxu0 0.0
    %988 = vmatprep.subr.mxu0 0.0
    %989 = vmatpush2.msra.mxu0 0.0
    %990 = vmatprep.subr.mxu0 0.0
    %991 = vmatpush2.msra.mxu0 0.0
    %992 = vmatprep.mubr.f32.mxu0 0.0
    %993 = vmatmul.mubr.f32.gmra.mxu0 %v912
    %v994 = vpop.f32.mrf.mxu0
    %v995 = vadd.f32 0.0, %v994
    %v996 = vpop.f32.mrf.mxu0
    %997 = vmatprep.mubr.f32.mxu0 0.0
    %998 = vmatmul.mubr.f32.gmra.mxu0 %v914
    %v999 = vpop.f32.mrf.mxu0
    %v1000 = vadd.f32 0.0, %v999
    %v1001 = vpop.f32.mrf.mxu0
    %1002 = vmatprep.mubr.f32.mxu0 0.0
    %1003 = vmatmul.mubr.f32.gmra.mxu0 %v916
    %v1004 = vpop.f32.mrf.mxu0
    %v1005 = vadd.f32 0.0, %v1004
    %v1006 = vpop.f32.mrf.mxu0
    %1007 = vmatprep.mubr.f32.mxu0 0.0
    %1008 = vmatmul.mubr.f32.gmra.mxu0 %v918
    %v1009 = vpop.f32.mrf.mxu0
    %v1010 = vadd.f32 0.0, %v1009
    %v1011 = vpop.f32.mrf.mxu0
    %1012 = vmatprep.mubr.f32.mxu0 0.0
    %1013 = vmatmul.mubr.f32.gmra.mxu0 %v920
    %v1014 = vpop.f32.mrf.mxu0
    %v1015 = vadd.f32 0.0, %v1014
    %v1016 = vpop.f32.mrf.mxu0
    %1017 = vmatprep.mubr.f32.mxu0 0.0
    %1018 = vmatmul.mubr.f32.gmra.mxu0 %v922
    %v1019 = vpop.f32.mrf.mxu0
    %v1020 = vadd.f32 0.0, %v1019
    %v1021 = vpop.f32.mrf.mxu0
    %1022 = vmatprep.mubr.f32.mxu0 0.0
    %1023 = vmatmul.mubr.f32.gmra.mxu0 %v924
    %v1024 = vpop.f32.mrf.mxu0
    %v1025 = vadd.f32 0.0, %v1024
    %v1026 = vpop.f32.mrf.mxu0
    %1027 = vmatprep.mubr.f32.mxu0 0.0
    %1028 = vmatmul.mubr.f32.gmra.mxu0 %v926
    %v1029 = vpop.f32.mrf.mxu0
    %v1030 = vadd.f32 0.0, %v1029
    %v1031 = vpop.f32.mrf.mxu0
    %1032 = vdwg.mxu0
    %v1033 = vadd.f32 %v880, %v995
    %v1034 = vadd.f32 %v881, %v1000
    %v1035 = vadd.f32 %v882, %v1005
    %v1036 = vadd.f32 %v883, %v1010
    %v1037 = vadd.f32 %v884, %v1015
    %v1038 = vadd.f32 %v885, %v1020
    %v1039 = vadd.f32 %v886, %v1025
    %v1040 = vadd.f32 %v887, %v1030
    %s1041 = scalar_lea.vmem %s1, 240
    %v1042 = vld [vmem:[%s1041] sm:$0xff]
    %v1043 = vld [vmem:[%s1041 + $0x8] sm:$0xff]
    %v1044 = vld [vmem:[%s1041 + $0x10] sm:$0xff]
    %v1045 = vld [vmem:[%s1041 + $0x18] sm:$0xff]
    %v1046 = vld [vmem:[%s1041 + $0x20] sm:$0xff]
    %vm1047 = vcmask 1045504
    %v1048 = vrot.slane %v140, 2
    %v1049 = vrot.slane %v141, 2
    %v1050 = vsel %vm1047, %v1048, %v1049
    %v1051 = vrot.slane %v142, 2
    %v1052 = vsel %vm1047, %v1049, %v1051
    %v1053 = vrot.slane %v143, 2
    %v1054 = vsel %vm1047, %v1051, %v1053
    %v1055 = vrot.slane %v144, 2
    %v1056 = vsel %vm1047, %v1053, %v1055
    %v1057 = vrot.slane %v145, 2
    %v1058 = vsel %vm1047, %v1055, %v1057
    %v1059 = vrot.slane %v146, 2
    %v1060 = vsel %vm1047, %v1057, %v1059
    %v1061 = vrot.slane %v147, 2
    %v1062 = vsel %vm1047, %v1059, %v1061
    %v1063 = vrot.slane 0.0, 2
    %v1064 = vsel %vm1047, %v1061, %v1063
    %v1065 = vsel %vm186, %v1050, 0
    %v1067 = vsel %vm186, %v1052, 0
    %v1069 = vsel %vm186, %v1054, 0
    %v1071 = vsel %vm186, %v1056, 0
    %v1073 = vsel %vm186, %v1058, 0
    %v1075 = vsel %vm186, %v1060, 0
    %v1077 = vsel %vm186, %v1062, 0
    %v1079 = vsel %vm186, %v1064, 0
    %1081 = vmatprep.subr.mxu0 0.0
    %1082 = vmatpush1.msra.mxu0 0.0
    %1083 = vmatprep.subr.mxu0 0.0
    %1084 = vmatpush1.msra.mxu0 0.0
    %1085 = vmatprep.subr.mxu0 0.0
    %1086 = vmatpush1.msra.mxu0 0.0
    %1087 = vmatprep.subr.mxu0 0.0
    %1088 = vmatpush1.msra.mxu0 0.0
    %1089 = vmatprep.subr.mxu0 0.0
    %1090 = vmatpush1.msra.mxu0 0.0
    %1091 = vmatprep.subr.mxu0 0.0
    %1092 = vmatpush1.msra.mxu0 0.0
    %1093 = vmatprep.subr.mxu0 0.0
    %1094 = vmatpush1.msra.mxu0 0.0
    %1095 = vmatprep.subr.mxu0 0.0
    %1096 = vmatpush1.msra.mxu0 0.0
    %1097 = vmatprep.subr.mxu0 0.0
    %1098 = vmatpush1.msra.mxu0 0.0
    %1099 = vmatprep.subr.mxu0 0.0
    %1100 = vmatpush1.msra.mxu0 0.0
    %1101 = vmatprep.subr.mxu0 0.0
    %1102 = vmatpush1.msra.mxu0 0.0
    %1103 = vmatprep.subr.mxu0 0.0
    %1104 = vmatpush1.msra.mxu0 %v1046
    %1105 = vmatprep.subr.mxu0 0.0
    %1106 = vmatpush1.msra.mxu0 %v1045
    %1107 = vmatprep.subr.mxu0 0.0
    %1108 = vmatpush1.msra.mxu0 %v1044
    %1109 = vmatprep.subr.mxu0 0.0
    %1110 = vmatpush1.msra.mxu0 %v1043
    %1111 = vmatprep.subr.mxu0 0.0
    %1112 = vmatpush1.msra.mxu0 %v1042
    %1113 = vmatprep.subr.mxu0 0.0
    %1114 = vmatpush2.msra.mxu0 0.0
    %1115 = vmatprep.subr.mxu0 0.0
    %1116 = vmatpush2.msra.mxu0 0.0
    %1117 = vmatprep.subr.mxu0 0.0
    %1118 = vmatpush2.msra.mxu0 0.0
    %1119 = vmatprep.subr.mxu0 0.0
    %1120 = vmatpush2.msra.mxu0 0.0
    %1121 = vmatprep.subr.mxu0 0.0
    %1122 = vmatpush2.msra.mxu0 0.0
    %1123 = vmatprep.subr.mxu0 0.0
    %1124 = vmatpush2.msra.mxu0 0.0
    %1125 = vmatprep.subr.mxu0 0.0
    %1126 = vmatpush2.msra.mxu0 0.0
    %1127 = vmatprep.subr.mxu0 0.0
    %1128 = vmatpush2.msra.mxu0 0.0
    %1129 = vmatprep.subr.mxu0 0.0
    %1130 = vmatpush2.msra.mxu0 0.0
    %1131 = vmatprep.subr.mxu0 0.0
    %1132 = vmatpush2.msra.mxu0 0.0
    %1133 = vmatprep.subr.mxu0 0.0
    %1134 = vmatpush2.msra.mxu0 0.0
    %1135 = vmatprep.subr.mxu0 0.0
    %1136 = vmatpush2.msra.mxu0 0.0
    %1137 = vmatprep.subr.mxu0 0.0
    %1138 = vmatpush2.msra.mxu0 0.0
    %1139 = vmatprep.subr.mxu0 0.0
    %1140 = vmatpush2.msra.mxu0 0.0
    %1141 = vmatprep.subr.mxu0 0.0
    %1142 = vmatpush2.msra.mxu0 0.0
    %1143 = vmatprep.subr.mxu0 0.0
    %1144 = vmatpush2.msra.mxu0 0.0
    %1145 = vmatprep.mubr.f32.mxu0 0.0
    %1146 = vmatmul.mubr.f32.gmra.mxu0 %v1065
    %v1147 = vpop.f32.mrf.mxu0
    %v1148 = vadd.f32 0.0, %v1147
    %v1149 = vpop.f32.mrf.mxu0
    %1150 = vmatprep.mubr.f32.mxu0 0.0
    %1151 = vmatmul.mubr.f32.gmra.mxu0 %v1067
    %v1152 = vpop.f32.mrf.mxu0
    %v1153 = vadd.f32 0.0, %v1152
    %v1154 = vpop.f32.mrf.mxu0
    %1155 = vmatprep.mubr.f32.mxu0 0.0
    %1156 = vmatmul.mubr.f32.gmra.mxu0 %v1069
    %v1157 = vpop.f32.mrf.mxu0
    %v1158 = vadd.f32 0.0, %v1157
    %v1159 = vpop.f32.mrf.mxu0
    %1160 = vmatprep.mubr.f32.mxu0 0.0
    %1161 = vmatmul.mubr.f32.gmra.mxu0 %v1071
    %v1162 = vpop.f32.mrf.mxu0
    %v1163 = vadd.f32 0.0, %v1162
    %v1164 = vpop.f32.mrf.mxu0
    %1165 = vmatprep.mubr.f32.mxu0 0.0
    %1166 = vmatmul.mubr.f32.gmra.mxu0 %v1073
    %v1167 = vpop.f32.mrf.mxu0
    %v1168 = vadd.f32 0.0, %v1167
    %v1169 = vpop.f32.mrf.mxu0
    %1170 = vmatprep.mubr.f32.mxu0 0.0
    %1171 = vmatmul.mubr.f32.gmra.mxu0 %v1075
    %v1172 = vpop.f32.mrf.mxu0
    %v1173 = vadd.f32 0.0, %v1172
    %v1174 = vpop.f32.mrf.mxu0
    %1175 = vmatprep.mubr.f32.mxu0 0.0
    %1176 = vmatmul.mubr.f32.gmra.mxu0 %v1077
    %v1177 = vpop.f32.mrf.mxu0
    %v1178 = vadd.f32 0.0, %v1177
    %v1179 = vpop.f32.mrf.mxu0
    %1180 = vmatprep.mubr.f32.mxu0 0.0
    %1181 = vmatmul.mubr.f32.gmra.mxu0 %v1079
    %v1182 = vpop.f32.mrf.mxu0
    %v1183 = vadd.f32 0.0, %v1182
    %v1184 = vpop.f32.mrf.mxu0
    %1185 = vdwg.mxu0
    %v1186 = vadd.f32 %v1033, %v1148
    %v1187 = vadd.f32 %v1034, %v1153
    %v1188 = vadd.f32 %v1035, %v1158
    %v1189 = vadd.f32 %v1036, %v1163
    %v1190 = vadd.f32 %v1037, %v1168
    %v1191 = vadd.f32 %v1038, %v1173
    %v1192 = vadd.f32 %v1039, %v1178
    %v1193 = vadd.f32 %v1040, %v1183
    %s1194 = scalar_lea.vmem %s1, 280
    %v1195 = vld [vmem:[%s1194] sm:$0xff]
    %v1196 = vld [vmem:[%s1194 + $0x8] sm:$0xff]
    %v1197 = vld [vmem:[%s1194 + $0x10] sm:$0xff]
    %v1198 = vld [vmem:[%s1194 + $0x18] sm:$0xff]
    %v1199 = vld [vmem:[%s1194 + $0x20] sm:$0xff]
    %vm1200 = vcmask 1044480
    %v1201 = vrot.slane %v140, 3
    %v1202 = vrot.slane %v141, 3
    %v1203 = vsel %vm1200, %v1201, %v1202
    %v1204 = vrot.slane %v142, 3
    %v1205 = vsel %vm1200, %v1202, %v1204
    %v1206 = vrot.slane %v143, 3
    %v1207 = vsel %vm1200, %v1204, %v1206
    %v1208 = vrot.slane %v144, 3
    %v1209 = vsel %vm1200, %v1206, %v1208
    %v1210 = vrot.slane %v145, 3
    %v1211 = vsel %vm1200, %v1208, %v1210
    %v1212 = vrot.slane %v146, 3
    %v1213 = vsel %vm1200, %v1210, %v1212
    %v1214 = vrot.slane %v147, 3
    %v1215 = vsel %vm1200, %v1212, %v1214
    %v1216 = vrot.slane 0.0, 3
    %v1217 = vsel %vm1200, %v1214, %v1216
    %v1218 = vsel %vm186, %v1203, 0
    %v1220 = vsel %vm186, %v1205, 0
    %v1222 = vsel %vm186, %v1207, 0
    %v1224 = vsel %vm186, %v1209, 0
    %v1226 = vsel %vm186, %v1211, 0
    %v1228 = vsel %vm186, %v1213, 0
    %v1230 = vsel %vm186, %v1215, 0
    %v1232 = vsel %vm186, %v1217, 0
    %1234 = vmatprep.subr.mxu0 0.0
    %1235 = vmatpush1.msra.mxu0 0.0
    %1236 = vmatprep.subr.mxu0 0.0
    %1237 = vmatpush1.msra.mxu0 0.0
    %1238 = vmatprep.subr.mxu0 0.0
    %1239 = vmatpush1.msra.mxu0 0.0
    %1240 = vmatprep.subr.mxu0 0.0
    %1241 = vmatpush1.msra.mxu0 0.0
    %1242 = vmatprep.subr.mxu0 0.0
    %1243 = vmatpush1.msra.mxu0 0.0
    %1244 = vmatprep.subr.mxu0 0.0
    %1245 = vmatpush1.msra.mxu0 0.0
    %1246 = vmatprep.subr.mxu0 0.0
    %1247 = vmatpush1.msra.mxu0 0.0
    %1248 = vmatprep.subr.mxu0 0.0
    %1249 = vmatpush1.msra.mxu0 0.0
    %1250 = vmatprep.subr.mxu0 0.0
    %1251 = vmatpush1.msra.mxu0 0.0
    %1252 = vmatprep.subr.mxu0 0.0
    %1253 = vmatpush1.msra.mxu0 0.0
    %1254 = vmatprep.subr.mxu0 0.0
    %1255 = vmatpush1.msra.mxu0 0.0
    %1256 = vmatprep.subr.mxu0 0.0
    %1257 = vmatpush1.msra.mxu0 %v1199
    %1258 = vmatprep.subr.mxu0 0.0
    %1259 = vmatpush1.msra.mxu0 %v1198
    %1260 = vmatprep.subr.mxu0 0.0
    %1261 = vmatpush1.msra.mxu0 %v1197
    %1262 = vmatprep.subr.mxu0 0.0
    %1263 = vmatpush1.msra.mxu0 %v1196
    %1264 = vmatprep.subr.mxu0 0.0
    %1265 = vmatpush1.msra.mxu0 %v1195
    %1266 = vmatprep.subr.mxu0 0.0
    %1267 = vmatpush2.msra.mxu0 0.0
    %1268 = vmatprep.subr.mxu0 0.0
    %1269 = vmatpush2.msra.mxu0 0.0
    %1270 = vmatprep.subr.mxu0 0.0
    %1271 = vmatpush2.msra.mxu0 0.0
    %1272 = vmatprep.subr.mxu0 0.0
    %1273 = vmatpush2.msra.mxu0 0.0
    %1274 = vmatprep.subr.mxu0 0.0
    %1275 = vmatpush2.msra.mxu0 0.0
    %1276 = vmatprep.subr.mxu0 0.0
    %1277 = vmatpush2.msra.mxu0 0.0
    %1278 = vmatprep.subr.mxu0 0.0
    %1279 = vmatpush2.msra.mxu0 0.0
    %1280 = vmatprep.subr.mxu0 0.0
    %1281 = vmatpush2.msra.mxu0 0.0
    %1282 = vmatprep.subr.mxu0 0.0
    %1283 = vmatpush2.msra.mxu0 0.0
    %1284 = vmatprep.subr.mxu0 0.0
    %1285 = vmatpush2.msra.mxu0 0.0
    %1286 = vmatprep.subr.mxu0 0.0
    %1287 = vmatpush2.msra.mxu0 0.0
    %1288 = vmatprep.subr.mxu0 0.0
    %1289 = vmatpush2.msra.mxu0 0.0
    %1290 = vmatprep.subr.mxu0 0.0
    %1291 = vmatpush2.msra.mxu0 0.0
    %1292 = vmatprep.subr.mxu0 0.0
    %1293 = vmatpush2.msra.mxu0 0.0
    %1294 = vmatprep.subr.mxu0 0.0
    %1295 = vmatpush2.msra.mxu0 0.0
    %1296 = vmatprep.subr.mxu0 0.0
    %1297 = vmatpush2.msra.mxu0 0.0
    %1298 = vmatprep.mubr.f32.mxu0 0.0
    %1299 = vmatmul.mubr.f32.gmra.mxu0 %v1218
    %v1300 = vpop.f32.mrf.mxu0
    %v1301 = vadd.f32 0.0, %v1300
    %v1302 = vpop.f32.mrf.mxu0
    %1303 = vmatprep.mubr.f32.mxu0 0.0
    %1304 = vmatmul.mubr.f32.gmra.mxu0 %v1220
    %v1305 = vpop.f32.mrf.mxu0
    %v1306 = vadd.f32 0.0, %v1305
    %v1307 = vpop.f32.mrf.mxu0
    %1308 = vmatprep.mubr.f32.mxu0 0.0
    %1309 = vmatmul.mubr.f32.gmra.mxu0 %v1222
    %v1310 = vpop.f32.mrf.mxu0
    %v1311 = vadd.f32 0.0, %v1310
    %v1312 = vpop.f32.mrf.mxu0
    %1313 = vmatprep.mubr.f32.mxu0 0.0
    %1314 = vmatmul.mubr.f32.gmra.mxu0 %v1224
    %v1315 = vpop.f32.mrf.mxu0
    %v1316 = vadd.f32 0.0, %v1315
    %v1317 = vpop.f32.mrf.mxu0
    %1318 = vmatprep.mubr.f32.mxu0 0.0
    %1319 = vmatmul.mubr.f32.gmra.mxu0 %v1226
    %v1320 = vpop.f32.mrf.mxu0
    %v1321 = vadd.f32 0.0, %v1320
    %v1322 = vpop.f32.mrf.mxu0
    %1323 = vmatprep.mubr.f32.mxu0 0.0
    %1324 = vmatmul.mubr.f32.gmra.mxu0 %v1228
    %v1325 = vpop.f32.mrf.mxu0
    %v1326 = vadd.f32 0.0, %v1325
    %v1327 = vpop.f32.mrf.mxu0
    %1328 = vmatprep.mubr.f32.mxu0 0.0
    %1329 = vmatmul.mubr.f32.gmra.mxu0 %v1230
    %v1330 = vpop.f32.mrf.mxu0
    %v1331 = vadd.f32 0.0, %v1330
    %v1332 = vpop.f32.mrf.mxu0
    %1333 = vmatprep.mubr.f32.mxu0 0.0
    %1334 = vmatmul.mubr.f32.gmra.mxu0 %v1232
    %v1335 = vpop.f32.mrf.mxu0
    %v1336 = vadd.f32 0.0, %v1335
    %v1337 = vpop.f32.mrf.mxu0
    %1338 = vdwg.mxu0
    %v1339 = vadd.f32 %v1186, %v1301
    %v1340 = vadd.f32 %v1187, %v1306
    %v1341 = vadd.f32 %v1188, %v1311
    %v1342 = vadd.f32 %v1189, %v1316
    %v1343 = vadd.f32 %v1190, %v1321
    %v1344 = vadd.f32 %v1191, %v1326
    %v1345 = vadd.f32 %v1192, %v1331
    %v1346 = vadd.f32 %v1193, %v1336
    %s1347 = scalar_lea.vmem %s1, 320
    %v1348 = vld [vmem:[%s1347] sm:$0xff]
    %v1349 = vld [vmem:[%s1347 + $0x8] sm:$0xff]
    %v1350 = vld [vmem:[%s1347 + $0x10] sm:$0xff]
    %v1351 = vld [vmem:[%s1347 + $0x18] sm:$0xff]
    %v1352 = vld [vmem:[%s1347 + $0x20] sm:$0xff]
    %v1353 = vsel %vm308, %v324, %v309
    %v1354 = vsel %vm186, %v1353, 0
    %1356 = vmatprep.subr.mxu0 0.0
    %1357 = vmatpush1.msra.mxu0 0.0
    %1358 = vmatprep.subr.mxu0 0.0
    %1359 = vmatpush1.msra.mxu0 0.0
    %1360 = vmatprep.subr.mxu0 0.0
    %1361 = vmatpush1.msra.mxu0 0.0
    %1362 = vmatprep.subr.mxu0 0.0
    %1363 = vmatpush1.msra.mxu0 0.0
    %1364 = vmatprep.subr.mxu0 0.0
    %1365 = vmatpush1.msra.mxu0 0.0
    %1366 = vmatprep.subr.mxu0 0.0
    %1367 = vmatpush1.msra.mxu0 0.0
    %1368 = vmatprep.subr.mxu0 0.0
    %1369 = vmatpush1.msra.mxu0 0.0
    %1370 = vmatprep.subr.mxu0 0.0
    %1371 = vmatpush1.msra.mxu0 0.0
    %1372 = vmatprep.subr.mxu0 0.0
    %1373 = vmatpush1.msra.mxu0 0.0
    %1374 = vmatprep.subr.mxu0 0.0
    %1375 = vmatpush1.msra.mxu0 0.0
    %1376 = vmatprep.subr.mxu0 0.0
    %1377 = vmatpush1.msra.mxu0 0.0
    %1378 = vmatprep.subr.mxu0 0.0
    %1379 = vmatpush1.msra.mxu0 %v1352
    %1380 = vmatprep.subr.mxu0 0.0
    %1381 = vmatpush1.msra.mxu0 %v1351
    %1382 = vmatprep.subr.mxu0 0.0
    %1383 = vmatpush1.msra.mxu0 %v1350
    %1384 = vmatprep.subr.mxu0 0.0
    %1385 = vmatpush1.msra.mxu0 %v1349
    %1386 = vmatprep.subr.mxu0 0.0
    %1387 = vmatpush1.msra.mxu0 %v1348
    %1388 = vmatprep.subr.mxu0 0.0
    %1389 = vmatpush2.msra.mxu0 0.0
    %1390 = vmatprep.subr.mxu0 0.0
    %1391 = vmatpush2.msra.mxu0 0.0
    %1392 = vmatprep.subr.mxu0 0.0
    %1393 = vmatpush2.msra.mxu0 0.0
    %1394 = vmatprep.subr.mxu0 0.0
    %1395 = vmatpush2.msra.mxu0 0.0
    %1396 = vmatprep.subr.mxu0 0.0
    %1397 = vmatpush2.msra.mxu0 0.0
    %1398 = vmatprep.subr.mxu0 0.0
    %1399 = vmatpush2.msra.mxu0 0.0
    %1400 = vmatprep.subr.mxu0 0.0
    %1401 = vmatpush2.msra.mxu0 0.0
    %1402 = vmatprep.subr.mxu0 0.0
    %1403 = vmatpush2.msra.mxu0 0.0
    %1404 = vmatprep.subr.mxu0 0.0
    %1405 = vmatpush2.msra.mxu0 0.0
    %1406 = vmatprep.subr.mxu0 0.0
    %1407 = vmatpush2.msra.mxu0 0.0
    %1408 = vmatprep.subr.mxu0 0.0
    %1409 = vmatpush2.msra.mxu0 0.0
    %1410 = vmatprep.subr.mxu0 0.0
    %1411 = vmatpush2.msra.mxu0 0.0
    %1412 = vmatprep.subr.mxu0 0.0
    %1413 = vmatpush2.msra.mxu0 0.0
    %1414 = vmatprep.subr.mxu0 0.0
    %1415 = vmatpush2.msra.mxu0 0.0
    %1416 = vmatprep.subr.mxu0 0.0
    %1417 = vmatpush2.msra.mxu0 0.0
    %1418 = vmatprep.subr.mxu0 0.0
    %1419 = vmatpush2.msra.mxu0 0.0
    %1420 = vmatprep.mubr.f32.mxu0 0.0
    %1421 = vmatmul.mubr.f32.gmra.mxu0 %v328
    %v1422 = vpop.f32.mrf.mxu0
    %v1423 = vadd.f32 0.0, %v1422
    %v1424 = vpop.f32.mrf.mxu0
    %1425 = vmatprep.mubr.f32.mxu0 0.0
    %1426 = vmatmul.mubr.f32.gmra.mxu0 %v330
    %v1427 = vpop.f32.mrf.mxu0
    %v1428 = vadd.f32 0.0, %v1427
    %v1429 = vpop.f32.mrf.mxu0
    %1430 = vmatprep.mubr.f32.mxu0 0.0
    %1431 = vmatmul.mubr.f32.gmra.mxu0 %v332
    %v1432 = vpop.f32.mrf.mxu0
    %v1433 = vadd.f32 0.0, %v1432
    %v1434 = vpop.f32.mrf.mxu0
    %1435 = vmatprep.mubr.f32.mxu0 0.0
    %1436 = vmatmul.mubr.f32.gmra.mxu0 %v334
    %v1437 = vpop.f32.mrf.mxu0
    %v1438 = vadd.f32 0.0, %v1437
    %v1439 = vpop.f32.mrf.mxu0
    %1440 = vmatprep.mubr.f32.mxu0 0.0
    %1441 = vmatmul.mubr.f32.gmra.mxu0 %v336
    %v1442 = vpop.f32.mrf.mxu0
    %v1443 = vadd.f32 0.0, %v1442
    %v1444 = vpop.f32.mrf.mxu0
    %1445 = vmatprep.mubr.f32.mxu0 0.0
    %1446 = vmatmul.mubr.f32.gmra.mxu0 %v338
    %v1447 = vpop.f32.mrf.mxu0
    %v1448 = vadd.f32 0.0, %v1447
    %v1449 = vpop.f32.mrf.mxu0
    %1450 = vmatprep.mubr.f32.mxu0 0.0
    %1451 = vmatmul.mubr.f32.gmra.mxu0 %v340
    %v1452 = vpop.f32.mrf.mxu0
    %v1453 = vadd.f32 0.0, %v1452
    %v1454 = vpop.f32.mrf.mxu0
    %1455 = vmatprep.mubr.f32.mxu0 0.0
    %1456 = vmatmul.mubr.f32.gmra.mxu0 %v1354
    %v1457 = vpop.f32.mrf.mxu0
    %v1458 = vadd.f32 0.0, %v1457
    %v1459 = vpop.f32.mrf.mxu0
    %1460 = vdwg.mxu0
    %v1461 = vadd.f32 %v1339, %v1423
    %v1462 = vadd.f32 %v1340, %v1428
    %v1463 = vadd.f32 %v1341, %v1433
    %v1464 = vadd.f32 %v1342, %v1438
    %v1465 = vadd.f32 %v1343, %v1443
    %v1466 = vadd.f32 %v1344, %v1448
    %v1467 = vadd.f32 %v1345, %v1453
    %v1468 = vadd.f32 %v1346, %v1458
    %v1469 = vld [vmem:[%s2] sm:$0x1]
    %v1471 = vlaneseq
    %v1472 = vshrl.u32 %v1471, 7
    %v1473 = vsub.s32 0, %v1472
    %v1474 = vrot.slane %v1469, %v1473
    %v1476 = vadd.f32 %v1461, %v1474
    %v1477 = vadd.f32 %v1462, %v1474
    %v1478 = vadd.f32 %v1463, %v1474
    %v1479 = vadd.f32 %v1464, %v1474
    %v1480 = vadd.f32 %v1465, %v1474
    %v1481 = vadd.f32 %v1466, %v1474
    %v1482 = vadd.f32 %v1467, %v1474
    %v1483 = vadd.f32 %v1468, %v1474
    %v1484 = vmax.f32 %v1476, 0.0
    %v1485 = vmax.f32 %v1477, 0.0
    %v1486 = vmax.f32 %v1478, 0.0
    %v1487 = vmax.f32 %v1479, 0.0
    %v1488 = vmax.f32 %v1480, 0.0
    %v1489 = vmax.f32 %v1481, 0.0
    %v1490 = vmax.f32 %v1482, 0.0
    %v1491 = vmax.f32 %v1483, 0.0
    %v1492 = vmul.f32 %v1484, %v82
    %v1493 = vmul.f32 %v1485, %v83
    %v1494 = vmul.f32 %v1486, %v84
    %v1495 = vmul.f32 %v1487, %v85
    %v1496 = vmul.f32 %v1488, %v86
    %v1497 = vmul.f32 %v1489, %v87
    %v1498 = vmul.f32 %v1490, %v88
    %v1499 = vmul.f32 %v1491, %v89
    %v1500 = vld [vmem:[%s3] sm:$0xff]
    %v1501 = vld [vmem:[%s3 + $0x8] sm:$0x1]
    %s1502 = scalar_lea.vmem %s3, 16
    %v1503 = vld [vmem:[%s1502] sm:$0xff]
    %v1504 = vld [vmem:[%s1502 + $0x8] sm:$0x1]
    %v1513 = vrot.slane %v1492, 5
    %v1514 = vsel %vm168, %v169, %v1513
    %v1515 = vrot.slane %v1493, 5
    %v1516 = vsel %vm168, %v1513, %v1515
    %v1517 = vrot.slane %v1494, 5
    %v1518 = vsel %vm168, %v1515, %v1517
    %v1519 = vrot.slane %v1495, 5
    %v1520 = vsel %vm168, %v1517, %v1519
    %v1521 = vrot.slane %v1496, 5
    %v1522 = vsel %vm168, %v1519, %v1521
    %v1523 = vrot.slane %v1497, 5
    %v1524 = vsel %vm168, %v1521, %v1523
    %v1525 = vrot.slane %v1498, 5
    %v1526 = vsel %vm168, %v1523, %v1525
    %v1527 = vrot.slane %v1499, 5
    %v1528 = vsel %vm168, %v1525, %v1527
    %vm1529 = vcmask 72704
    %v1530 = vsel %vm1529, %v1514, 0
    %v1532 = vsel %vm1529, %v1516, 0
    %v1534 = vsel %vm1529, %v1518, 0
    %v1536 = vsel %vm1529, %v1520, 0
    %v1538 = vsel %vm1529, %v1522, 0
    %v1540 = vsel %vm1529, %v1524, 0
    %v1542 = vsel %vm1529, %v1526, 0
    %v1544 = vsel %vm1529, %v1528, 0
    %v1547 = vsel %vm606, %v1504, 0
    %1549 = vmatprep.subr.mxu0 0.0
    %1550 = vmatpush1.msra.mxu0 0.0
    %1551 = vmatprep.subr.mxu0 0.0
    %1552 = vmatpush1.msra.mxu0 0.0
    %1553 = vmatprep.subr.mxu0 0.0
    %1554 = vmatpush1.msra.mxu0 0.0
    %1555 = vmatprep.subr.mxu0 0.0
    %1556 = vmatpush1.msra.mxu0 0.0
    %1557 = vmatprep.subr.mxu0 0.0
    %1558 = vmatpush1.msra.mxu0 0.0
    %1559 = vmatprep.subr.mxu0 0.0
    %1560 = vmatpush1.msra.mxu0 0.0
    %1561 = vmatprep.subr.mxu0 0.0
    %1562 = vmatpush1.msra.mxu0 0.0
    %1563 = vmatprep.subr.mxu0 0.0
    %1564 = vmatpush1.msra.mxu0 0.0
    %1565 = vmatprep.subr.mxu0 0.0
    %1566 = vmatpush1.msra.mxu0 0.0
    %1567 = vmatprep.subr.mxu0 0.0
    %1568 = vmatpush1.msra.mxu0 0.0
    %1569 = vmatprep.subr.mxu0 0.0
    %1570 = vmatpush1.msra.mxu0 0.0
    %1571 = vmatprep.subr.mxu0 0.0
    %1572 = vmatpush1.msra.mxu0 0.0
    %1573 = vmatprep.subr.mxu0 0.0
    %1574 = vmatpush1.msra.mxu0 0.0
    %1575 = vmatprep.subr.mxu0 0.0
    %1576 = vmatpush1.msra.mxu0 0.0
    %1577 = vmatprep.subr.mxu0 0.0
    %1578 = vmatpush1.msra.mxu0 %v1547
    %1579 = vmatprep.subr.mxu0 0.0
    %1580 = vmatpush1.msra.mxu0 %v1503
    %1581 = vmatprep.subr.mxu0 0.0
    %1582 = vmatpush2.msra.mxu0 0.0
    %1583 = vmatprep.subr.mxu0 0.0
    %1584 = vmatpush2.msra.mxu0 0.0
    %1585 = vmatprep.subr.mxu0 0.0
    %1586 = vmatpush2.msra.mxu0 0.0
    %1587 = vmatprep.subr.mxu0 0.0
    %1588 = vmatpush2.msra.mxu0 0.0
    %1589 = vmatprep.subr.mxu0 0.0
    %1590 = vmatpush2.msra.mxu0 0.0
    %1591 = vmatprep.subr.mxu0 0.0
    %1592 = vmatpush2.msra.mxu0 0.0
    %1593 = vmatprep.subr.mxu0 0.0
    %1594 = vmatpush2.msra.mxu0 0.0
    %1595 = vmatprep.subr.mxu0 0.0
    %1596 = vmatpush2.msra.mxu0 0.0
    %1597 = vmatprep.subr.mxu0 0.0
    %1598 = vmatpush2.msra.mxu0 0.0
    %1599 = vmatprep.subr.mxu0 0.0
    %1600 = vmatpush2.msra.mxu0 0.0
    %1601 = vmatprep.subr.mxu0 0.0
    %1602 = vmatpush2.msra.mxu0 0.0
    %1603 = vmatprep.subr.mxu0 0.0
    %1604 = vmatpush2.msra.mxu0 0.0
    %1605 = vmatprep.subr.mxu0 0.0
    %1606 = vmatpush2.msra.mxu0 0.0
    %1607 = vmatprep.subr.mxu0 0.0
    %1608 = vmatpush2.msra.mxu0 0.0
    %1609 = vmatprep.subr.mxu0 0.0
    %1610 = vmatpush2.msra.mxu0 0.0
    %1611 = vmatprep.subr.mxu0 0.0
    %1612 = vmatpush2.msra.mxu0 0.0
    %1613 = vmatprep.mubr.f32.mxu0 0.0
    %1614 = vmatmul.mubr.f32.gmra.mxu0 %v1530
    %v1615 = vpop.f32.mrf.mxu0
    %v1616 = vadd.f32 0.0, %v1615
    %v1617 = vpop.f32.mrf.mxu0
    %1618 = vmatprep.mubr.f32.mxu0 0.0
    %1619 = vmatmul.mubr.f32.gmra.mxu0 %v1532
    %v1620 = vpop.f32.mrf.mxu0
    %v1621 = vadd.f32 0.0, %v1620
    %v1622 = vpop.f32.mrf.mxu0
    %1623 = vmatprep.mubr.f32.mxu0 0.0
    %1624 = vmatmul.mubr.f32.gmra.mxu0 %v1534
    %v1625 = vpop.f32.mrf.mxu0
    %v1626 = vadd.f32 0.0, %v1625
    %v1627 = vpop.f32.mrf.mxu0
    %1628 = vmatprep.mubr.f32.mxu0 0.0
    %1629 = vmatmul.mubr.f32.gmra.mxu0 %v1536
    %v1630 = vpop.f32.mrf.mxu0
    %v1631 = vadd.f32 0.0, %v1630
    %v1632 = vpop.f32.mrf.mxu0
    %1633 = vmatprep.mubr.f32.mxu0 0.0
    %1634 = vmatmul.mubr.f32.gmra.mxu0 %v1538
    %v1635 = vpop.f32.mrf.mxu0
    %v1636 = vadd.f32 0.0, %v1635
    %v1637 = vpop.f32.mrf.mxu0
    %1638 = vmatprep.mubr.f32.mxu0 0.0
    %1639 = vmatmul.mubr.f32.gmra.mxu0 %v1540
    %v1640 = vpop.f32.mrf.mxu0
    %v1641 = vadd.f32 0.0, %v1640
    %v1642 = vpop.f32.mrf.mxu0
    %1643 = vmatprep.mubr.f32.mxu0 0.0
    %1644 = vmatmul.mubr.f32.gmra.mxu0 %v1542
    %v1645 = vpop.f32.mrf.mxu0
    %v1646 = vadd.f32 0.0, %v1645
    %v1647 = vpop.f32.mrf.mxu0
    %1648 = vmatprep.mubr.f32.mxu0 0.0
    %1649 = vmatmul.mubr.f32.gmra.mxu0 %v1544
    %v1650 = vpop.f32.mrf.mxu0
    %v1651 = vadd.f32 0.0, %v1650
    %v1652 = vpop.f32.mrf.mxu0
    %1653 = vdwg.mxu0
    %v1654 = vrot.slane %v1492, 4
    %v1655 = vsel %vm308, %v309, %v1654
    %v1656 = vrot.slane %v1493, 4
    %v1657 = vsel %vm308, %v1654, %v1656
    %v1658 = vrot.slane %v1494, 4
    %v1659 = vsel %vm308, %v1656, %v1658
    %v1660 = vrot.slane %v1495, 4
    %v1661 = vsel %vm308, %v1658, %v1660
    %v1662 = vrot.slane %v1496, 4
    %v1663 = vsel %vm308, %v1660, %v1662
    %v1664 = vrot.slane %v1497, 4
    %v1665 = vsel %vm308, %v1662, %v1664
    %v1666 = vrot.slane %v1498, 4
    %v1667 = vsel %vm308, %v1664, %v1666
    %v1668 = vrot.slane %v1499, 4
    %v1669 = vsel %vm308, %v1666, %v1668
    %v1670 = vsel %vm1529, %v1655, 0
    %v1672 = vsel %vm1529, %v1657, 0
    %v1674 = vsel %vm1529, %v1659, 0
    %v1676 = vsel %vm1529, %v1661, 0
    %v1678 = vsel %vm1529, %v1663, 0
    %v1680 = vsel %vm1529, %v1665, 0
    %v1682 = vsel %vm1529, %v1667, 0
    %v1684 = vsel %vm1529, %v1669, 0
    %v1687 = vsel %vm606, %v1501, 0
    %1689 = vmatprep.subr.mxu0 0.0
    %1690 = vmatpush1.msra.mxu0 0.0
    %1691 = vmatprep.subr.mxu0 0.0
    %1692 = vmatpush1.msra.mxu0 0.0
    %1693 = vmatprep.subr.mxu0 0.0
    %1694 = vmatpush1.msra.mxu0 0.0
    %1695 = vmatprep.subr.mxu0 0.0
    %1696 = vmatpush1.msra.mxu0 0.0
    %1697 = vmatprep.subr.mxu0 0.0
    %1698 = vmatpush1.msra.mxu0 0.0
    %1699 = vmatprep.subr.mxu0 0.0
    %1700 = vmatpush1.msra.mxu0 0.0
    %1701 = vmatprep.subr.mxu0 0.0
    %1702 = vmatpush1.msra.mxu0 0.0
    %1703 = vmatprep.subr.mxu0 0.0
    %1704 = vmatpush1.msra.mxu0 0.0
    %1705 = vmatprep.subr.mxu0 0.0
    %1706 = vmatpush1.msra.mxu0 0.0
    %1707 = vmatprep.subr.mxu0 0.0
    %1708 = vmatpush1.msra.mxu0 0.0
    %1709 = vmatprep.subr.mxu0 0.0
    %1710 = vmatpush1.msra.mxu0 0.0
    %1711 = vmatprep.subr.mxu0 0.0
    %1712 = vmatpush1.msra.mxu0 0.0
    %1713 = vmatprep.subr.mxu0 0.0
    %1714 = vmatpush1.msra.mxu0 0.0
    %1715 = vmatprep.subr.mxu0 0.0
    %1716 = vmatpush1.msra.mxu0 0.0
    %1717 = vmatprep.subr.mxu0 0.0
    %1718 = vmatpush1.msra.mxu0 %v1687
    %1719 = vmatprep.subr.mxu0 0.0
    %1720 = vmatpush1.msra.mxu0 %v1500
    %1721 = vmatprep.subr.mxu0 0.0
    %1722 = vmatpush2.msra.mxu0 0.0
    %1723 = vmatprep.subr.mxu0 0.0
    %1724 = vmatpush2.msra.mxu0 0.0
    %1725 = vmatprep.subr.mxu0 0.0
    %1726 = vmatpush2.msra.mxu0 0.0
    %1727 = vmatprep.subr.mxu0 0.0
    %1728 = vmatpush2.msra.mxu0 0.0
    %1729 = vmatprep.subr.mxu0 0.0
    %1730 = vmatpush2.msra.mxu0 0.0
    %1731 = vmatprep.subr.mxu0 0.0
    %1732 = vmatpush2.msra.mxu0 0.0
    %1733 = vmatprep.subr.mxu0 0.0
    %1734 = vmatpush2.msra.mxu0 0.0
    %1735 = vmatprep.subr.mxu0 0.0
    %1736 = vmatpush2.msra.mxu0 0.0
    %1737 = vmatprep.subr.mxu0 0.0
    %1738 = vmatpush2.msra.mxu0 0.0
    %1739 = vmatprep.subr.mxu0 0.0
    %1740 = vmatpush2.msra.mxu0 0.0
    %1741 = vmatprep.subr.mxu0 0.0
    %1742 = vmatpush2.msra.mxu0 0.0
    %1743 = vmatprep.subr.mxu0 0.0
    %1744 = vmatpush2.msra.mxu0 0.0
    %1745 = vmatprep.subr.mxu0 0.0
    %1746 = vmatpush2.msra.mxu0 0.0
    %1747 = vmatprep.subr.mxu0 0.0
    %1748 = vmatpush2.msra.mxu0 0.0
    %1749 = vmatprep.subr.mxu0 0.0
    %1750 = vmatpush2.msra.mxu0 0.0
    %1751 = vmatprep.subr.mxu0 0.0
    %1752 = vmatpush2.msra.mxu0 0.0
    %1753 = vmatprep.mubr.f32.mxu0 0.0
    %1754 = vmatmul.mubr.f32.gmra.mxu0 %v1670
    %v1755 = vpop.f32.mrf.mxu0
    %v1756 = vadd.f32 %v1616, %v1755
    %v1757 = vpop.f32.mrf.mxu0
    %1758 = vmatprep.mubr.f32.mxu0 0.0
    %1759 = vmatmul.mubr.f32.gmra.mxu0 %v1672
    %v1760 = vpop.f32.mrf.mxu0
    %v1761 = vadd.f32 %v1621, %v1760
    %v1762 = vpop.f32.mrf.mxu0
    %1763 = vmatprep.mubr.f32.mxu0 0.0
    %1764 = vmatmul.mubr.f32.gmra.mxu0 %v1674
    %v1765 = vpop.f32.mrf.mxu0
    %v1766 = vadd.f32 %v1626, %v1765
    %v1767 = vpop.f32.mrf.mxu0
    %1768 = vmatprep.mubr.f32.mxu0 0.0
    %1769 = vmatmul.mubr.f32.gmra.mxu0 %v1676
    %v1770 = vpop.f32.mrf.mxu0
    %v1771 = vadd.f32 %v1631, %v1770
    %v1772 = vpop.f32.mrf.mxu0
    %1773 = vmatprep.mubr.f32.mxu0 0.0
    %1774 = vmatmul.mubr.f32.gmra.mxu0 %v1678
    %v1775 = vpop.f32.mrf.mxu0
    %v1776 = vadd.f32 %v1636, %v1775
    %v1777 = vpop.f32.mrf.mxu0
    %1778 = vmatprep.mubr.f32.mxu0 0.0
    %1779 = vmatmul.mubr.f32.gmra.mxu0 %v1680
    %v1780 = vpop.f32.mrf.mxu0
    %v1781 = vadd.f32 %v1641, %v1780
    %v1782 = vpop.f32.mrf.mxu0
    %1783 = vmatprep.mubr.f32.mxu0 0.0
    %1784 = vmatmul.mubr.f32.gmra.mxu0 %v1682
    %v1785 = vpop.f32.mrf.mxu0
    %v1786 = vadd.f32 %v1646, %v1785
    %v1787 = vpop.f32.mrf.mxu0
    %1788 = vmatprep.mubr.f32.mxu0 0.0
    %1789 = vmatmul.mubr.f32.gmra.mxu0 %v1684
    %v1790 = vpop.f32.mrf.mxu0
    %v1791 = vadd.f32 %v1651, %v1790
    %v1792 = vpop.f32.mrf.mxu0
    %1793 = vdwg.mxu0
    %s1794 = scalar_lea.vmem %s3, 32
    %v1795 = vld [vmem:[%s1794] sm:$0xff]
    %v1796 = vld [vmem:[%s1794 + $0x8] sm:$0x1]
    %v1797 = vrot.slane %v1492, 6
    %v1798 = vsel %vm453, %v454, %v1797
    %v1799 = vrot.slane %v1493, 6
    %v1800 = vsel %vm453, %v1797, %v1799
    %v1801 = vrot.slane %v1494, 6
    %v1802 = vsel %vm453, %v1799, %v1801
    %v1803 = vrot.slane %v1495, 6
    %v1804 = vsel %vm453, %v1801, %v1803
    %v1805 = vrot.slane %v1496, 6
    %v1806 = vsel %vm453, %v1803, %v1805
    %v1807 = vrot.slane %v1497, 6
    %v1808 = vsel %vm453, %v1805, %v1807
    %v1809 = vrot.slane %v1498, 6
    %v1810 = vsel %vm453, %v1807, %v1809
    %v1811 = vrot.slane %v1499, 6
    %v1812 = vsel %vm453, %v1809, %v1811
    %v1813 = vsel %vm1529, %v1798, 0
    %v1815 = vsel %vm1529, %v1800, 0
    %v1817 = vsel %vm1529, %v1802, 0
    %v1819 = vsel %vm1529, %v1804, 0
    %v1821 = vsel %vm1529, %v1806, 0
    %v1823 = vsel %vm1529, %v1808, 0
    %v1825 = vsel %vm1529, %v1810, 0
    %v1827 = vsel %vm1529, %v1812, 0
    %v1830 = vsel %vm606, %v1796, 0
    %1832 = vmatprep.subr.mxu0 0.0
    %1833 = vmatpush1.msra.mxu0 0.0
    %1834 = vmatprep.subr.mxu0 0.0
    %1835 = vmatpush1.msra.mxu0 0.0
    %1836 = vmatprep.subr.mxu0 0.0
    %1837 = vmatpush1.msra.mxu0 0.0
    %1838 = vmatprep.subr.mxu0 0.0
    %1839 = vmatpush1.msra.mxu0 0.0
    %1840 = vmatprep.subr.mxu0 0.0
    %1841 = vmatpush1.msra.mxu0 0.0
    %1842 = vmatprep.subr.mxu0 0.0
    %1843 = vmatpush1.msra.mxu0 0.0
    %1844 = vmatprep.subr.mxu0 0.0
    %1845 = vmatpush1.msra.mxu0 0.0
    %1846 = vmatprep.subr.mxu0 0.0
    %1847 = vmatpush1.msra.mxu0 0.0
    %1848 = vmatprep.subr.mxu0 0.0
    %1849 = vmatpush1.msra.mxu0 0.0
    %1850 = vmatprep.subr.mxu0 0.0
    %1851 = vmatpush1.msra.mxu0 0.0
    %1852 = vmatprep.subr.mxu0 0.0
    %1853 = vmatpush1.msra.mxu0 0.0
    %1854 = vmatprep.subr.mxu0 0.0
    %1855 = vmatpush1.msra.mxu0 0.0
    %1856 = vmatprep.subr.mxu0 0.0
    %1857 = vmatpush1.msra.mxu0 0.0
    %1858 = vmatprep.subr.mxu0 0.0
    %1859 = vmatpush1.msra.mxu0 0.0
    %1860 = vmatprep.subr.mxu0 0.0
    %1861 = vmatpush1.msra.mxu0 %v1830
    %1862 = vmatprep.subr.mxu0 0.0
    %1863 = vmatpush1.msra.mxu0 %v1795
    %1864 = vmatprep.subr.mxu0 0.0
    %1865 = vmatpush2.msra.mxu0 0.0
    %1866 = vmatprep.subr.mxu0 0.0
    %1867 = vmatpush2.msra.mxu0 0.0
    %1868 = vmatprep.subr.mxu0 0.0
    %1869 = vmatpush2.msra.mxu0 0.0
    %1870 = vmatprep.subr.mxu0 0.0
    %1871 = vmatpush2.msra.mxu0 0.0
    %1872 = vmatprep.subr.mxu0 0.0
    %1873 = vmatpush2.msra.mxu0 0.0
    %1874 = vmatprep.subr.mxu0 0.0
    %1875 = vmatpush2.msra.mxu0 0.0
    %1876 = vmatprep.subr.mxu0 0.0
    %1877 = vmatpush2.msra.mxu0 0.0
    %1878 = vmatprep.subr.mxu0 0.0
    %1879 = vmatpush2.msra.mxu0 0.0
    %1880 = vmatprep.subr.mxu0 0.0
    %1881 = vmatpush2.msra.mxu0 0.0
    %1882 = vmatprep.subr.mxu0 0.0
    %1883 = vmatpush2.msra.mxu0 0.0
    %1884 = vmatprep.subr.mxu0 0.0
    %1885 = vmatpush2.msra.mxu0 0.0
    %1886 = vmatprep.subr.mxu0 0.0
    %1887 = vmatpush2.msra.mxu0 0.0
    %1888 = vmatprep.subr.mxu0 0.0
    %1889 = vmatpush2.msra.mxu0 0.0
    %1890 = vmatprep.subr.mxu0 0.0
    %1891 = vmatpush2.msra.mxu0 0.0
    %1892 = vmatprep.subr.mxu0 0.0
    %1893 = vmatpush2.msra.mxu0 0.0
    %1894 = vmatprep.subr.mxu0 0.0
    %1895 = vmatpush2.msra.mxu0 0.0
    %1896 = vmatprep.mubr.f32.mxu0 0.0
    %1897 = vmatmul.mubr.f32.gmra.mxu0 %v1813
    %v1898 = vpop.f32.mrf.mxu0
    %v1899 = vadd.f32 0.0, %v1898
    %v1900 = vpop.f32.mrf.mxu0
    %1901 = vmatprep.mubr.f32.mxu0 0.0
    %1902 = vmatmul.mubr.f32.gmra.mxu0 %v1815
    %v1903 = vpop.f32.mrf.mxu0
    %v1904 = vadd.f32 0.0, %v1903
    %v1905 = vpop.f32.mrf.mxu0
    %1906 = vmatprep.mubr.f32.mxu0 0.0
    %1907 = vmatmul.mubr.f32.gmra.mxu0 %v1817
    %v1908 = vpop.f32.mrf.mxu0
    %v1909 = vadd.f32 0.0, %v1908
    %v1910 = vpop.f32.mrf.mxu0
    %1911 = vmatprep.mubr.f32.mxu0 0.0
    %1912 = vmatmul.mubr.f32.gmra.mxu0 %v1819
    %v1913 = vpop.f32.mrf.mxu0
    %v1914 = vadd.f32 0.0, %v1913
    %v1915 = vpop.f32.mrf.mxu0
    %1916 = vmatprep.mubr.f32.mxu0 0.0
    %1917 = vmatmul.mubr.f32.gmra.mxu0 %v1821
    %v1918 = vpop.f32.mrf.mxu0
    %v1919 = vadd.f32 0.0, %v1918
    %v1920 = vpop.f32.mrf.mxu0
    %1921 = vmatprep.mubr.f32.mxu0 0.0
    %1922 = vmatmul.mubr.f32.gmra.mxu0 %v1823
    %v1923 = vpop.f32.mrf.mxu0
    %v1924 = vadd.f32 0.0, %v1923
    %v1925 = vpop.f32.mrf.mxu0
    %1926 = vmatprep.mubr.f32.mxu0 0.0
    %1927 = vmatmul.mubr.f32.gmra.mxu0 %v1825
    %v1928 = vpop.f32.mrf.mxu0
    %v1929 = vadd.f32 0.0, %v1928
    %v1930 = vpop.f32.mrf.mxu0
    %1931 = vmatprep.mubr.f32.mxu0 0.0
    %1932 = vmatmul.mubr.f32.gmra.mxu0 %v1827
    %v1933 = vpop.f32.mrf.mxu0
    %v1934 = vadd.f32 0.0, %v1933
    %v1935 = vpop.f32.mrf.mxu0
    %1936 = vdwg.mxu0
    %v1937 = vadd.f32 %v1756, %v1899
    %v1938 = vadd.f32 %v1761, %v1904
    %v1939 = vadd.f32 %v1766, %v1909
    %v1940 = vadd.f32 %v1771, %v1914
    %v1941 = vadd.f32 %v1776, %v1919
    %v1942 = vadd.f32 %v1781, %v1924
    %v1943 = vadd.f32 %v1786, %v1929
    %v1944 = vadd.f32 %v1791, %v1934
    %s1945 = scalar_lea.vmem %s3, 48
    %v1946 = vld [vmem:[%s1945] sm:$0xff]
    %v1947 = vld [vmem:[%s1945 + $0x8] sm:$0x1]
    %v1948 = vrot.slane %v1492, 7
    %v1949 = vsel %vm606, %v607, %v1948
    %v1950 = vrot.slane %v1493, 7
    %v1951 = vsel %vm606, %v1948, %v1950
    %v1952 = vrot.slane %v1494, 7
    %v1953 = vsel %vm606, %v1950, %v1952
    %v1954 = vrot.slane %v1495, 7
    %v1955 = vsel %vm606, %v1952, %v1954
    %v1956 = vrot.slane %v1496, 7
    %v1957 = vsel %vm606, %v1954, %v1956
    %v1958 = vrot.slane %v1497, 7
    %v1959 = vsel %vm606, %v1956, %v1958
    %v1960 = vrot.slane %v1498, 7
    %v1961 = vsel %vm606, %v1958, %v1960
    %v1962 = vrot.slane %v1499, 7
    %v1963 = vsel %vm606, %v1960, %v1962
    %v1964 = vsel %vm1529, %v1949, 0
    %v1966 = vsel %vm1529, %v1951, 0
    %v1968 = vsel %vm1529, %v1953, 0
    %v1970 = vsel %vm1529, %v1955, 0
    %v1972 = vsel %vm1529, %v1957, 0
    %v1974 = vsel %vm1529, %v1959, 0
    %v1976 = vsel %vm1529, %v1961, 0
    %v1978 = vsel %vm1529, %v1963, 0
    %v1981 = vsel %vm606, %v1947, 0
    %1983 = vmatprep.subr.mxu0 0.0
    %1984 = vmatpush1.msra.mxu0 0.0
    %1985 = vmatprep.subr.mxu0 0.0
    %1986 = vmatpush1.msra.mxu0 0.0
    %1987 = vmatprep.subr.mxu0 0.0
    %1988 = vmatpush1.msra.mxu0 0.0
    %1989 = vmatprep.subr.mxu0 0.0
    %1990 = vmatpush1.msra.mxu0 0.0
    %1991 = vmatprep.subr.mxu0 0.0
    %1992 = vmatpush1.msra.mxu0 0.0
    %1993 = vmatprep.subr.mxu0 0.0
    %1994 = vmatpush1.msra.mxu0 0.0
    %1995 = vmatprep.subr.mxu0 0.0
    %1996 = vmatpush1.msra.mxu0 0.0
    %1997 = vmatprep.subr.mxu0 0.0
    %1998 = vmatpush1.msra.mxu0 0.0
    %1999 = vmatprep.subr.mxu0 0.0
    %2000 = vmatpush1.msra.mxu0 0.0
    %2001 = vmatprep.subr.mxu0 0.0
    %2002 = vmatpush1.msra.mxu0 0.0
    %2003 = vmatprep.subr.mxu0 0.0
    %2004 = vmatpush1.msra.mxu0 0.0
    %2005 = vmatprep.subr.mxu0 0.0
    %2006 = vmatpush1.msra.mxu0 0.0
    %2007 = vmatprep.subr.mxu0 0.0
    %2008 = vmatpush1.msra.mxu0 0.0
    %2009 = vmatprep.subr.mxu0 0.0
    %2010 = vmatpush1.msra.mxu0 0.0
    %2011 = vmatprep.subr.mxu0 0.0
    %2012 = vmatpush1.msra.mxu0 %v1981
    %2013 = vmatprep.subr.mxu0 0.0
    %2014 = vmatpush1.msra.mxu0 %v1946
    %2015 = vmatprep.subr.mxu0 0.0
    %2016 = vmatpush2.msra.mxu0 0.0
    %2017 = vmatprep.subr.mxu0 0.0
    %2018 = vmatpush2.msra.mxu0 0.0
    %2019 = vmatprep.subr.mxu0 0.0
    %2020 = vmatpush2.msra.mxu0 0.0
    %2021 = vmatprep.subr.mxu0 0.0
    %2022 = vmatpush2.msra.mxu0 0.0
    %2023 = vmatprep.subr.mxu0 0.0
    %2024 = vmatpush2.msra.mxu0 0.0
    %2025 = vmatprep.subr.mxu0 0.0
    %2026 = vmatpush2.msra.mxu0 0.0
    %2027 = vmatprep.subr.mxu0 0.0
    %2028 = vmatpush2.msra.mxu0 0.0
    %2029 = vmatprep.subr.mxu0 0.0
    %2030 = vmatpush2.msra.mxu0 0.0
    %2031 = vmatprep.subr.mxu0 0.0
    %2032 = vmatpush2.msra.mxu0 0.0
    %2033 = vmatprep.subr.mxu0 0.0
    %2034 = vmatpush2.msra.mxu0 0.0
    %2035 = vmatprep.subr.mxu0 0.0
    %2036 = vmatpush2.msra.mxu0 0.0
    %2037 = vmatprep.subr.mxu0 0.0
    %2038 = vmatpush2.msra.mxu0 0.0
    %2039 = vmatprep.subr.mxu0 0.0
    %2040 = vmatpush2.msra.mxu0 0.0
    %2041 = vmatprep.subr.mxu0 0.0
    %2042 = vmatpush2.msra.mxu0 0.0
    %2043 = vmatprep.subr.mxu0 0.0
    %2044 = vmatpush2.msra.mxu0 0.0
    %2045 = vmatprep.subr.mxu0 0.0
    %2046 = vmatpush2.msra.mxu0 0.0
    %2047 = vmatprep.mubr.f32.mxu0 0.0
    %2048 = vmatmul.mubr.f32.gmra.mxu0 %v1964
    %v2049 = vpop.f32.mrf.mxu0
    %v2050 = vadd.f32 0.0, %v2049
    %v2051 = vpop.f32.mrf.mxu0
    %2052 = vmatprep.mubr.f32.mxu0 0.0
    %2053 = vmatmul.mubr.f32.gmra.mxu0 %v1966
    %v2054 = vpop.f32.mrf.mxu0
    %v2055 = vadd.f32 0.0, %v2054
    %v2056 = vpop.f32.mrf.mxu0
    %2057 = vmatprep.mubr.f32.mxu0 0.0
    %2058 = vmatmul.mubr.f32.gmra.mxu0 %v1968
    %v2059 = vpop.f32.mrf.mxu0
    %v2060 = vadd.f32 0.0, %v2059
    %v2061 = vpop.f32.mrf.mxu0
    %2062 = vmatprep.mubr.f32.mxu0 0.0
    %2063 = vmatmul.mubr.f32.gmra.mxu0 %v1970
    %v2064 = vpop.f32.mrf.mxu0
    %v2065 = vadd.f32 0.0, %v2064
    %v2066 = vpop.f32.mrf.mxu0
    %2067 = vmatprep.mubr.f32.mxu0 0.0
    %2068 = vmatmul.mubr.f32.gmra.mxu0 %v1972
    %v2069 = vpop.f32.mrf.mxu0
    %v2070 = vadd.f32 0.0, %v2069
    %v2071 = vpop.f32.mrf.mxu0
    %2072 = vmatprep.mubr.f32.mxu0 0.0
    %2073 = vmatmul.mubr.f32.gmra.mxu0 %v1974
    %v2074 = vpop.f32.mrf.mxu0
    %v2075 = vadd.f32 0.0, %v2074
    %v2076 = vpop.f32.mrf.mxu0
    %2077 = vmatprep.mubr.f32.mxu0 0.0
    %2078 = vmatmul.mubr.f32.gmra.mxu0 %v1976
    %v2079 = vpop.f32.mrf.mxu0
    %v2080 = vadd.f32 0.0, %v2079
    %v2081 = vpop.f32.mrf.mxu0
    %2082 = vmatprep.mubr.f32.mxu0 0.0
    %2083 = vmatmul.mubr.f32.gmra.mxu0 %v1978
    %v2084 = vpop.f32.mrf.mxu0
    %v2085 = vadd.f32 0.0, %v2084
    %v2086 = vpop.f32.mrf.mxu0
    %2087 = vdwg.mxu0
    %v2088 = vadd.f32 %v1937, %v2050
    %v2089 = vadd.f32 %v1938, %v2055
    %v2090 = vadd.f32 %v1939, %v2060
    %v2091 = vadd.f32 %v1940, %v2065
    %v2092 = vadd.f32 %v1941, %v2070
    %v2093 = vadd.f32 %v1942, %v2075
    %v2094 = vadd.f32 %v1943, %v2080
    %v2095 = vadd.f32 %v1944, %v2085
    %s2096 = scalar_lea.vmem %s3, 64
    %v2097 = vld [vmem:[%s2096] sm:$0xff]
    %v2098 = vld [vmem:[%s2096 + $0x8] sm:$0x1]
    %v2099 = vsel %vm1529, %v1492, 0
    %v2101 = vsel %vm1529, %v1493, 0
    %v2103 = vsel %vm1529, %v1494, 0
    %v2105 = vsel %vm1529, %v1495, 0
    %v2107 = vsel %vm1529, %v1496, 0
    %v2109 = vsel %vm1529, %v1497, 0
    %v2111 = vsel %vm1529, %v1498, 0
    %v2113 = vsel %vm1529, %v1499, 0
    %v2116 = vsel %vm606, %v2098, 0
    %2118 = vmatprep.subr.mxu0 0.0
    %2119 = vmatpush1.msra.mxu0 0.0
    %2120 = vmatprep.subr.mxu0 0.0
    %2121 = vmatpush1.msra.mxu0 0.0
    %2122 = vmatprep.subr.mxu0 0.0
    %2123 = vmatpush1.msra.mxu0 0.0
    %2124 = vmatprep.subr.mxu0 0.0
    %2125 = vmatpush1.msra.mxu0 0.0
    %2126 = vmatprep.subr.mxu0 0.0
    %2127 = vmatpush1.msra.mxu0 0.0
    %2128 = vmatprep.subr.mxu0 0.0
    %2129 = vmatpush1.msra.mxu0 0.0
    %2130 = vmatprep.subr.mxu0 0.0
    %2131 = vmatpush1.msra.mxu0 0.0
    %2132 = vmatprep.subr.mxu0 0.0
    %2133 = vmatpush1.msra.mxu0 0.0
    %2134 = vmatprep.subr.mxu0 0.0
    %2135 = vmatpush1.msra.mxu0 0.0
    %2136 = vmatprep.subr.mxu0 0.0
    %2137 = vmatpush1.msra.mxu0 0.0
    %2138 = vmatprep.subr.mxu0 0.0
    %2139 = vmatpush1.msra.mxu0 0.0
    %2140 = vmatprep.subr.mxu0 0.0
    %2141 = vmatpush1.msra.mxu0 0.0
    %2142 = vmatprep.subr.mxu0 0.0
    %2143 = vmatpush1.msra.mxu0 0.0
    %2144 = vmatprep.subr.mxu0 0.0
    %2145 = vmatpush1.msra.mxu0 0.0
    %2146 = vmatprep.subr.mxu0 0.0
    %2147 = vmatpush1.msra.mxu0 %v2116
    %2148 = vmatprep.subr.mxu0 0.0
    %2149 = vmatpush1.msra.mxu0 %v2097
    %2150 = vmatprep.subr.mxu0 0.0
    %2151 = vmatpush2.msra.mxu0 0.0
    %2152 = vmatprep.subr.mxu0 0.0
    %2153 = vmatpush2.msra.mxu0 0.0
    %2154 = vmatprep.subr.mxu0 0.0
    %2155 = vmatpush2.msra.mxu0 0.0
    %2156 = vmatprep.subr.mxu0 0.0
    %2157 = vmatpush2.msra.mxu0 0.0
    %2158 = vmatprep.subr.mxu0 0.0
    %2159 = vmatpush2.msra.mxu0 0.0
    %2160 = vmatprep.subr.mxu0 0.0
    %2161 = vmatpush2.msra.mxu0 0.0
    %2162 = vmatprep.subr.mxu0 0.0
    %2163 = vmatpush2.msra.mxu0 0.0
    %2164 = vmatprep.subr.mxu0 0.0
    %2165 = vmatpush2.msra.mxu0 0.0
    %2166 = vmatprep.subr.mxu0 0.0
    %2167 = vmatpush2.msra.mxu0 0.0
    %2168 = vmatprep.subr.mxu0 0.0
    %2169 = vmatpush2.msra.mxu0 0.0
    %2170 = vmatprep.subr.mxu0 0.0
    %2171 = vmatpush2.msra.mxu0 0.0
    %2172 = vmatprep.subr.mxu0 0.0
    %2173 = vmatpush2.msra.mxu0 0.0
    %2174 = vmatprep.subr.mxu0 0.0
    %2175 = vmatpush2.msra.mxu0 0.0
    %2176 = vmatprep.subr.mxu0 0.0
    %2177 = vmatpush2.msra.mxu0 0.0
    %2178 = vmatprep.subr.mxu0 0.0
    %2179 = vmatpush2.msra.mxu0 0.0
    %2180 = vmatprep.subr.mxu0 0.0
    %2181 = vmatpush2.msra.mxu0 0.0
    %2182 = vmatprep.mubr.f32.mxu0 0.0
    %2183 = vmatmul.mubr.f32.gmra.mxu0 %v2099
    %v2184 = vpop.f32.mrf.mxu0
    %v2185 = vadd.f32 0.0, %v2184
    %v2186 = vpop.f32.mrf.mxu0
    %2187 = vmatprep.mubr.f32.mxu0 0.0
    %2188 = vmatmul.mubr.f32.gmra.mxu0 %v2101
    %v2189 = vpop.f32.mrf.mxu0
    %v2190 = vadd.f32 0.0, %v2189
    %v2191 = vpop.f32.mrf.mxu0
    %2192 = vmatprep.mubr.f32.mxu0 0.0
    %2193 = vmatmul.mubr.f32.gmra.mxu0 %v2103
    %v2194 = vpop.f32.mrf.mxu0
    %v2195 = vadd.f32 0.0, %v2194
    %v2196 = vpop.f32.mrf.mxu0
    %2197 = vmatprep.mubr.f32.mxu0 0.0
    %2198 = vmatmul.mubr.f32.gmra.mxu0 %v2105
    %v2199 = vpop.f32.mrf.mxu0
    %v2200 = vadd.f32 0.0, %v2199
    %v2201 = vpop.f32.mrf.mxu0
    %2202 = vmatprep.mubr.f32.mxu0 0.0
    %2203 = vmatmul.mubr.f32.gmra.mxu0 %v2107
    %v2204 = vpop.f32.mrf.mxu0
    %v2205 = vadd.f32 0.0, %v2204
    %v2206 = vpop.f32.mrf.mxu0
    %2207 = vmatprep.mubr.f32.mxu0 0.0
    %2208 = vmatmul.mubr.f32.gmra.mxu0 %v2109
    %v2209 = vpop.f32.mrf.mxu0
    %v2210 = vadd.f32 0.0, %v2209
    %v2211 = vpop.f32.mrf.mxu0
    %2212 = vmatprep.mubr.f32.mxu0 0.0
    %2213 = vmatmul.mubr.f32.gmra.mxu0 %v2111
    %v2214 = vpop.f32.mrf.mxu0
    %v2215 = vadd.f32 0.0, %v2214
    %v2216 = vpop.f32.mrf.mxu0
    %2217 = vmatprep.mubr.f32.mxu0 0.0
    %2218 = vmatmul.mubr.f32.gmra.mxu0 %v2113
    %v2219 = vpop.f32.mrf.mxu0
    %v2220 = vadd.f32 0.0, %v2219
    %v2221 = vpop.f32.mrf.mxu0
    %2222 = vdwg.mxu0
    %v2223 = vadd.f32 %v2088, %v2185
    %v2224 = vadd.f32 %v2089, %v2190
    %v2225 = vadd.f32 %v2090, %v2195
    %v2226 = vadd.f32 %v2091, %v2200
    %v2227 = vadd.f32 %v2092, %v2205
    %v2228 = vadd.f32 %v2093, %v2210
    %v2229 = vadd.f32 %v2094, %v2215
    %v2230 = vadd.f32 %v2095, %v2220
    %s2231 = scalar_lea.vmem %s3, 80
    %v2232 = vld [vmem:[%s2231] sm:$0xff]
    %v2233 = vld [vmem:[%s2231 + $0x8] sm:$0x1]
    %v2234 = vrot.slane %v1492, 1
    %v2235 = vrot.slane %v1493, 1
    %v2236 = vsel %vm894, %v2234, %v2235
    %v2237 = vrot.slane %v1494, 1
    %v2238 = vsel %vm894, %v2235, %v2237
    %v2239 = vrot.slane %v1495, 1
    %v2240 = vsel %vm894, %v2237, %v2239
    %v2241 = vrot.slane %v1496, 1
    %v2242 = vsel %vm894, %v2239, %v2241
    %v2243 = vrot.slane %v1497, 1
    %v2244 = vsel %vm894, %v2241, %v2243
    %v2245 = vrot.slane %v1498, 1
    %v2246 = vsel %vm894, %v2243, %v2245
    %v2247 = vrot.slane %v1499, 1
    %v2248 = vsel %vm894, %v2245, %v2247
    %v2249 = vsel %vm894, %v2247, %v910
    %v2250 = vsel %vm1529, %v2236, 0
    %v2252 = vsel %vm1529, %v2238, 0
    %v2254 = vsel %vm1529, %v2240, 0
    %v2256 = vsel %vm1529, %v2242, 0
    %v2258 = vsel %vm1529, %v2244, 0
    %v2260 = vsel %vm1529, %v2246, 0
    %v2262 = vsel %vm1529, %v2248, 0
    %v2264 = vsel %vm1529, %v2249, 0
    %v2267 = vsel %vm606, %v2233, 0
    %2269 = vmatprep.subr.mxu0 0.0
    %2270 = vmatpush1.msra.mxu0 0.0
    %2271 = vmatprep.subr.mxu0 0.0
    %2272 = vmatpush1.msra.mxu0 0.0
    %2273 = vmatprep.subr.mxu0 0.0
    %2274 = vmatpush1.msra.mxu0 0.0
    %2275 = vmatprep.subr.mxu0 0.0
    %2276 = vmatpush1.msra.mxu0 0.0
    %2277 = vmatprep.subr.mxu0 0.0
    %2278 = vmatpush1.msra.mxu0 0.0
    %2279 = vmatprep.subr.mxu0 0.0
    %2280 = vmatpush1.msra.mxu0 0.0
    %2281 = vmatprep.subr.mxu0 0.0
    %2282 = vmatpush1.msra.mxu0 0.0
    %2283 = vmatprep.subr.mxu0 0.0
    %2284 = vmatpush1.msra.mxu0 0.0
    %2285 = vmatprep.subr.mxu0 0.0
    %2286 = vmatpush1.msra.mxu0 0.0
    %2287 = vmatprep.subr.mxu0 0.0
    %2288 = vmatpush1.msra.mxu0 0.0
    %2289 = vmatprep.subr.mxu0 0.0
    %2290 = vmatpush1.msra.mxu0 0.0
    %2291 = vmatprep.subr.mxu0 0.0
    %2292 = vmatpush1.msra.mxu0 0.0
    %2293 = vmatprep.subr.mxu0 0.0
    %2294 = vmatpush1.msra.mxu0 0.0
    %2295 = vmatprep.subr.mxu0 0.0
    %2296 = vmatpush1.msra.mxu0 0.0
    %2297 = vmatprep.subr.mxu0 0.0
    %2298 = vmatpush1.msra.mxu0 %v2267
    %2299 = vmatprep.subr.mxu0 0.0
    %2300 = vmatpush1.msra.mxu0 %v2232
    %2301 = vmatprep.subr.mxu0 0.0
    %2302 = vmatpush2.msra.mxu0 0.0
    %2303 = vmatprep.subr.mxu0 0.0
    %2304 = vmatpush2.msra.mxu0 0.0
    %2305 = vmatprep.subr.mxu0 0.0
    %2306 = vmatpush2.msra.mxu0 0.0
    %2307 = vmatprep.subr.mxu0 0.0
    %2308 = vmatpush2.msra.mxu0 0.0
    %2309 = vmatprep.subr.mxu0 0.0
    %2310 = vmatpush2.msra.mxu0 0.0
    %2311 = vmatprep.subr.mxu0 0.0
    %2312 = vmatpush2.msra.mxu0 0.0
    %2313 = vmatprep.subr.mxu0 0.0
    %2314 = vmatpush2.msra.mxu0 0.0
    %2315 = vmatprep.subr.mxu0 0.0
    %2316 = vmatpush2.msra.mxu0 0.0
    %2317 = vmatprep.subr.mxu0 0.0
    %2318 = vmatpush2.msra.mxu0 0.0
    %2319 = vmatprep.subr.mxu0 0.0
    %2320 = vmatpush2.msra.mxu0 0.0
    %2321 = vmatprep.subr.mxu0 0.0
    %2322 = vmatpush2.msra.mxu0 0.0
    %2323 = vmatprep.subr.mxu0 0.0
    %2324 = vmatpush2.msra.mxu0 0.0
    %2325 = vmatprep.subr.mxu0 0.0
    %2326 = vmatpush2.msra.mxu0 0.0
    %2327 = vmatprep.subr.mxu0 0.0
    %2328 = vmatpush2.msra.mxu0 0.0
    %2329 = vmatprep.subr.mxu0 0.0
    %2330 = vmatpush2.msra.mxu0 0.0
    %2331 = vmatprep.subr.mxu0 0.0
    %2332 = vmatpush2.msra.mxu0 0.0
    %2333 = vmatprep.mubr.f32.mxu0 0.0
    %2334 = vmatmul.mubr.f32.gmra.mxu0 %v2250
    %v2335 = vpop.f32.mrf.mxu0
    %v2336 = vadd.f32 0.0, %v2335
    %v2337 = vpop.f32.mrf.mxu0
    %2338 = vmatprep.mubr.f32.mxu0 0.0
    %2339 = vmatmul.mubr.f32.gmra.mxu0 %v2252
    %v2340 = vpop.f32.mrf.mxu0
    %v2341 = vadd.f32 0.0, %v2340
    %v2342 = vpop.f32.mrf.mxu0
    %2343 = vmatprep.mubr.f32.mxu0 0.0
    %2344 = vmatmul.mubr.f32.gmra.mxu0 %v2254
    %v2345 = vpop.f32.mrf.mxu0
    %v2346 = vadd.f32 0.0, %v2345
    %v2347 = vpop.f32.mrf.mxu0
    %2348 = vmatprep.mubr.f32.mxu0 0.0
    %2349 = vmatmul.mubr.f32.gmra.mxu0 %v2256
    %v2350 = vpop.f32.mrf.mxu0
    %v2351 = vadd.f32 0.0, %v2350
    %v2352 = vpop.f32.mrf.mxu0
    %2353 = vmatprep.mubr.f32.mxu0 0.0
    %2354 = vmatmul.mubr.f32.gmra.mxu0 %v2258
    %v2355 = vpop.f32.mrf.mxu0
    %v2356 = vadd.f32 0.0, %v2355
    %v2357 = vpop.f32.mrf.mxu0
    %2358 = vmatprep.mubr.f32.mxu0 0.0
    %2359 = vmatmul.mubr.f32.gmra.mxu0 %v2260
    %v2360 = vpop.f32.mrf.mxu0
    %v2361 = vadd.f32 0.0, %v2360
    %v2362 = vpop.f32.mrf.mxu0
    %2363 = vmatprep.mubr.f32.mxu0 0.0
    %2364 = vmatmul.mubr.f32.gmra.mxu0 %v2262
    %v2365 = vpop.f32.mrf.mxu0
    %v2366 = vadd.f32 0.0, %v2365
    %v2367 = vpop.f32.mrf.mxu0
    %2368 = vmatprep.mubr.f32.mxu0 0.0
    %2369 = vmatmul.mubr.f32.gmra.mxu0 %v2264
    %v2370 = vpop.f32.mrf.mxu0
    %v2371 = vadd.f32 0.0, %v2370
    %v2372 = vpop.f32.mrf.mxu0
    %2373 = vdwg.mxu0
    %v2374 = vadd.f32 %v2223, %v2336
    %v2375 = vadd.f32 %v2224, %v2341
    %v2376 = vadd.f32 %v2225, %v2346
    %v2377 = vadd.f32 %v2226, %v2351
    %v2378 = vadd.f32 %v2227, %v2356
    %v2379 = vadd.f32 %v2228, %v2361
    %v2380 = vadd.f32 %v2229, %v2366
    %v2381 = vadd.f32 %v2230, %v2371
    %s2382 = scalar_lea.vmem %s3, 96
    %v2383 = vld [vmem:[%s2382] sm:$0xff]
    %v2384 = vld [vmem:[%s2382 + $0x8] sm:$0x1]
    %v2385 = vrot.slane %v1492, 2
    %v2386 = vrot.slane %v1493, 2
    %v2387 = vsel %vm1047, %v2385, %v2386
    %v2388 = vrot.slane %v1494, 2
    %v2389 = vsel %vm1047, %v2386, %v2388
    %v2390 = vrot.slane %v1495, 2
    %v2391 = vsel %vm1047, %v2388, %v2390
    %v2392 = vrot.slane %v1496, 2
    %v2393 = vsel %vm1047, %v2390, %v2392
    %v2394 = vrot.slane %v1497, 2
    %v2395 = vsel %vm1047, %v2392, %v2394
    %v2396 = vrot.slane %v1498, 2
    %v2397 = vsel %vm1047, %v2394, %v2396
    %v2398 = vrot.slane %v1499, 2
    %v2399 = vsel %vm1047, %v2396, %v2398
    %v2400 = vsel %vm1047, %v2398, %v1063
    %v2401 = vsel %vm1529, %v2387, 0
    %v2403 = vsel %vm1529, %v2389, 0
    %v2405 = vsel %vm1529, %v2391, 0
    %v2407 = vsel %vm1529, %v2393, 0
    %v2409 = vsel %vm1529, %v2395, 0
    %v2411 = vsel %vm1529, %v2397, 0
    %v2413 = vsel %vm1529, %v2399, 0
    %v2415 = vsel %vm1529, %v2400, 0
    %v2418 = vsel %vm606, %v2384, 0
    %2420 = vmatprep.subr.mxu0 0.0
    %2421 = vmatpush1.msra.mxu0 0.0
    %2422 = vmatprep.subr.mxu0 0.0
    %2423 = vmatpush1.msra.mxu0 0.0
    %2424 = vmatprep.subr.mxu0 0.0
    %2425 = vmatpush1.msra.mxu0 0.0
    %2426 = vmatprep.subr.mxu0 0.0
    %2427 = vmatpush1.msra.mxu0 0.0
    %2428 = vmatprep.subr.mxu0 0.0
    %2429 = vmatpush1.msra.mxu0 0.0
    %2430 = vmatprep.subr.mxu0 0.0
    %2431 = vmatpush1.msra.mxu0 0.0
    %2432 = vmatprep.subr.mxu0 0.0
    %2433 = vmatpush1.msra.mxu0 0.0
    %2434 = vmatprep.subr.mxu0 0.0
    %2435 = vmatpush1.msra.mxu0 0.0
    %2436 = vmatprep.subr.mxu0 0.0
    %2437 = vmatpush1.msra.mxu0 0.0
    %2438 = vmatprep.subr.mxu0 0.0
    %2439 = vmatpush1.msra.mxu0 0.0
    %2440 = vmatprep.subr.mxu0 0.0
    %2441 = vmatpush1.msra.mxu0 0.0
    %2442 = vmatprep.subr.mxu0 0.0
    %2443 = vmatpush1.msra.mxu0 0.0
    %2444 = vmatprep.subr.mxu0 0.0
    %2445 = vmatpush1.msra.mxu0 0.0
    %2446 = vmatprep.subr.mxu0 0.0
    %2447 = vmatpush1.msra.mxu0 0.0
    %2448 = vmatprep.subr.mxu0 0.0
    %2449 = vmatpush1.msra.mxu0 %v2418
    %2450 = vmatprep.subr.mxu0 0.0
    %2451 = vmatpush1.msra.mxu0 %v2383
    %2452 = vmatprep.subr.mxu0 0.0
    %2453 = vmatpush2.msra.mxu0 0.0
    %2454 = vmatprep.subr.mxu0 0.0
    %2455 = vmatpush2.msra.mxu0 0.0
    %2456 = vmatprep.subr.mxu0 0.0
    %2457 = vmatpush2.msra.mxu0 0.0
    %2458 = vmatprep.subr.mxu0 0.0
    %2459 = vmatpush2.msra.mxu0 0.0
    %2460 = vmatprep.subr.mxu0 0.0
    %2461 = vmatpush2.msra.mxu0 0.0
    %2462 = vmatprep.subr.mxu0 0.0
    %2463 = vmatpush2.msra.mxu0 0.0
    %2464 = vmatprep.subr.mxu0 0.0
    %2465 = vmatpush2.msra.mxu0 0.0
    %2466 = vmatprep.subr.mxu0 0.0
    %2467 = vmatpush2.msra.mxu0 0.0
    %2468 = vmatprep.subr.mxu0 0.0
    %2469 = vmatpush2.msra.mxu0 0.0
    %2470 = vmatprep.subr.mxu0 0.0
    %2471 = vmatpush2.msra.mxu0 0.0
    %2472 = vmatprep.subr.mxu0 0.0
    %2473 = vmatpush2.msra.mxu0 0.0
    %2474 = vmatprep.subr.mxu0 0.0
    %2475 = vmatpush2.msra.mxu0 0.0
    %2476 = vmatprep.subr.mxu0 0.0
    %2477 = vmatpush2.msra.mxu0 0.0
    %2478 = vmatprep.subr.mxu0 0.0
    %2479 = vmatpush2.msra.mxu0 0.0
    %2480 = vmatprep.subr.mxu0 0.0
    %2481 = vmatpush2.msra.mxu0 0.0
    %2482 = vmatprep.subr.mxu0 0.0
    %2483 = vmatpush2.msra.mxu0 0.0
    %2484 = vmatprep.mubr.f32.mxu0 0.0
    %2485 = vmatmul.mubr.f32.gmra.mxu0 %v2401
    %v2486 = vpop.f32.mrf.mxu0
    %v2487 = vadd.f32 0.0, %v2486
    %v2488 = vpop.f32.mrf.mxu0
    %2489 = vmatprep.mubr.f32.mxu0 0.0
    %2490 = vmatmul.mubr.f32.gmra.mxu0 %v2403
    %v2491 = vpop.f32.mrf.mxu0
    %v2492 = vadd.f32 0.0, %v2491
    %v2493 = vpop.f32.mrf.mxu0
    %2494 = vmatprep.mubr.f32.mxu0 0.0
    %2495 = vmatmul.mubr.f32.gmra.mxu0 %v2405
    %v2496 = vpop.f32.mrf.mxu0
    %v2497 = vadd.f32 0.0, %v2496
    %v2498 = vpop.f32.mrf.mxu0
    %2499 = vmatprep.mubr.f32.mxu0 0.0
    %2500 = vmatmul.mubr.f32.gmra.mxu0 %v2407
    %v2501 = vpop.f32.mrf.mxu0
    %v2502 = vadd.f32 0.0, %v2501
    %v2503 = vpop.f32.mrf.mxu0
    %2504 = vmatprep.mubr.f32.mxu0 0.0
    %2505 = vmatmul.mubr.f32.gmra.mxu0 %v2409
    %v2506 = vpop.f32.mrf.mxu0
    %v2507 = vadd.f32 0.0, %v2506
    %v2508 = vpop.f32.mrf.mxu0
    %2509 = vmatprep.mubr.f32.mxu0 0.0
    %2510 = vmatmul.mubr.f32.gmra.mxu0 %v2411
    %v2511 = vpop.f32.mrf.mxu0
    %v2512 = vadd.f32 0.0, %v2511
    %v2513 = vpop.f32.mrf.mxu0
    %2514 = vmatprep.mubr.f32.mxu0 0.0
    %2515 = vmatmul.mubr.f32.gmra.mxu0 %v2413
    %v2516 = vpop.f32.mrf.mxu0
    %v2517 = vadd.f32 0.0, %v2516
    %v2518 = vpop.f32.mrf.mxu0
    %2519 = vmatprep.mubr.f32.mxu0 0.0
    %2520 = vmatmul.mubr.f32.gmra.mxu0 %v2415
    %v2521 = vpop.f32.mrf.mxu0
    %v2522 = vadd.f32 0.0, %v2521
    %v2523 = vpop.f32.mrf.mxu0
    %2524 = vdwg.mxu0
    %v2525 = vadd.f32 %v2374, %v2487
    %v2526 = vadd.f32 %v2375, %v2492
    %v2527 = vadd.f32 %v2376, %v2497
    %v2528 = vadd.f32 %v2377, %v2502
    %v2529 = vadd.f32 %v2378, %v2507
    %v2530 = vadd.f32 %v2379, %v2512
    %v2531 = vadd.f32 %v2380, %v2517
    %v2532 = vadd.f32 %v2381, %v2522
    %s2533 = scalar_lea.vmem %s3, 112
    %v2534 = vld [vmem:[%s2533] sm:$0xff]
    %v2535 = vld [vmem:[%s2533 + $0x8] sm:$0x1]
    %v2536 = vrot.slane %v1492, 3
    %v2537 = vrot.slane %v1493, 3
    %v2538 = vsel %vm1200, %v2536, %v2537
    %v2539 = vrot.slane %v1494, 3
    %v2540 = vsel %vm1200, %v2537, %v2539
    %v2541 = vrot.slane %v1495, 3
    %v2542 = vsel %vm1200, %v2539, %v2541
    %v2543 = vrot.slane %v1496, 3
    %v2544 = vsel %vm1200, %v2541, %v2543
    %v2545 = vrot.slane %v1497, 3
    %v2546 = vsel %vm1200, %v2543, %v2545
    %v2547 = vrot.slane %v1498, 3
    %v2548 = vsel %vm1200, %v2545, %v2547
    %v2549 = vrot.slane %v1499, 3
    %v2550 = vsel %vm1200, %v2547, %v2549
    %v2551 = vsel %vm1200, %v2549, %v1216
    %v2552 = vsel %vm1529, %v2538, 0
    %v2554 = vsel %vm1529, %v2540, 0
    %v2556 = vsel %vm1529, %v2542, 0
    %v2558 = vsel %vm1529, %v2544, 0
    %v2560 = vsel %vm1529, %v2546, 0
    %v2562 = vsel %vm1529, %v2548, 0
    %v2564 = vsel %vm1529, %v2550, 0
    %v2566 = vsel %vm1529, %v2551, 0
    %v2569 = vsel %vm606, %v2535, 0
    %2571 = vmatprep.subr.mxu0 0.0
    %2572 = vmatpush1.msra.mxu0 0.0
    %2573 = vmatprep.subr.mxu0 0.0
    %2574 = vmatpush1.msra.mxu0 0.0
    %2575 = vmatprep.subr.mxu0 0.0
    %2576 = vmatpush1.msra.mxu0 0.0
    %2577 = vmatprep.subr.mxu0 0.0
    %2578 = vmatpush1.msra.mxu0 0.0
    %2579 = vmatprep.subr.mxu0 0.0
    %2580 = vmatpush1.msra.mxu0 0.0
    %2581 = vmatprep.subr.mxu0 0.0
    %2582 = vmatpush1.msra.mxu0 0.0
    %2583 = vmatprep.subr.mxu0 0.0
    %2584 = vmatpush1.msra.mxu0 0.0
    %2585 = vmatprep.subr.mxu0 0.0
    %2586 = vmatpush1.msra.mxu0 0.0
    %2587 = vmatprep.subr.mxu0 0.0
    %2588 = vmatpush1.msra.mxu0 0.0
    %2589 = vmatprep.subr.mxu0 0.0
    %2590 = vmatpush1.msra.mxu0 0.0
    %2591 = vmatprep.subr.mxu0 0.0
    %2592 = vmatpush1.msra.mxu0 0.0
    %2593 = vmatprep.subr.mxu0 0.0
    %2594 = vmatpush1.msra.mxu0 0.0
    %2595 = vmatprep.subr.mxu0 0.0
    %2596 = vmatpush1.msra.mxu0 0.0
    %2597 = vmatprep.subr.mxu0 0.0
    %2598 = vmatpush1.msra.mxu0 0.0
    %2599 = vmatprep.subr.mxu0 0.0
    %2600 = vmatpush1.msra.mxu0 %v2569
    %2601 = vmatprep.subr.mxu0 0.0
    %2602 = vmatpush1.msra.mxu0 %v2534
    %2603 = vmatprep.subr.mxu0 0.0
    %2604 = vmatpush2.msra.mxu0 0.0
    %2605 = vmatprep.subr.mxu0 0.0
    %2606 = vmatpush2.msra.mxu0 0.0
    %2607 = vmatprep.subr.mxu0 0.0
    %2608 = vmatpush2.msra.mxu0 0.0
    %2609 = vmatprep.subr.mxu0 0.0
    %2610 = vmatpush2.msra.mxu0 0.0
    %2611 = vmatprep.subr.mxu0 0.0
    %2612 = vmatpush2.msra.mxu0 0.0
    %2613 = vmatprep.subr.mxu0 0.0
    %2614 = vmatpush2.msra.mxu0 0.0
    %2615 = vmatprep.subr.mxu0 0.0
    %2616 = vmatpush2.msra.mxu0 0.0
    %2617 = vmatprep.subr.mxu0 0.0
    %2618 = vmatpush2.msra.mxu0 0.0
    %2619 = vmatprep.subr.mxu0 0.0
    %2620 = vmatpush2.msra.mxu0 0.0
    %2621 = vmatprep.subr.mxu0 0.0
    %2622 = vmatpush2.msra.mxu0 0.0
    %2623 = vmatprep.subr.mxu0 0.0
    %2624 = vmatpush2.msra.mxu0 0.0
    %2625 = vmatprep.subr.mxu0 0.0
    %2626 = vmatpush2.msra.mxu0 0.0
    %2627 = vmatprep.subr.mxu0 0.0
    %2628 = vmatpush2.msra.mxu0 0.0
    %2629 = vmatprep.subr.mxu0 0.0
    %2630 = vmatpush2.msra.mxu0 0.0
    %2631 = vmatprep.subr.mxu0 0.0
    %2632 = vmatpush2.msra.mxu0 0.0
    %2633 = vmatprep.subr.mxu0 0.0
    %2634 = vmatpush2.msra.mxu0 0.0
    %2635 = vmatprep.mubr.f32.mxu0 0.0
    %2636 = vmatmul.mubr.f32.gmra.mxu0 %v2552
    %v2637 = vpop.f32.mrf.mxu0
    %v2638 = vadd.f32 0.0, %v2637
    %v2639 = vpop.f32.mrf.mxu0
    %2640 = vmatprep.mubr.f32.mxu0 0.0
    %2641 = vmatmul.mubr.f32.gmra.mxu0 %v2554
    %v2642 = vpop.f32.mrf.mxu0
    %v2643 = vadd.f32 0.0, %v2642
    %v2644 = vpop.f32.mrf.mxu0
    %2645 = vmatprep.mubr.f32.mxu0 0.0
    %2646 = vmatmul.mubr.f32.gmra.mxu0 %v2556
    %v2647 = vpop.f32.mrf.mxu0
    %v2648 = vadd.f32 0.0, %v2647
    %v2649 = vpop.f32.mrf.mxu0
    %2650 = vmatprep.mubr.f32.mxu0 0.0
    %2651 = vmatmul.mubr.f32.gmra.mxu0 %v2558
    %v2652 = vpop.f32.mrf.mxu0
    %v2653 = vadd.f32 0.0, %v2652
    %v2654 = vpop.f32.mrf.mxu0
    %2655 = vmatprep.mubr.f32.mxu0 0.0
    %2656 = vmatmul.mubr.f32.gmra.mxu0 %v2560
    %v2657 = vpop.f32.mrf.mxu0
    %v2658 = vadd.f32 0.0, %v2657
    %v2659 = vpop.f32.mrf.mxu0
    %2660 = vmatprep.mubr.f32.mxu0 0.0
    %2661 = vmatmul.mubr.f32.gmra.mxu0 %v2562
    %v2662 = vpop.f32.mrf.mxu0
    %v2663 = vadd.f32 0.0, %v2662
    %v2664 = vpop.f32.mrf.mxu0
    %2665 = vmatprep.mubr.f32.mxu0 0.0
    %2666 = vmatmul.mubr.f32.gmra.mxu0 %v2564
    %v2667 = vpop.f32.mrf.mxu0
    %v2668 = vadd.f32 0.0, %v2667
    %v2669 = vpop.f32.mrf.mxu0
    %2670 = vmatprep.mubr.f32.mxu0 0.0
    %2671 = vmatmul.mubr.f32.gmra.mxu0 %v2566
    %v2672 = vpop.f32.mrf.mxu0
    %v2673 = vadd.f32 0.0, %v2672
    %v2674 = vpop.f32.mrf.mxu0
    %2675 = vdwg.mxu0
    %v2676 = vadd.f32 %v2525, %v2638
    %v2677 = vadd.f32 %v2526, %v2643
    %v2678 = vadd.f32 %v2527, %v2648
    %v2679 = vadd.f32 %v2528, %v2653
    %v2680 = vadd.f32 %v2529, %v2658
    %v2681 = vadd.f32 %v2530, %v2663
    %v2682 = vadd.f32 %v2531, %v2668
    %v2683 = vadd.f32 %v2532, %v2673
    %s2684 = scalar_lea.vmem %s3, 128
    %v2685 = vld [vmem:[%s2684] sm:$0xff]
    %v2686 = vld [vmem:[%s2684 + $0x8] sm:$0x1]
    %v2687 = vsel %vm308, %v1668, %v309
    %v2688 = vsel %vm1529, %v2687, 0
    %v2691 = vsel %vm606, %v2686, 0
    %2693 = vmatprep.subr.mxu0 0.0
    %2694 = vmatpush1.msra.mxu0 0.0
    %2695 = vmatprep.subr.mxu0 0.0
    %2696 = vmatpush1.msra.mxu0 0.0
    %2697 = vmatprep.subr.mxu0 0.0
    %2698 = vmatpush1.msra.mxu0 0.0
    %2699 = vmatprep.subr.mxu0 0.0
    %2700 = vmatpush1.msra.mxu0 0.0
    %2701 = vmatprep.subr.mxu0 0.0
    %2702 = vmatpush1.msra.mxu0 0.0
    %2703 = vmatprep.subr.mxu0 0.0
    %2704 = vmatpush1.msra.mxu0 0.0
    %2705 = vmatprep.subr.mxu0 0.0
    %2706 = vmatpush1.msra.mxu0 0.0
    %2707 = vmatprep.subr.mxu0 0.0
    %2708 = vmatpush1.msra.mxu0 0.0
    %2709 = vmatprep.subr.mxu0 0.0
    %2710 = vmatpush1.msra.mxu0 0.0
    %2711 = vmatprep.subr.mxu0 0.0
    %2712 = vmatpush1.msra.mxu0 0.0
    %2713 = vmatprep.subr.mxu0 0.0
    %2714 = vmatpush1.msra.mxu0 0.0
    %2715 = vmatprep.subr.mxu0 0.0
    %2716 = vmatpush1.msra.mxu0 0.0
    %2717 = vmatprep.subr.mxu0 0.0
    %2718 = vmatpush1.msra.mxu0 0.0
    %2719 = vmatprep.subr.mxu0 0.0
    %2720 = vmatpush1.msra.mxu0 0.0
    %2721 = vmatprep.subr.mxu0 0.0
    %2722 = vmatpush1.msra.mxu0 %v2691
    %2723 = vmatprep.subr.mxu0 0.0
    %2724 = vmatpush1.msra.mxu0 %v2685
    %2725 = vmatprep.subr.mxu0 0.0
    %2726 = vmatpush2.msra.mxu0 0.0
    %2727 = vmatprep.subr.mxu0 0.0
    %2728 = vmatpush2.msra.mxu0 0.0
    %2729 = vmatprep.subr.mxu0 0.0
    %2730 = vmatpush2.msra.mxu0 0.0
    %2731 = vmatprep.subr.mxu0 0.0
    %2732 = vmatpush2.msra.mxu0 0.0
    %2733 = vmatprep.subr.mxu0 0.0
    %2734 = vmatpush2.msra.mxu0 0.0
    %2735 = vmatprep.subr.mxu0 0.0
    %2736 = vmatpush2.msra.mxu0 0.0
    %2737 = vmatprep.subr.mxu0 0.0
    %2738 = vmatpush2.msra.mxu0 0.0
    %2739 = vmatprep.subr.mxu0 0.0
    %2740 = vmatpush2.msra.mxu0 0.0
    %2741 = vmatprep.subr.mxu0 0.0
    %2742 = vmatpush2.msra.mxu0 0.0
    %2743 = vmatprep.subr.mxu0 0.0
    %2744 = vmatpush2.msra.mxu0 0.0
    %2745 = vmatprep.subr.mxu0 0.0
    %2746 = vmatpush2.msra.mxu0 0.0
    %2747 = vmatprep.subr.mxu0 0.0
    %2748 = vmatpush2.msra.mxu0 0.0
    %2749 = vmatprep.subr.mxu0 0.0
    %2750 = vmatpush2.msra.mxu0 0.0
    %2751 = vmatprep.subr.mxu0 0.0
    %2752 = vmatpush2.msra.mxu0 0.0
    %2753 = vmatprep.subr.mxu0 0.0
    %2754 = vmatpush2.msra.mxu0 0.0
    %2755 = vmatprep.subr.mxu0 0.0
    %2756 = vmatpush2.msra.mxu0 0.0
    %2757 = vmatprep.mubr.f32.mxu0 0.0
    %2758 = vmatmul.mubr.f32.gmra.mxu0 %v1672
    %v2759 = vpop.f32.mrf.mxu0
    %v2760 = vadd.f32 0.0, %v2759
    %v2761 = vpop.f32.mrf.mxu0
    %2762 = vmatprep.mubr.f32.mxu0 0.0
    %2763 = vmatmul.mubr.f32.gmra.mxu0 %v1674
    %v2764 = vpop.f32.mrf.mxu0
    %v2765 = vadd.f32 0.0, %v2764
    %v2766 = vpop.f32.mrf.mxu0
    %2767 = vmatprep.mubr.f32.mxu0 0.0
    %2768 = vmatmul.mubr.f32.gmra.mxu0 %v1676
    %v2769 = vpop.f32.mrf.mxu0
    %v2770 = vadd.f32 0.0, %v2769
    %v2771 = vpop.f32.mrf.mxu0
    %2772 = vmatprep.mubr.f32.mxu0 0.0
    %2773 = vmatmul.mubr.f32.gmra.mxu0 %v1678
    %v2774 = vpop.f32.mrf.mxu0
    %v2775 = vadd.f32 0.0, %v2774
    %v2776 = vpop.f32.mrf.mxu0
    %2777 = vmatprep.mubr.f32.mxu0 0.0
    %2778 = vmatmul.mubr.f32.gmra.mxu0 %v1680
    %v2779 = vpop.f32.mrf.mxu0
    %v2780 = vadd.f32 0.0, %v2779
    %v2781 = vpop.f32.mrf.mxu0
    %2782 = vmatprep.mubr.f32.mxu0 0.0
    %2783 = vmatmul.mubr.f32.gmra.mxu0 %v1682
    %v2784 = vpop.f32.mrf.mxu0
    %v2785 = vadd.f32 0.0, %v2784
    %v2786 = vpop.f32.mrf.mxu0
    %2787 = vmatprep.mubr.f32.mxu0 0.0
    %2788 = vmatmul.mubr.f32.gmra.mxu0 %v1684
    %v2789 = vpop.f32.mrf.mxu0
    %v2790 = vadd.f32 0.0, %v2789
    %v2791 = vpop.f32.mrf.mxu0
    %2792 = vmatprep.mubr.f32.mxu0 0.0
    %2793 = vmatmul.mubr.f32.gmra.mxu0 %v2688
    %v2794 = vpop.f32.mrf.mxu0
    %v2795 = vadd.f32 0.0, %v2794
    %v2796 = vpop.f32.mrf.mxu0
    %2797 = vdwg.mxu0
    %v2798 = vadd.f32 %v2676, %v2760
    %v2799 = vadd.f32 %v2677, %v2765
    %v2800 = vadd.f32 %v2678, %v2770
    %v2801 = vadd.f32 %v2679, %v2775
    %v2802 = vadd.f32 %v2680, %v2780
    %v2803 = vadd.f32 %v2681, %v2785
    %v2804 = vadd.f32 %v2682, %v2790
    %v2805 = vadd.f32 %v2683, %v2795
    %v2806 = vld [vmem:[%s4] sm:$0x1]
    %v2808 = vlaneseq
    %v2809 = vshrl.u32 %v2808, 7
    %v2810 = vsub.s32 0, %v2809
    %v2811 = vrot.slane %v2806, %v2810
    %v2813 = vadd.f32 %v2798, %v2811
    %v2814 = vadd.f32 %v2799, %v2811
    %v2815 = vadd.f32 %v2800, %v2811
    %v2816 = vadd.f32 %v2801, %v2811
    %v2817 = vadd.f32 %v2802, %v2811
    %v2818 = vadd.f32 %v2803, %v2811
    %v2819 = vadd.f32 %v2804, %v2811
    %v2820 = vadd.f32 %v2805, %v2811
    %v2821 = vmax.f32 %v2813, 0.0
    %v2822 = vmax.f32 %v2814, 0.0
    %v2823 = vmax.f32 %v2815, 0.0
    %v2824 = vmax.f32 %v2816, 0.0
    %v2825 = vmax.f32 %v2817, 0.0
    %v2826 = vmax.f32 %v2818, 0.0
    %v2827 = vmax.f32 %v2819, 0.0
    %v2828 = vmax.f32 %v2820, 0.0
    %v2829 = vmul.f32 %v2821, %v82
    %v2830 = vmul.f32 %v2822, %v83
    %v2831 = vmul.f32 %v2823, %v84
    %v2832 = vmul.f32 %v2824, %v85
    %v2833 = vmul.f32 %v2825, %v86
    %v2834 = vmul.f32 %v2826, %v87
    %v2835 = vmul.f32 %v2827, %v88
    %v2836 = vmul.f32 %v2828, %v89
    %v2837 = vld [vmem:[%s5] sm:$0xff]
    %v2838 = vld [vmem:[%s5 + $0x8] sm:$0x1]
    %s2839 = scalar_lea.vmem %s5, 16
    %v2840 = vld [vmem:[%s2839] sm:$0xff]
    %v2841 = vld [vmem:[%s2839 + $0x8] sm:$0x1]
    %v2850 = vrot.slane %v2829, 4
    %v2851 = vsel %vm308, %v309, %v2850
    %v2852 = vrot.slane %v2830, 4
    %v2853 = vsel %vm308, %v2850, %v2852
    %v2854 = vrot.slane %v2831, 4
    %v2855 = vsel %vm308, %v2852, %v2854
    %v2856 = vrot.slane %v2832, 4
    %v2857 = vsel %vm308, %v2854, %v2856
    %v2858 = vrot.slane %v2833, 4
    %v2859 = vsel %vm308, %v2856, %v2858
    %v2860 = vrot.slane %v2834, 4
    %v2861 = vsel %vm308, %v2858, %v2860
    %v2862 = vrot.slane %v2835, 4
    %v2863 = vsel %vm308, %v2860, %v2862
    %v2864 = vrot.slane %v2836, 4
    %v2865 = vsel %vm308, %v2862, %v2864
    %v2866 = vsel %vm1529, %v2851, 0
    %v2868 = vsel %vm1529, %v2853, 0
    %v2870 = vsel %vm1529, %v2855, 0
    %v2872 = vsel %vm1529, %v2857, 0
    %v2874 = vsel %vm1529, %v2859, 0
    %v2876 = vsel %vm1529, %v2861, 0
    %v2878 = vsel %vm1529, %v2863, 0
    %v2880 = vsel %vm1529, %v2865, 0
    %v2883 = vsel %vm606, %v2841, 0
    %2885 = vmatprep.subr.mxu0 0.0
    %2886 = vmatpush1.msra.mxu0 0.0
    %2887 = vmatprep.subr.mxu0 0.0
    %2888 = vmatpush1.msra.mxu0 0.0
    %2889 = vmatprep.subr.mxu0 0.0
    %2890 = vmatpush1.msra.mxu0 0.0
    %2891 = vmatprep.subr.mxu0 0.0
    %2892 = vmatpush1.msra.mxu0 0.0
    %2893 = vmatprep.subr.mxu0 0.0
    %2894 = vmatpush1.msra.mxu0 0.0
    %2895 = vmatprep.subr.mxu0 0.0
    %2896 = vmatpush1.msra.mxu0 0.0
    %2897 = vmatprep.subr.mxu0 0.0
    %2898 = vmatpush1.msra.mxu0 0.0
    %2899 = vmatprep.subr.mxu0 0.0
    %2900 = vmatpush1.msra.mxu0 0.0
    %2901 = vmatprep.subr.mxu0 0.0
    %2902 = vmatpush1.msra.mxu0 0.0
    %2903 = vmatprep.subr.mxu0 0.0
    %2904 = vmatpush1.msra.mxu0 0.0
    %2905 = vmatprep.subr.mxu0 0.0
    %2906 = vmatpush1.msra.mxu0 0.0
    %2907 = vmatprep.subr.mxu0 0.0
    %2908 = vmatpush1.msra.mxu0 0.0
    %2909 = vmatprep.subr.mxu0 0.0
    %2910 = vmatpush1.msra.mxu0 0.0
    %2911 = vmatprep.subr.mxu0 0.0
    %2912 = vmatpush1.msra.mxu0 0.0
    %2913 = vmatprep.subr.mxu0 0.0
    %2914 = vmatpush1.msra.mxu0 %v2883
    %2915 = vmatprep.subr.mxu0 0.0
    %2916 = vmatpush1.msra.mxu0 %v2840
    %2917 = vmatprep.subr.mxu0 0.0
    %2918 = vmatpush2.msra.mxu0 0.0
    %2919 = vmatprep.subr.mxu0 0.0
    %2920 = vmatpush2.msra.mxu0 0.0
    %2921 = vmatprep.subr.mxu0 0.0
    %2922 = vmatpush2.msra.mxu0 0.0
    %2923 = vmatprep.subr.mxu0 0.0
    %2924 = vmatpush2.msra.mxu0 0.0
    %2925 = vmatprep.subr.mxu0 0.0
    %2926 = vmatpush2.msra.mxu0 0.0
    %2927 = vmatprep.subr.mxu0 0.0
    %2928 = vmatpush2.msra.mxu0 0.0
    %2929 = vmatprep.subr.mxu0 0.0
    %2930 = vmatpush2.msra.mxu0 0.0
    %2931 = vmatprep.subr.mxu0 0.0
    %2932 = vmatpush2.msra.mxu0 0.0
    %2933 = vmatprep.subr.mxu0 0.0
    %2934 = vmatpush2.msra.mxu0 0.0
    %2935 = vmatprep.subr.mxu0 0.0
    %2936 = vmatpush2.msra.mxu0 0.0
    %2937 = vmatprep.subr.mxu0 0.0
    %2938 = vmatpush2.msra.mxu0 0.0
    %2939 = vmatprep.subr.mxu0 0.0
    %2940 = vmatpush2.msra.mxu0 0.0
    %2941 = vmatprep.subr.mxu0 0.0
    %2942 = vmatpush2.msra.mxu0 0.0
    %2943 = vmatprep.subr.mxu0 0.0
    %2944 = vmatpush2.msra.mxu0 0.0
    %2945 = vmatprep.subr.mxu0 0.0
    %2946 = vmatpush2.msra.mxu0 0.0
    %2947 = vmatprep.subr.mxu0 0.0
    %2948 = vmatpush2.msra.mxu0 0.0
    %2949 = vmatprep.mubr.f32.mxu0 0.0
    %2950 = vmatmul.mubr.f32.gmra.mxu0 %v2866
    %v2951 = vpop.f32.mrf.mxu0
    %v2952 = vadd.f32 0.0, %v2951
    %v2953 = vpop.f32.mrf.mxu0
    %2954 = vmatprep.mubr.f32.mxu0 0.0
    %2955 = vmatmul.mubr.f32.gmra.mxu0 %v2868
    %v2956 = vpop.f32.mrf.mxu0
    %v2957 = vadd.f32 0.0, %v2956
    %v2958 = vpop.f32.mrf.mxu0
    %2959 = vmatprep.mubr.f32.mxu0 0.0
    %2960 = vmatmul.mubr.f32.gmra.mxu0 %v2870
    %v2961 = vpop.f32.mrf.mxu0
    %v2962 = vadd.f32 0.0, %v2961
    %v2963 = vpop.f32.mrf.mxu0
    %2964 = vmatprep.mubr.f32.mxu0 0.0
    %2965 = vmatmul.mubr.f32.gmra.mxu0 %v2872
    %v2966 = vpop.f32.mrf.mxu0
    %v2967 = vadd.f32 0.0, %v2966
    %v2968 = vpop.f32.mrf.mxu0
    %2969 = vmatprep.mubr.f32.mxu0 0.0
    %2970 = vmatmul.mubr.f32.gmra.mxu0 %v2874
    %v2971 = vpop.f32.mrf.mxu0
    %v2972 = vadd.f32 0.0, %v2971
    %v2973 = vpop.f32.mrf.mxu0
    %2974 = vmatprep.mubr.f32.mxu0 0.0
    %2975 = vmatmul.mubr.f32.gmra.mxu0 %v2876
    %v2976 = vpop.f32.mrf.mxu0
    %v2977 = vadd.f32 0.0, %v2976
    %v2978 = vpop.f32.mrf.mxu0
    %2979 = vmatprep.mubr.f32.mxu0 0.0
    %2980 = vmatmul.mubr.f32.gmra.mxu0 %v2878
    %v2981 = vpop.f32.mrf.mxu0
    %v2982 = vadd.f32 0.0, %v2981
    %v2983 = vpop.f32.mrf.mxu0
    %2984 = vmatprep.mubr.f32.mxu0 0.0
    %2985 = vmatmul.mubr.f32.gmra.mxu0 %v2880
    %v2986 = vpop.f32.mrf.mxu0
    %v2987 = vadd.f32 0.0, %v2986
    %v2988 = vpop.f32.mrf.mxu0
    %2989 = vdwg.mxu0
    %v2990 = vrot.slane %v2829, 3
    %v2991 = vsel %vm1200, %v1216, %v2990
    %v2992 = vrot.slane %v2830, 3
    %v2993 = vsel %vm1200, %v2990, %v2992
    %v2994 = vrot.slane %v2831, 3
    %v2995 = vsel %vm1200, %v2992, %v2994
    %v2996 = vrot.slane %v2832, 3
    %v2997 = vsel %vm1200, %v2994, %v2996
    %v2998 = vrot.slane %v2833, 3
    %v2999 = vsel %vm1200, %v2996, %v2998
    %v3000 = vrot.slane %v2834, 3
    %v3001 = vsel %vm1200, %v2998, %v3000
    %v3002 = vrot.slane %v2835, 3
    %v3003 = vsel %vm1200, %v3000, %v3002
    %v3004 = vrot.slane %v2836, 3
    %v3005 = vsel %vm1200, %v3002, %v3004
    %v3006 = vsel %vm1529, %v2991, 0
    %v3008 = vsel %vm1529, %v2993, 0
    %v3010 = vsel %vm1529, %v2995, 0
    %v3012 = vsel %vm1529, %v2997, 0
    %v3014 = vsel %vm1529, %v2999, 0
    %v3016 = vsel %vm1529, %v3001, 0
    %v3018 = vsel %vm1529, %v3003, 0
    %v3020 = vsel %vm1529, %v3005, 0
    %v3023 = vsel %vm606, %v2838, 0
    %3025 = vmatprep.subr.mxu0 0.0
    %3026 = vmatpush1.msra.mxu0 0.0
    %3027 = vmatprep.subr.mxu0 0.0
    %3028 = vmatpush1.msra.mxu0 0.0
    %3029 = vmatprep.subr.mxu0 0.0
    %3030 = vmatpush1.msra.mxu0 0.0
    %3031 = vmatprep.subr.mxu0 0.0
    %3032 = vmatpush1.msra.mxu0 0.0
    %3033 = vmatprep.subr.mxu0 0.0
    %3034 = vmatpush1.msra.mxu0 0.0
    %3035 = vmatprep.subr.mxu0 0.0
    %3036 = vmatpush1.msra.mxu0 0.0
    %3037 = vmatprep.subr.mxu0 0.0
    %3038 = vmatpush1.msra.mxu0 0.0
    %3039 = vmatprep.subr.mxu0 0.0
    %3040 = vmatpush1.msra.mxu0 0.0
    %3041 = vmatprep.subr.mxu0 0.0
    %3042 = vmatpush1.msra.mxu0 0.0
    %3043 = vmatprep.subr.mxu0 0.0
    %3044 = vmatpush1.msra.mxu0 0.0
    %3045 = vmatprep.subr.mxu0 0.0
    %3046 = vmatpush1.msra.mxu0 0.0
    %3047 = vmatprep.subr.mxu0 0.0
    %3048 = vmatpush1.msra.mxu0 0.0
    %3049 = vmatprep.subr.mxu0 0.0
    %3050 = vmatpush1.msra.mxu0 0.0
    %3051 = vmatprep.subr.mxu0 0.0
    %3052 = vmatpush1.msra.mxu0 0.0
    %3053 = vmatprep.subr.mxu0 0.0
    %3054 = vmatpush1.msra.mxu0 %v3023
    %3055 = vmatprep.subr.mxu0 0.0
    %3056 = vmatpush1.msra.mxu0 %v2837
    %3057 = vmatprep.subr.mxu0 0.0
    %3058 = vmatpush2.msra.mxu0 0.0
    %3059 = vmatprep.subr.mxu0 0.0
    %3060 = vmatpush2.msra.mxu0 0.0
    %3061 = vmatprep.subr.mxu0 0.0
    %3062 = vmatpush2.msra.mxu0 0.0
    %3063 = vmatprep.subr.mxu0 0.0
    %3064 = vmatpush2.msra.mxu0 0.0
    %3065 = vmatprep.subr.mxu0 0.0
    %3066 = vmatpush2.msra.mxu0 0.0
    %3067 = vmatprep.subr.mxu0 0.0
    %3068 = vmatpush2.msra.mxu0 0.0
    %3069 = vmatprep.subr.mxu0 0.0
    %3070 = vmatpush2.msra.mxu0 0.0
    %3071 = vmatprep.subr.mxu0 0.0
    %3072 = vmatpush2.msra.mxu0 0.0
    %3073 = vmatprep.subr.mxu0 0.0
    %3074 = vmatpush2.msra.mxu0 0.0
    %3075 = vmatprep.subr.mxu0 0.0
    %3076 = vmatpush2.msra.mxu0 0.0
    %3077 = vmatprep.subr.mxu0 0.0
    %3078 = vmatpush2.msra.mxu0 0.0
    %3079 = vmatprep.subr.mxu0 0.0
    %3080 = vmatpush2.msra.mxu0 0.0
    %3081 = vmatprep.subr.mxu0 0.0
    %3082 = vmatpush2.msra.mxu0 0.0
    %3083 = vmatprep.subr.mxu0 0.0
    %3084 = vmatpush2.msra.mxu0 0.0
    %3085 = vmatprep.subr.mxu0 0.0
    %3086 = vmatpush2.msra.mxu0 0.0
    %3087 = vmatprep.subr.mxu0 0.0
    %3088 = vmatpush2.msra.mxu0 0.0
    %3089 = vmatprep.mubr.f32.mxu0 0.0
    %3090 = vmatmul.mubr.f32.gmra.mxu0 %v3006
    %v3091 = vpop.f32.mrf.mxu0
    %v3092 = vadd.f32 %v2952, %v3091
    %v3093 = vpop.f32.mrf.mxu0
    %3094 = vmatprep.mubr.f32.mxu0 0.0
    %3095 = vmatmul.mubr.f32.gmra.mxu0 %v3008
    %v3096 = vpop.f32.mrf.mxu0
    %v3097 = vadd.f32 %v2957, %v3096
    %v3098 = vpop.f32.mrf.mxu0
    %3099 = vmatprep.mubr.f32.mxu0 0.0
    %3100 = vmatmul.mubr.f32.gmra.mxu0 %v3010
    %v3101 = vpop.f32.mrf.mxu0
    %v3102 = vadd.f32 %v2962, %v3101
    %v3103 = vpop.f32.mrf.mxu0
    %3104 = vmatprep.mubr.f32.mxu0 0.0
    %3105 = vmatmul.mubr.f32.gmra.mxu0 %v3012
    %v3106 = vpop.f32.mrf.mxu0
    %v3107 = vadd.f32 %v2967, %v3106
    %v3108 = vpop.f32.mrf.mxu0
    %3109 = vmatprep.mubr.f32.mxu0 0.0
    %3110 = vmatmul.mubr.f32.gmra.mxu0 %v3014
    %v3111 = vpop.f32.mrf.mxu0
    %v3112 = vadd.f32 %v2972, %v3111
    %v3113 = vpop.f32.mrf.mxu0
    %3114 = vmatprep.mubr.f32.mxu0 0.0
    %3115 = vmatmul.mubr.f32.gmra.mxu0 %v3016
    %v3116 = vpop.f32.mrf.mxu0
    %v3117 = vadd.f32 %v2977, %v3116
    %v3118 = vpop.f32.mrf.mxu0
    %3119 = vmatprep.mubr.f32.mxu0 0.0
    %3120 = vmatmul.mubr.f32.gmra.mxu0 %v3018
    %v3121 = vpop.f32.mrf.mxu0
    %v3122 = vadd.f32 %v2982, %v3121
    %v3123 = vpop.f32.mrf.mxu0
    %3124 = vmatprep.mubr.f32.mxu0 0.0
    %3125 = vmatmul.mubr.f32.gmra.mxu0 %v3020
    %v3126 = vpop.f32.mrf.mxu0
    %v3127 = vadd.f32 %v2987, %v3126
    %v3128 = vpop.f32.mrf.mxu0
    %3129 = vdwg.mxu0
    %s3130 = scalar_lea.vmem %s5, 32
    %v3131 = vld [vmem:[%s3130] sm:$0xff]
    %v3132 = vld [vmem:[%s3130 + $0x8] sm:$0x1]
    %v3133 = vrot.slane %v2829, 5
    %v3134 = vsel %vm168, %v169, %v3133
    %v3135 = vrot.slane %v2830, 5
    %v3136 = vsel %vm168, %v3133, %v3135
    %v3137 = vrot.slane %v2831, 5
    %v3138 = vsel %vm168, %v3135, %v3137
    %v3139 = vrot.slane %v2832, 5
    %v3140 = vsel %vm168, %v3137, %v3139
    %v3141 = vrot.slane %v2833, 5
    %v3142 = vsel %vm168, %v3139, %v3141
    %v3143 = vrot.slane %v2834, 5
    %v3144 = vsel %vm168, %v3141, %v3143
    %v3145 = vrot.slane %v2835, 5
    %v3146 = vsel %vm168, %v3143, %v3145
    %v3147 = vrot.slane %v2836, 5
    %v3148 = vsel %vm168, %v3145, %v3147
    %v3149 = vsel %vm1529, %v3134, 0
    %v3151 = vsel %vm1529, %v3136, 0
    %v3153 = vsel %vm1529, %v3138, 0
    %v3155 = vsel %vm1529, %v3140, 0
    %v3157 = vsel %vm1529, %v3142, 0
    %v3159 = vsel %vm1529, %v3144, 0
    %v3161 = vsel %vm1529, %v3146, 0
    %v3163 = vsel %vm1529, %v3148, 0
    %v3166 = vsel %vm606, %v3132, 0
    %3168 = vmatprep.subr.mxu0 0.0
    %3169 = vmatpush1.msra.mxu0 0.0
    %3170 = vmatprep.subr.mxu0 0.0
    %3171 = vmatpush1.msra.mxu0 0.0
    %3172 = vmatprep.subr.mxu0 0.0
    %3173 = vmatpush1.msra.mxu0 0.0
    %3174 = vmatprep.subr.mxu0 0.0
    %3175 = vmatpush1.msra.mxu0 0.0
    %3176 = vmatprep.subr.mxu0 0.0
    %3177 = vmatpush1.msra.mxu0 0.0
    %3178 = vmatprep.subr.mxu0 0.0
    %3179 = vmatpush1.msra.mxu0 0.0
    %3180 = vmatprep.subr.mxu0 0.0
    %3181 = vmatpush1.msra.mxu0 0.0
    %3182 = vmatprep.subr.mxu0 0.0
    %3183 = vmatpush1.msra.mxu0 0.0
    %3184 = vmatprep.subr.mxu0 0.0
    %3185 = vmatpush1.msra.mxu0 0.0
    %3186 = vmatprep.subr.mxu0 0.0
    %3187 = vmatpush1.msra.mxu0 0.0
    %3188 = vmatprep.subr.mxu0 0.0
    %3189 = vmatpush1.msra.mxu0 0.0
    %3190 = vmatprep.subr.mxu0 0.0
    %3191 = vmatpush1.msra.mxu0 0.0
    %3192 = vmatprep.subr.mxu0 0.0
    %3193 = vmatpush1.msra.mxu0 0.0
    %3194 = vmatprep.subr.mxu0 0.0
    %3195 = vmatpush1.msra.mxu0 0.0
    %3196 = vmatprep.subr.mxu0 0.0
    %3197 = vmatpush1.msra.mxu0 %v3166
    %3198 = vmatprep.subr.mxu0 0.0
    %3199 = vmatpush1.msra.mxu0 %v3131
    %3200 = vmatprep.subr.mxu0 0.0
    %3201 = vmatpush2.msra.mxu0 0.0
    %3202 = vmatprep.subr.mxu0 0.0
    %3203 = vmatpush2.msra.mxu0 0.0
    %3204 = vmatprep.subr.mxu0 0.0
    %3205 = vmatpush2.msra.mxu0 0.0
    %3206 = vmatprep.subr.mxu0 0.0
    %3207 = vmatpush2.msra.mxu0 0.0
    %3208 = vmatprep.subr.mxu0 0.0
    %3209 = vmatpush2.msra.mxu0 0.0
    %3210 = vmatprep.subr.mxu0 0.0
    %3211 = vmatpush2.msra.mxu0 0.0
    %3212 = vmatprep.subr.mxu0 0.0
    %3213 = vmatpush2.msra.mxu0 0.0
    %3214 = vmatprep.subr.mxu0 0.0
    %3215 = vmatpush2.msra.mxu0 0.0
    %3216 = vmatprep.subr.mxu0 0.0
    %3217 = vmatpush2.msra.mxu0 0.0
    %3218 = vmatprep.subr.mxu0 0.0
    %3219 = vmatpush2.msra.mxu0 0.0
    %3220 = vmatprep.subr.mxu0 0.0
    %3221 = vmatpush2.msra.mxu0 0.0
    %3222 = vmatprep.subr.mxu0 0.0
    %3223 = vmatpush2.msra.mxu0 0.0
    %3224 = vmatprep.subr.mxu0 0.0
    %3225 = vmatpush2.msra.mxu0 0.0
    %3226 = vmatprep.subr.mxu0 0.0
    %3227 = vmatpush2.msra.mxu0 0.0
    %3228 = vmatprep.subr.mxu0 0.0
    %3229 = vmatpush2.msra.mxu0 0.0
    %3230 = vmatprep.subr.mxu0 0.0
    %3231 = vmatpush2.msra.mxu0 0.0
    %3232 = vmatprep.mubr.f32.mxu0 0.0
    %3233 = vmatmul.mubr.f32.gmra.mxu0 %v3149
    %v3234 = vpop.f32.mrf.mxu0
    %v3235 = vadd.f32 0.0, %v3234
    %v3236 = vpop.f32.mrf.mxu0
    %3237 = vmatprep.mubr.f32.mxu0 0.0
    %3238 = vmatmul.mubr.f32.gmra.mxu0 %v3151
    %v3239 = vpop.f32.mrf.mxu0
    %v3240 = vadd.f32 0.0, %v3239
    %v3241 = vpop.f32.mrf.mxu0
    %3242 = vmatprep.mubr.f32.mxu0 0.0
    %3243 = vmatmul.mubr.f32.gmra.mxu0 %v3153
    %v3244 = vpop.f32.mrf.mxu0
    %v3245 = vadd.f32 0.0, %v3244
    %v3246 = vpop.f32.mrf.mxu0
    %3247 = vmatprep.mubr.f32.mxu0 0.0
    %3248 = vmatmul.mubr.f32.gmra.mxu0 %v3155
    %v3249 = vpop.f32.mrf.mxu0
    %v3250 = vadd.f32 0.0, %v3249
    %v3251 = vpop.f32.mrf.mxu0
    %3252 = vmatprep.mubr.f32.mxu0 0.0
    %3253 = vmatmul.mubr.f32.gmra.mxu0 %v3157
    %v3254 = vpop.f32.mrf.mxu0
    %v3255 = vadd.f32 0.0, %v3254
    %v3256 = vpop.f32.mrf.mxu0
    %3257 = vmatprep.mubr.f32.mxu0 0.0
    %3258 = vmatmul.mubr.f32.gmra.mxu0 %v3159
    %v3259 = vpop.f32.mrf.mxu0
    %v3260 = vadd.f32 0.0, %v3259
    %v3261 = vpop.f32.mrf.mxu0
    %3262 = vmatprep.mubr.f32.mxu0 0.0
    %3263 = vmatmul.mubr.f32.gmra.mxu0 %v3161
    %v3264 = vpop.f32.mrf.mxu0
    %v3265 = vadd.f32 0.0, %v3264
    %v3266 = vpop.f32.mrf.mxu0
    %3267 = vmatprep.mubr.f32.mxu0 0.0
    %3268 = vmatmul.mubr.f32.gmra.mxu0 %v3163
    %v3269 = vpop.f32.mrf.mxu0
    %v3270 = vadd.f32 0.0, %v3269
    %v3271 = vpop.f32.mrf.mxu0
    %3272 = vdwg.mxu0
    %v3273 = vadd.f32 %v3092, %v3235
    %v3274 = vadd.f32 %v3097, %v3240
    %v3275 = vadd.f32 %v3102, %v3245
    %v3276 = vadd.f32 %v3107, %v3250
    %v3277 = vadd.f32 %v3112, %v3255
    %v3278 = vadd.f32 %v3117, %v3260
    %v3279 = vadd.f32 %v3122, %v3265
    %v3280 = vadd.f32 %v3127, %v3270
    %s3281 = scalar_lea.vmem %s5, 48
    %v3282 = vld [vmem:[%s3281] sm:$0xff]
    %v3283 = vld [vmem:[%s3281 + $0x8] sm:$0x1]
    %v3284 = vrot.slane %v2829, 6
    %v3285 = vsel %vm453, %v454, %v3284
    %v3286 = vrot.slane %v2830, 6
    %v3287 = vsel %vm453, %v3284, %v3286
    %v3288 = vrot.slane %v2831, 6
    %v3289 = vsel %vm453, %v3286, %v3288
    %v3290 = vrot.slane %v2832, 6
    %v3291 = vsel %vm453, %v3288, %v3290
    %v3292 = vrot.slane %v2833, 6
    %v3293 = vsel %vm453, %v3290, %v3292
    %v3294 = vrot.slane %v2834, 6
    %v3295 = vsel %vm453, %v3292, %v3294
    %v3296 = vrot.slane %v2835, 6
    %v3297 = vsel %vm453, %v3294, %v3296
    %v3298 = vrot.slane %v2836, 6
    %v3299 = vsel %vm453, %v3296, %v3298
    %v3300 = vsel %vm1529, %v3285, 0
    %v3302 = vsel %vm1529, %v3287, 0
    %v3304 = vsel %vm1529, %v3289, 0
    %v3306 = vsel %vm1529, %v3291, 0
    %v3308 = vsel %vm1529, %v3293, 0
    %v3310 = vsel %vm1529, %v3295, 0
    %v3312 = vsel %vm1529, %v3297, 0
    %v3314 = vsel %vm1529, %v3299, 0
    %v3317 = vsel %vm606, %v3283, 0
    %3319 = vmatprep.subr.mxu0 0.0
    %3320 = vmatpush1.msra.mxu0 0.0
    %3321 = vmatprep.subr.mxu0 0.0
    %3322 = vmatpush1.msra.mxu0 0.0
    %3323 = vmatprep.subr.mxu0 0.0
    %3324 = vmatpush1.msra.mxu0 0.0
    %3325 = vmatprep.subr.mxu0 0.0
    %3326 = vmatpush1.msra.mxu0 0.0
    %3327 = vmatprep.subr.mxu0 0.0
    %3328 = vmatpush1.msra.mxu0 0.0
    %3329 = vmatprep.subr.mxu0 0.0
    %3330 = vmatpush1.msra.mxu0 0.0
    %3331 = vmatprep.subr.mxu0 0.0
    %3332 = vmatpush1.msra.mxu0 0.0
    %3333 = vmatprep.subr.mxu0 0.0
    %3334 = vmatpush1.msra.mxu0 0.0
    %3335 = vmatprep.subr.mxu0 0.0
    %3336 = vmatpush1.msra.mxu0 0.0
    %3337 = vmatprep.subr.mxu0 0.0
    %3338 = vmatpush1.msra.mxu0 0.0
    %3339 = vmatprep.subr.mxu0 0.0
    %3340 = vmatpush1.msra.mxu0 0.0
    %3341 = vmatprep.subr.mxu0 0.0
    %3342 = vmatpush1.msra.mxu0 0.0
    %3343 = vmatprep.subr.mxu0 0.0
    %3344 = vmatpush1.msra.mxu0 0.0
    %3345 = vmatprep.subr.mxu0 0.0
    %3346 = vmatpush1.msra.mxu0 0.0
    %3347 = vmatprep.subr.mxu0 0.0
    %3348 = vmatpush1.msra.mxu0 %v3317
    %3349 = vmatprep.subr.mxu0 0.0
    %3350 = vmatpush1.msra.mxu0 %v3282
    %3351 = vmatprep.subr.mxu0 0.0
    %3352 = vmatpush2.msra.mxu0 0.0
    %3353 = vmatprep.subr.mxu0 0.0
    %3354 = vmatpush2.msra.mxu0 0.0
    %3355 = vmatprep.subr.mxu0 0.0
    %3356 = vmatpush2.msra.mxu0 0.0
    %3357 = vmatprep.subr.mxu0 0.0
    %3358 = vmatpush2.msra.mxu0 0.0
    %3359 = vmatprep.subr.mxu0 0.0
    %3360 = vmatpush2.msra.mxu0 0.0
    %3361 = vmatprep.subr.mxu0 0.0
    %3362 = vmatpush2.msra.mxu0 0.0
    %3363 = vmatprep.subr.mxu0 0.0
    %3364 = vmatpush2.msra.mxu0 0.0
    %3365 = vmatprep.subr.mxu0 0.0
    %3366 = vmatpush2.msra.mxu0 0.0
    %3367 = vmatprep.subr.mxu0 0.0
    %3368 = vmatpush2.msra.mxu0 0.0
    %3369 = vmatprep.subr.mxu0 0.0
    %3370 = vmatpush2.msra.mxu0 0.0
    %3371 = vmatprep.subr.mxu0 0.0
    %3372 = vmatpush2.msra.mxu0 0.0
    %3373 = vmatprep.subr.mxu0 0.0
    %3374 = vmatpush2.msra.mxu0 0.0
    %3375 = vmatprep.subr.mxu0 0.0
    %3376 = vmatpush2.msra.mxu0 0.0
    %3377 = vmatprep.subr.mxu0 0.0
    %3378 = vmatpush2.msra.mxu0 0.0
    %3379 = vmatprep.subr.mxu0 0.0
    %3380 = vmatpush2.msra.mxu0 0.0
    %3381 = vmatprep.subr.mxu0 0.0
    %3382 = vmatpush2.msra.mxu0 0.0
    %3383 = vmatprep.mubr.f32.mxu0 0.0
    %3384 = vmatmul.mubr.f32.gmra.mxu0 %v3300
    %v3385 = vpop.f32.mrf.mxu0
    %v3386 = vadd.f32 0.0, %v3385
    %v3387 = vpop.f32.mrf.mxu0
    %3388 = vmatprep.mubr.f32.mxu0 0.0
    %3389 = vmatmul.mubr.f32.gmra.mxu0 %v3302
    %v3390 = vpop.f32.mrf.mxu0
    %v3391 = vadd.f32 0.0, %v3390
    %v3392 = vpop.f32.mrf.mxu0
    %3393 = vmatprep.mubr.f32.mxu0 0.0
    %3394 = vmatmul.mubr.f32.gmra.mxu0 %v3304
    %v3395 = vpop.f32.mrf.mxu0
    %v3396 = vadd.f32 0.0, %v3395
    %v3397 = vpop.f32.mrf.mxu0
    %3398 = vmatprep.mubr.f32.mxu0 0.0
    %3399 = vmatmul.mubr.f32.gmra.mxu0 %v3306
    %v3400 = vpop.f32.mrf.mxu0
    %v3401 = vadd.f32 0.0, %v3400
    %v3402 = vpop.f32.mrf.mxu0
    %3403 = vmatprep.mubr.f32.mxu0 0.0
    %3404 = vmatmul.mubr.f32.gmra.mxu0 %v3308
    %v3405 = vpop.f32.mrf.mxu0
    %v3406 = vadd.f32 0.0, %v3405
    %v3407 = vpop.f32.mrf.mxu0
    %3408 = vmatprep.mubr.f32.mxu0 0.0
    %3409 = vmatmul.mubr.f32.gmra.mxu0 %v3310
    %v3410 = vpop.f32.mrf.mxu0
    %v3411 = vadd.f32 0.0, %v3410
    %v3412 = vpop.f32.mrf.mxu0
    %3413 = vmatprep.mubr.f32.mxu0 0.0
    %3414 = vmatmul.mubr.f32.gmra.mxu0 %v3312
    %v3415 = vpop.f32.mrf.mxu0
    %v3416 = vadd.f32 0.0, %v3415
    %v3417 = vpop.f32.mrf.mxu0
    %3418 = vmatprep.mubr.f32.mxu0 0.0
    %3419 = vmatmul.mubr.f32.gmra.mxu0 %v3314
    %v3420 = vpop.f32.mrf.mxu0
    %v3421 = vadd.f32 0.0, %v3420
    %v3422 = vpop.f32.mrf.mxu0
    %3423 = vdwg.mxu0
    %v3424 = vadd.f32 %v3273, %v3386
    %v3425 = vadd.f32 %v3274, %v3391
    %v3426 = vadd.f32 %v3275, %v3396
    %v3427 = vadd.f32 %v3276, %v3401
    %v3428 = vadd.f32 %v3277, %v3406
    %v3429 = vadd.f32 %v3278, %v3411
    %v3430 = vadd.f32 %v3279, %v3416
    %v3431 = vadd.f32 %v3280, %v3421
    %s3432 = scalar_lea.vmem %s5, 64
    %v3433 = vld [vmem:[%s3432] sm:$0xff]
    %v3434 = vld [vmem:[%s3432 + $0x8] sm:$0x1]
    %v3435 = vrot.slane %v2829, 7
    %v3436 = vsel %vm606, %v607, %v3435
    %v3437 = vrot.slane %v2830, 7
    %v3438 = vsel %vm606, %v3435, %v3437
    %v3439 = vrot.slane %v2831, 7
    %v3440 = vsel %vm606, %v3437, %v3439
    %v3441 = vrot.slane %v2832, 7
    %v3442 = vsel %vm606, %v3439, %v3441
    %v3443 = vrot.slane %v2833, 7
    %v3444 = vsel %vm606, %v3441, %v3443
    %v3445 = vrot.slane %v2834, 7
    %v3446 = vsel %vm606, %v3443, %v3445
    %v3447 = vrot.slane %v2835, 7
    %v3448 = vsel %vm606, %v3445, %v3447
    %v3449 = vrot.slane %v2836, 7
    %v3450 = vsel %vm606, %v3447, %v3449
    %v3451 = vsel %vm1529, %v3436, 0
    %v3453 = vsel %vm1529, %v3438, 0
    %v3455 = vsel %vm1529, %v3440, 0
    %v3457 = vsel %vm1529, %v3442, 0
    %v3459 = vsel %vm1529, %v3444, 0
    %v3461 = vsel %vm1529, %v3446, 0
    %v3463 = vsel %vm1529, %v3448, 0
    %v3465 = vsel %vm1529, %v3450, 0
    %v3468 = vsel %vm606, %v3434, 0
    %3470 = vmatprep.subr.mxu0 0.0
    %3471 = vmatpush1.msra.mxu0 0.0
    %3472 = vmatprep.subr.mxu0 0.0
    %3473 = vmatpush1.msra.mxu0 0.0
    %3474 = vmatprep.subr.mxu0 0.0
    %3475 = vmatpush1.msra.mxu0 0.0
    %3476 = vmatprep.subr.mxu0 0.0
    %3477 = vmatpush1.msra.mxu0 0.0
    %3478 = vmatprep.subr.mxu0 0.0
    %3479 = vmatpush1.msra.mxu0 0.0
    %3480 = vmatprep.subr.mxu0 0.0
    %3481 = vmatpush1.msra.mxu0 0.0
    %3482 = vmatprep.subr.mxu0 0.0
    %3483 = vmatpush1.msra.mxu0 0.0
    %3484 = vmatprep.subr.mxu0 0.0
    %3485 = vmatpush1.msra.mxu0 0.0
    %3486 = vmatprep.subr.mxu0 0.0
    %3487 = vmatpush1.msra.mxu0 0.0
    %3488 = vmatprep.subr.mxu0 0.0
    %3489 = vmatpush1.msra.mxu0 0.0
    %3490 = vmatprep.subr.mxu0 0.0
    %3491 = vmatpush1.msra.mxu0 0.0
    %3492 = vmatprep.subr.mxu0 0.0
    %3493 = vmatpush1.msra.mxu0 0.0
    %3494 = vmatprep.subr.mxu0 0.0
    %3495 = vmatpush1.msra.mxu0 0.0
    %3496 = vmatprep.subr.mxu0 0.0
    %3497 = vmatpush1.msra.mxu0 0.0
    %3498 = vmatprep.subr.mxu0 0.0
    %3499 = vmatpush1.msra.mxu0 %v3468
    %3500 = vmatprep.subr.mxu0 0.0
    %3501 = vmatpush1.msra.mxu0 %v3433
    %3502 = vmatprep.subr.mxu0 0.0
    %3503 = vmatpush2.msra.mxu0 0.0
    %3504 = vmatprep.subr.mxu0 0.0
    %3505 = vmatpush2.msra.mxu0 0.0
    %3506 = vmatprep.subr.mxu0 0.0
    %3507 = vmatpush2.msra.mxu0 0.0
    %3508 = vmatprep.subr.mxu0 0.0
    %3509 = vmatpush2.msra.mxu0 0.0
    %3510 = vmatprep.subr.mxu0 0.0
    %3511 = vmatpush2.msra.mxu0 0.0
    %3512 = vmatprep.subr.mxu0 0.0
    %3513 = vmatpush2.msra.mxu0 0.0
    %3514 = vmatprep.subr.mxu0 0.0
    %3515 = vmatpush2.msra.mxu0 0.0
    %3516 = vmatprep.subr.mxu0 0.0
    %3517 = vmatpush2.msra.mxu0 0.0
    %3518 = vmatprep.subr.mxu0 0.0
    %3519 = vmatpush2.msra.mxu0 0.0
    %3520 = vmatprep.subr.mxu0 0.0
    %3521 = vmatpush2.msra.mxu0 0.0
    %3522 = vmatprep.subr.mxu0 0.0
    %3523 = vmatpush2.msra.mxu0 0.0
    %3524 = vmatprep.subr.mxu0 0.0
    %3525 = vmatpush2.msra.mxu0 0.0
    %3526 = vmatprep.subr.mxu0 0.0
    %3527 = vmatpush2.msra.mxu0 0.0
    %3528 = vmatprep.subr.mxu0 0.0
    %3529 = vmatpush2.msra.mxu0 0.0
    %3530 = vmatprep.subr.mxu0 0.0
    %3531 = vmatpush2.msra.mxu0 0.0
    %3532 = vmatprep.subr.mxu0 0.0
    %3533 = vmatpush2.msra.mxu0 0.0
    %3534 = vmatprep.mubr.f32.mxu0 0.0
    %3535 = vmatmul.mubr.f32.gmra.mxu0 %v3451
    %v3536 = vpop.f32.mrf.mxu0
    %v3537 = vadd.f32 0.0, %v3536
    %v3538 = vpop.f32.mrf.mxu0
    %3539 = vmatprep.mubr.f32.mxu0 0.0
    %3540 = vmatmul.mubr.f32.gmra.mxu0 %v3453
    %v3541 = vpop.f32.mrf.mxu0
    %v3542 = vadd.f32 0.0, %v3541
    %v3543 = vpop.f32.mrf.mxu0
    %3544 = vmatprep.mubr.f32.mxu0 0.0
    %3545 = vmatmul.mubr.f32.gmra.mxu0 %v3455
    %v3546 = vpop.f32.mrf.mxu0
    %v3547 = vadd.f32 0.0, %v3546
    %v3548 = vpop.f32.mrf.mxu0
    %3549 = vmatprep.mubr.f32.mxu0 0.0
    %3550 = vmatmul.mubr.f32.gmra.mxu0 %v3457
    %v3551 = vpop.f32.mrf.mxu0
    %v3552 = vadd.f32 0.0, %v3551
    %v3553 = vpop.f32.mrf.mxu0
    %3554 = vmatprep.mubr.f32.mxu0 0.0
    %3555 = vmatmul.mubr.f32.gmra.mxu0 %v3459
    %v3556 = vpop.f32.mrf.mxu0
    %v3557 = vadd.f32 0.0, %v3556
    %v3558 = vpop.f32.mrf.mxu0
    %3559 = vmatprep.mubr.f32.mxu0 0.0
    %3560 = vmatmul.mubr.f32.gmra.mxu0 %v3461
    %v3561 = vpop.f32.mrf.mxu0
    %v3562 = vadd.f32 0.0, %v3561
    %v3563 = vpop.f32.mrf.mxu0
    %3564 = vmatprep.mubr.f32.mxu0 0.0
    %3565 = vmatmul.mubr.f32.gmra.mxu0 %v3463
    %v3566 = vpop.f32.mrf.mxu0
    %v3567 = vadd.f32 0.0, %v3566
    %v3568 = vpop.f32.mrf.mxu0
    %3569 = vmatprep.mubr.f32.mxu0 0.0
    %3570 = vmatmul.mubr.f32.gmra.mxu0 %v3465
    %v3571 = vpop.f32.mrf.mxu0
    %v3572 = vadd.f32 0.0, %v3571
    %v3573 = vpop.f32.mrf.mxu0
    %3574 = vdwg.mxu0
    %v3575 = vadd.f32 %v3424, %v3537
    %v3576 = vadd.f32 %v3425, %v3542
    %v3577 = vadd.f32 %v3426, %v3547
    %v3578 = vadd.f32 %v3427, %v3552
    %v3579 = vadd.f32 %v3428, %v3557
    %v3580 = vadd.f32 %v3429, %v3562
    %v3581 = vadd.f32 %v3430, %v3567
    %v3582 = vadd.f32 %v3431, %v3572
    %s3583 = scalar_lea.vmem %s5, 80
    %v3584 = vld [vmem:[%s3583] sm:$0xff]
    %v3585 = vld [vmem:[%s3583 + $0x8] sm:$0x1]
    %v3586 = vsel %vm1529, %v2829, 0
    %v3588 = vsel %vm1529, %v2830, 0
    %v3590 = vsel %vm1529, %v2831, 0
    %v3592 = vsel %vm1529, %v2832, 0
    %v3594 = vsel %vm1529, %v2833, 0
    %v3596 = vsel %vm1529, %v2834, 0
    %v3598 = vsel %vm1529, %v2835, 0
    %v3600 = vsel %vm1529, %v2836, 0
    %v3603 = vsel %vm606, %v3585, 0
    %3605 = vmatprep.subr.mxu0 0.0
    %3606 = vmatpush1.msra.mxu0 0.0
    %3607 = vmatprep.subr.mxu0 0.0
    %3608 = vmatpush1.msra.mxu0 0.0
    %3609 = vmatprep.subr.mxu0 0.0
    %3610 = vmatpush1.msra.mxu0 0.0
    %3611 = vmatprep.subr.mxu0 0.0
    %3612 = vmatpush1.msra.mxu0 0.0
    %3613 = vmatprep.subr.mxu0 0.0
    %3614 = vmatpush1.msra.mxu0 0.0
    %3615 = vmatprep.subr.mxu0 0.0
    %3616 = vmatpush1.msra.mxu0 0.0
    %3617 = vmatprep.subr.mxu0 0.0
    %3618 = vmatpush1.msra.mxu0 0.0
    %3619 = vmatprep.subr.mxu0 0.0
    %3620 = vmatpush1.msra.mxu0 0.0
    %3621 = vmatprep.subr.mxu0 0.0
    %3622 = vmatpush1.msra.mxu0 0.0
    %3623 = vmatprep.subr.mxu0 0.0
    %3624 = vmatpush1.msra.mxu0 0.0
    %3625 = vmatprep.subr.mxu0 0.0
    %3626 = vmatpush1.msra.mxu0 0.0
    %3627 = vmatprep.subr.mxu0 0.0
    %3628 = vmatpush1.msra.mxu0 0.0
    %3629 = vmatprep.subr.mxu0 0.0
    %3630 = vmatpush1.msra.mxu0 0.0
    %3631 = vmatprep.subr.mxu0 0.0
    %3632 = vmatpush1.msra.mxu0 0.0
    %3633 = vmatprep.subr.mxu0 0.0
    %3634 = vmatpush1.msra.mxu0 %v3603
    %3635 = vmatprep.subr.mxu0 0.0
    %3636 = vmatpush1.msra.mxu0 %v3584
    %3637 = vmatprep.subr.mxu0 0.0
    %3638 = vmatpush2.msra.mxu0 0.0
    %3639 = vmatprep.subr.mxu0 0.0
    %3640 = vmatpush2.msra.mxu0 0.0
    %3641 = vmatprep.subr.mxu0 0.0
    %3642 = vmatpush2.msra.mxu0 0.0
    %3643 = vmatprep.subr.mxu0 0.0
    %3644 = vmatpush2.msra.mxu0 0.0
    %3645 = vmatprep.subr.mxu0 0.0
    %3646 = vmatpush2.msra.mxu0 0.0
    %3647 = vmatprep.subr.mxu0 0.0
    %3648 = vmatpush2.msra.mxu0 0.0
    %3649 = vmatprep.subr.mxu0 0.0
    %3650 = vmatpush2.msra.mxu0 0.0
    %3651 = vmatprep.subr.mxu0 0.0
    %3652 = vmatpush2.msra.mxu0 0.0
    %3653 = vmatprep.subr.mxu0 0.0
    %3654 = vmatpush2.msra.mxu0 0.0
    %3655 = vmatprep.subr.mxu0 0.0
    %3656 = vmatpush2.msra.mxu0 0.0
    %3657 = vmatprep.subr.mxu0 0.0
    %3658 = vmatpush2.msra.mxu0 0.0
    %3659 = vmatprep.subr.mxu0 0.0
    %3660 = vmatpush2.msra.mxu0 0.0
    %3661 = vmatprep.subr.mxu0 0.0
    %3662 = vmatpush2.msra.mxu0 0.0
    %3663 = vmatprep.subr.mxu0 0.0
    %3664 = vmatpush2.msra.mxu0 0.0
    %3665 = vmatprep.subr.mxu0 0.0
    %3666 = vmatpush2.msra.mxu0 0.0
    %3667 = vmatprep.subr.mxu0 0.0
    %3668 = vmatpush2.msra.mxu0 0.0
    %3669 = vmatprep.mubr.f32.mxu0 0.0
    %3670 = vmatmul.mubr.f32.gmra.mxu0 %v3586
    %v3671 = vpop.f32.mrf.mxu0
    %v3672 = vadd.f32 0.0, %v3671
    %v3673 = vpop.f32.mrf.mxu0
    %3674 = vmatprep.mubr.f32.mxu0 0.0
    %3675 = vmatmul.mubr.f32.gmra.mxu0 %v3588
    %v3676 = vpop.f32.mrf.mxu0
    %v3677 = vadd.f32 0.0, %v3676
    %v3678 = vpop.f32.mrf.mxu0
    %3679 = vmatprep.mubr.f32.mxu0 0.0
    %3680 = vmatmul.mubr.f32.gmra.mxu0 %v3590
    %v3681 = vpop.f32.mrf.mxu0
    %v3682 = vadd.f32 0.0, %v3681
    %v3683 = vpop.f32.mrf.mxu0
    %3684 = vmatprep.mubr.f32.mxu0 0.0
    %3685 = vmatmul.mubr.f32.gmra.mxu0 %v3592
    %v3686 = vpop.f32.mrf.mxu0
    %v3687 = vadd.f32 0.0, %v3686
    %v3688 = vpop.f32.mrf.mxu0
    %3689 = vmatprep.mubr.f32.mxu0 0.0
    %3690 = vmatmul.mubr.f32.gmra.mxu0 %v3594
    %v3691 = vpop.f32.mrf.mxu0
    %v3692 = vadd.f32 0.0, %v3691
    %v3693 = vpop.f32.mrf.mxu0
    %3694 = vmatprep.mubr.f32.mxu0 0.0
    %3695 = vmatmul.mubr.f32.gmra.mxu0 %v3596
    %v3696 = vpop.f32.mrf.mxu0
    %v3697 = vadd.f32 0.0, %v3696
    %v3698 = vpop.f32.mrf.mxu0
    %3699 = vmatprep.mubr.f32.mxu0 0.0
    %3700 = vmatmul.mubr.f32.gmra.mxu0 %v3598
    %v3701 = vpop.f32.mrf.mxu0
    %v3702 = vadd.f32 0.0, %v3701
    %v3703 = vpop.f32.mrf.mxu0
    %3704 = vmatprep.mubr.f32.mxu0 0.0
    %3705 = vmatmul.mubr.f32.gmra.mxu0 %v3600
    %v3706 = vpop.f32.mrf.mxu0
    %v3707 = vadd.f32 0.0, %v3706
    %v3708 = vpop.f32.mrf.mxu0
    %3709 = vdwg.mxu0
    %v3710 = vadd.f32 %v3575, %v3672
    %v3711 = vadd.f32 %v3576, %v3677
    %v3712 = vadd.f32 %v3577, %v3682
    %v3713 = vadd.f32 %v3578, %v3687
    %v3714 = vadd.f32 %v3579, %v3692
    %v3715 = vadd.f32 %v3580, %v3697
    %v3716 = vadd.f32 %v3581, %v3702
    %v3717 = vadd.f32 %v3582, %v3707
    %s3718 = scalar_lea.vmem %s5, 96
    %v3719 = vld [vmem:[%s3718] sm:$0xff]
    %v3720 = vld [vmem:[%s3718 + $0x8] sm:$0x1]
    %v3721 = vrot.slane %v2829, 1
    %v3722 = vrot.slane %v2830, 1
    %v3723 = vsel %vm894, %v3721, %v3722
    %v3724 = vrot.slane %v2831, 1
    %v3725 = vsel %vm894, %v3722, %v3724
    %v3726 = vrot.slane %v2832, 1
    %v3727 = vsel %vm894, %v3724, %v3726
    %v3728 = vrot.slane %v2833, 1
    %v3729 = vsel %vm894, %v3726, %v3728
    %v3730 = vrot.slane %v2834, 1
    %v3731 = vsel %vm894, %v3728, %v3730
    %v3732 = vrot.slane %v2835, 1
    %v3733 = vsel %vm894, %v3730, %v3732
    %v3734 = vrot.slane %v2836, 1
    %v3735 = vsel %vm894, %v3732, %v3734
    %v3736 = vsel %vm894, %v3734, %v910
    %v3737 = vsel %vm1529, %v3723, 0
    %v3739 = vsel %vm1529, %v3725, 0
    %v3741 = vsel %vm1529, %v3727, 0
    %v3743 = vsel %vm1529, %v3729, 0
    %v3745 = vsel %vm1529, %v3731, 0
    %v3747 = vsel %vm1529, %v3733, 0
    %v3749 = vsel %vm1529, %v3735, 0
    %v3751 = vsel %vm1529, %v3736, 0
    %v3754 = vsel %vm606, %v3720, 0
    %3756 = vmatprep.subr.mxu0 0.0
    %3757 = vmatpush1.msra.mxu0 0.0
    %3758 = vmatprep.subr.mxu0 0.0
    %3759 = vmatpush1.msra.mxu0 0.0
    %3760 = vmatprep.subr.mxu0 0.0
    %3761 = vmatpush1.msra.mxu0 0.0
    %3762 = vmatprep.subr.mxu0 0.0
    %3763 = vmatpush1.msra.mxu0 0.0
    %3764 = vmatprep.subr.mxu0 0.0
    %3765 = vmatpush1.msra.mxu0 0.0
    %3766 = vmatprep.subr.mxu0 0.0
    %3767 = vmatpush1.msra.mxu0 0.0
    %3768 = vmatprep.subr.mxu0 0.0
    %3769 = vmatpush1.msra.mxu0 0.0
    %3770 = vmatprep.subr.mxu0 0.0
    %3771 = vmatpush1.msra.mxu0 0.0
    %3772 = vmatprep.subr.mxu0 0.0
    %3773 = vmatpush1.msra.mxu0 0.0
    %3774 = vmatprep.subr.mxu0 0.0
    %3775 = vmatpush1.msra.mxu0 0.0
    %3776 = vmatprep.subr.mxu0 0.0
    %3777 = vmatpush1.msra.mxu0 0.0
    %3778 = vmatprep.subr.mxu0 0.0
    %3779 = vmatpush1.msra.mxu0 0.0
    %3780 = vmatprep.subr.mxu0 0.0
    %3781 = vmatpush1.msra.mxu0 0.0
    %3782 = vmatprep.subr.mxu0 0.0
    %3783 = vmatpush1.msra.mxu0 0.0
    %3784 = vmatprep.subr.mxu0 0.0
    %3785 = vmatpush1.msra.mxu0 %v3754
    %3786 = vmatprep.subr.mxu0 0.0
    %3787 = vmatpush1.msra.mxu0 %v3719
    %3788 = vmatprep.subr.mxu0 0.0
    %3789 = vmatpush2.msra.mxu0 0.0
    %3790 = vmatprep.subr.mxu0 0.0
    %3791 = vmatpush2.msra.mxu0 0.0
    %3792 = vmatprep.subr.mxu0 0.0
    %3793 = vmatpush2.msra.mxu0 0.0
    %3794 = vmatprep.subr.mxu0 0.0
    %3795 = vmatpush2.msra.mxu0 0.0
    %3796 = vmatprep.subr.mxu0 0.0
    %3797 = vmatpush2.msra.mxu0 0.0
    %3798 = vmatprep.subr.mxu0 0.0
    %3799 = vmatpush2.msra.mxu0 0.0
    %3800 = vmatprep.subr.mxu0 0.0
    %3801 = vmatpush2.msra.mxu0 0.0
    %3802 = vmatprep.subr.mxu0 0.0
    %3803 = vmatpush2.msra.mxu0 0.0
    %3804 = vmatprep.subr.mxu0 0.0
    %3805 = vmatpush2.msra.mxu0 0.0
    %3806 = vmatprep.subr.mxu0 0.0
    %3807 = vmatpush2.msra.mxu0 0.0
    %3808 = vmatprep.subr.mxu0 0.0
    %3809 = vmatpush2.msra.mxu0 0.0
    %3810 = vmatprep.subr.mxu0 0.0
    %3811 = vmatpush2.msra.mxu0 0.0
    %3812 = vmatprep.subr.mxu0 0.0
    %3813 = vmatpush2.msra.mxu0 0.0
    %3814 = vmatprep.subr.mxu0 0.0
    %3815 = vmatpush2.msra.mxu0 0.0
    %3816 = vmatprep.subr.mxu0 0.0
    %3817 = vmatpush2.msra.mxu0 0.0
    %3818 = vmatprep.subr.mxu0 0.0
    %3819 = vmatpush2.msra.mxu0 0.0
    %3820 = vmatprep.mubr.f32.mxu0 0.0
    %3821 = vmatmul.mubr.f32.gmra.mxu0 %v3737
    %v3822 = vpop.f32.mrf.mxu0
    %v3823 = vadd.f32 0.0, %v3822
    %v3824 = vpop.f32.mrf.mxu0
    %3825 = vmatprep.mubr.f32.mxu0 0.0
    %3826 = vmatmul.mubr.f32.gmra.mxu0 %v3739
    %v3827 = vpop.f32.mrf.mxu0
    %v3828 = vadd.f32 0.0, %v3827
    %v3829 = vpop.f32.mrf.mxu0
    %3830 = vmatprep.mubr.f32.mxu0 0.0
    %3831 = vmatmul.mubr.f32.gmra.mxu0 %v3741
    %v3832 = vpop.f32.mrf.mxu0
    %v3833 = vadd.f32 0.0, %v3832
    %v3834 = vpop.f32.mrf.mxu0
    %3835 = vmatprep.mubr.f32.mxu0 0.0
    %3836 = vmatmul.mubr.f32.gmra.mxu0 %v3743
    %v3837 = vpop.f32.mrf.mxu0
    %v3838 = vadd.f32 0.0, %v3837
    %v3839 = vpop.f32.mrf.mxu0
    %3840 = vmatprep.mubr.f32.mxu0 0.0
    %3841 = vmatmul.mubr.f32.gmra.mxu0 %v3745
    %v3842 = vpop.f32.mrf.mxu0
    %v3843 = vadd.f32 0.0, %v3842
    %v3844 = vpop.f32.mrf.mxu0
    %3845 = vmatprep.mubr.f32.mxu0 0.0
    %3846 = vmatmul.mubr.f32.gmra.mxu0 %v3747
    %v3847 = vpop.f32.mrf.mxu0
    %v3848 = vadd.f32 0.0, %v3847
    %v3849 = vpop.f32.mrf.mxu0
    %3850 = vmatprep.mubr.f32.mxu0 0.0
    %3851 = vmatmul.mubr.f32.gmra.mxu0 %v3749
    %v3852 = vpop.f32.mrf.mxu0
    %v3853 = vadd.f32 0.0, %v3852
    %v3854 = vpop.f32.mrf.mxu0
    %3855 = vmatprep.mubr.f32.mxu0 0.0
    %3856 = vmatmul.mubr.f32.gmra.mxu0 %v3751
    %v3857 = vpop.f32.mrf.mxu0
    %v3858 = vadd.f32 0.0, %v3857
    %v3859 = vpop.f32.mrf.mxu0
    %3860 = vdwg.mxu0
    %v3861 = vadd.f32 %v3710, %v3823
    %v3862 = vadd.f32 %v3711, %v3828
    %v3863 = vadd.f32 %v3712, %v3833
    %v3864 = vadd.f32 %v3713, %v3838
    %v3865 = vadd.f32 %v3714, %v3843
    %v3866 = vadd.f32 %v3715, %v3848
    %v3867 = vadd.f32 %v3716, %v3853
    %v3868 = vadd.f32 %v3717, %v3858
    %s3869 = scalar_lea.vmem %s5, 112
    %v3870 = vld [vmem:[%s3869] sm:$0xff]
    %v3871 = vld [vmem:[%s3869 + $0x8] sm:$0x1]
    %v3872 = vrot.slane %v2829, 2
    %v3873 = vrot.slane %v2830, 2
    %v3874 = vsel %vm1047, %v3872, %v3873
    %v3875 = vrot.slane %v2831, 2
    %v3876 = vsel %vm1047, %v3873, %v3875
    %v3877 = vrot.slane %v2832, 2
    %v3878 = vsel %vm1047, %v3875, %v3877
    %v3879 = vrot.slane %v2833, 2
    %v3880 = vsel %vm1047, %v3877, %v3879
    %v3881 = vrot.slane %v2834, 2
    %v3882 = vsel %vm1047, %v3879, %v3881
    %v3883 = vrot.slane %v2835, 2
    %v3884 = vsel %vm1047, %v3881, %v3883
    %v3885 = vrot.slane %v2836, 2
    %v3886 = vsel %vm1047, %v3883, %v3885
    %v3887 = vsel %vm1047, %v3885, %v1063
    %v3888 = vsel %vm1529, %v3874, 0
    %v3890 = vsel %vm1529, %v3876, 0
    %v3892 = vsel %vm1529, %v3878, 0
    %v3894 = vsel %vm1529, %v3880, 0
    %v3896 = vsel %vm1529, %v3882, 0
    %v3898 = vsel %vm1529, %v3884, 0
    %v3900 = vsel %vm1529, %v3886, 0
    %v3902 = vsel %vm1529, %v3887, 0
    %v3905 = vsel %vm606, %v3871, 0
    %3907 = vmatprep.subr.mxu0 0.0
    %3908 = vmatpush1.msra.mxu0 0.0
    %3909 = vmatprep.subr.mxu0 0.0
    %3910 = vmatpush1.msra.mxu0 0.0
    %3911 = vmatprep.subr.mxu0 0.0
    %3912 = vmatpush1.msra.mxu0 0.0
    %3913 = vmatprep.subr.mxu0 0.0
    %3914 = vmatpush1.msra.mxu0 0.0
    %3915 = vmatprep.subr.mxu0 0.0
    %3916 = vmatpush1.msra.mxu0 0.0
    %3917 = vmatprep.subr.mxu0 0.0
    %3918 = vmatpush1.msra.mxu0 0.0
    %3919 = vmatprep.subr.mxu0 0.0
    %3920 = vmatpush1.msra.mxu0 0.0
    %3921 = vmatprep.subr.mxu0 0.0
    %3922 = vmatpush1.msra.mxu0 0.0
    %3923 = vmatprep.subr.mxu0 0.0
    %3924 = vmatpush1.msra.mxu0 0.0
    %3925 = vmatprep.subr.mxu0 0.0
    %3926 = vmatpush1.msra.mxu0 0.0
    %3927 = vmatprep.subr.mxu0 0.0
    %3928 = vmatpush1.msra.mxu0 0.0
    %3929 = vmatprep.subr.mxu0 0.0
    %3930 = vmatpush1.msra.mxu0 0.0
    %3931 = vmatprep.subr.mxu0 0.0
    %3932 = vmatpush1.msra.mxu0 0.0
    %3933 = vmatprep.subr.mxu0 0.0
    %3934 = vmatpush1.msra.mxu0 0.0
    %3935 = vmatprep.subr.mxu0 0.0
    %3936 = vmatpush1.msra.mxu0 %v3905
    %3937 = vmatprep.subr.mxu0 0.0
    %3938 = vmatpush1.msra.mxu0 %v3870
    %3939 = vmatprep.subr.mxu0 0.0
    %3940 = vmatpush2.msra.mxu0 0.0
    %3941 = vmatprep.subr.mxu0 0.0
    %3942 = vmatpush2.msra.mxu0 0.0
    %3943 = vmatprep.subr.mxu0 0.0
    %3944 = vmatpush2.msra.mxu0 0.0
    %3945 = vmatprep.subr.mxu0 0.0
    %3946 = vmatpush2.msra.mxu0 0.0
    %3947 = vmatprep.subr.mxu0 0.0
    %3948 = vmatpush2.msra.mxu0 0.0
    %3949 = vmatprep.subr.mxu0 0.0
    %3950 = vmatpush2.msra.mxu0 0.0
    %3951 = vmatprep.subr.mxu0 0.0
    %3952 = vmatpush2.msra.mxu0 0.0
    %3953 = vmatprep.subr.mxu0 0.0
    %3954 = vmatpush2.msra.mxu0 0.0
    %3955 = vmatprep.subr.mxu0 0.0
    %3956 = vmatpush2.msra.mxu0 0.0
    %3957 = vmatprep.subr.mxu0 0.0
    %3958 = vmatpush2.msra.mxu0 0.0
    %3959 = vmatprep.subr.mxu0 0.0
    %3960 = vmatpush2.msra.mxu0 0.0
    %3961 = vmatprep.subr.mxu0 0.0
    %3962 = vmatpush2.msra.mxu0 0.0
    %3963 = vmatprep.subr.mxu0 0.0
    %3964 = vmatpush2.msra.mxu0 0.0
    %3965 = vmatprep.subr.mxu0 0.0
    %3966 = vmatpush2.msra.mxu0 0.0
    %3967 = vmatprep.subr.mxu0 0.0
    %3968 = vmatpush2.msra.mxu0 0.0
    %3969 = vmatprep.subr.mxu0 0.0
    %3970 = vmatpush2.msra.mxu0 0.0
    %3971 = vmatprep.mubr.f32.mxu0 0.0
    %3972 = vmatmul.mubr.f32.gmra.mxu0 %v3888
    %v3973 = vpop.f32.mrf.mxu0
    %v3974 = vadd.f32 0.0, %v3973
    %v3975 = vpop.f32.mrf.mxu0
    %3976 = vmatprep.mubr.f32.mxu0 0.0
    %3977 = vmatmul.mubr.f32.gmra.mxu0 %v3890
    %v3978 = vpop.f32.mrf.mxu0
    %v3979 = vadd.f32 0.0, %v3978
    %v3980 = vpop.f32.mrf.mxu0
    %3981 = vmatprep.mubr.f32.mxu0 0.0
    %3982 = vmatmul.mubr.f32.gmra.mxu0 %v3892
    %v3983 = vpop.f32.mrf.mxu0
    %v3984 = vadd.f32 0.0, %v3983
    %v3985 = vpop.f32.mrf.mxu0
    %3986 = vmatprep.mubr.f32.mxu0 0.0
    %3987 = vmatmul.mubr.f32.gmra.mxu0 %v3894
    %v3988 = vpop.f32.mrf.mxu0
    %v3989 = vadd.f32 0.0, %v3988
    %v3990 = vpop.f32.mrf.mxu0
    %3991 = vmatprep.mubr.f32.mxu0 0.0
    %3992 = vmatmul.mubr.f32.gmra.mxu0 %v3896
    %v3993 = vpop.f32.mrf.mxu0
    %v3994 = vadd.f32 0.0, %v3993
    %v3995 = vpop.f32.mrf.mxu0
    %3996 = vmatprep.mubr.f32.mxu0 0.0
    %3997 = vmatmul.mubr.f32.gmra.mxu0 %v3898
    %v3998 = vpop.f32.mrf.mxu0
    %v3999 = vadd.f32 0.0, %v3998
    %v4000 = vpop.f32.mrf.mxu0
    %4001 = vmatprep.mubr.f32.mxu0 0.0
    %4002 = vmatmul.mubr.f32.gmra.mxu0 %v3900
    %v4003 = vpop.f32.mrf.mxu0
    %v4004 = vadd.f32 0.0, %v4003
    %v4005 = vpop.f32.mrf.mxu0
    %4006 = vmatprep.mubr.f32.mxu0 0.0
    %4007 = vmatmul.mubr.f32.gmra.mxu0 %v3902
    %v4008 = vpop.f32.mrf.mxu0
    %v4009 = vadd.f32 0.0, %v4008
    %v4010 = vpop.f32.mrf.mxu0
    %4011 = vdwg.mxu0
    %v4012 = vadd.f32 %v3861, %v3974
    %v4013 = vadd.f32 %v3862, %v3979
    %v4014 = vadd.f32 %v3863, %v3984
    %v4015 = vadd.f32 %v3864, %v3989
    %v4016 = vadd.f32 %v3865, %v3994
    %v4017 = vadd.f32 %v3866, %v3999
    %v4018 = vadd.f32 %v3867, %v4004
    %v4019 = vadd.f32 %v3868, %v4009
    %s4020 = scalar_lea.vmem %s5, 128
    %v4021 = vld [vmem:[%s4020] sm:$0xff]
    %v4022 = vld [vmem:[%s4020 + $0x8] sm:$0x1]
    %v4023 = vsel %vm1200, %v3004, %v1216
    %v4024 = vsel %vm1529, %v4023, 0
    %v4027 = vsel %vm606, %v4022, 0
    %4029 = vmatprep.subr.mxu0 0.0
    %4030 = vmatpush1.msra.mxu0 0.0
    %4031 = vmatprep.subr.mxu0 0.0
    %4032 = vmatpush1.msra.mxu0 0.0
    %4033 = vmatprep.subr.mxu0 0.0
    %4034 = vmatpush1.msra.mxu0 0.0
    %4035 = vmatprep.subr.mxu0 0.0
    %4036 = vmatpush1.msra.mxu0 0.0
    %4037 = vmatprep.subr.mxu0 0.0
    %4038 = vmatpush1.msra.mxu0 0.0
    %4039 = vmatprep.subr.mxu0 0.0
    %4040 = vmatpush1.msra.mxu0 0.0
    %4041 = vmatprep.subr.mxu0 0.0
    %4042 = vmatpush1.msra.mxu0 0.0
    %4043 = vmatprep.subr.mxu0 0.0
    %4044 = vmatpush1.msra.mxu0 0.0
    %4045 = vmatprep.subr.mxu0 0.0
    %4046 = vmatpush1.msra.mxu0 0.0
    %4047 = vmatprep.subr.mxu0 0.0
    %4048 = vmatpush1.msra.mxu0 0.0
    %4049 = vmatprep.subr.mxu0 0.0
    %4050 = vmatpush1.msra.mxu0 0.0
    %4051 = vmatprep.subr.mxu0 0.0
    %4052 = vmatpush1.msra.mxu0 0.0
    %4053 = vmatprep.subr.mxu0 0.0
    %4054 = vmatpush1.msra.mxu0 0.0
    %4055 = vmatprep.subr.mxu0 0.0
    %4056 = vmatpush1.msra.mxu0 0.0
    %4057 = vmatprep.subr.mxu0 0.0
    %4058 = vmatpush1.msra.mxu0 %v4027
    %4059 = vmatprep.subr.mxu0 0.0
    %4060 = vmatpush1.msra.mxu0 %v4021
    %4061 = vmatprep.subr.mxu0 0.0
    %4062 = vmatpush2.msra.mxu0 0.0
    %4063 = vmatprep.subr.mxu0 0.0
    %4064 = vmatpush2.msra.mxu0 0.0
    %4065 = vmatprep.subr.mxu0 0.0
    %4066 = vmatpush2.msra.mxu0 0.0
    %4067 = vmatprep.subr.mxu0 0.0
    %4068 = vmatpush2.msra.mxu0 0.0
    %4069 = vmatprep.subr.mxu0 0.0
    %4070 = vmatpush2.msra.mxu0 0.0
    %4071 = vmatprep.subr.mxu0 0.0
    %4072 = vmatpush2.msra.mxu0 0.0
    %4073 = vmatprep.subr.mxu0 0.0
    %4074 = vmatpush2.msra.mxu0 0.0
    %4075 = vmatprep.subr.mxu0 0.0
    %4076 = vmatpush2.msra.mxu0 0.0
    %4077 = vmatprep.subr.mxu0 0.0
    %4078 = vmatpush2.msra.mxu0 0.0
    %4079 = vmatprep.subr.mxu0 0.0
    %4080 = vmatpush2.msra.mxu0 0.0
    %4081 = vmatprep.subr.mxu0 0.0
    %4082 = vmatpush2.msra.mxu0 0.0
    %4083 = vmatprep.subr.mxu0 0.0
    %4084 = vmatpush2.msra.mxu0 0.0
    %4085 = vmatprep.subr.mxu0 0.0
    %4086 = vmatpush2.msra.mxu0 0.0
    %4087 = vmatprep.subr.mxu0 0.0
    %4088 = vmatpush2.msra.mxu0 0.0
    %4089 = vmatprep.subr.mxu0 0.0
    %4090 = vmatpush2.msra.mxu0 0.0
    %4091 = vmatprep.subr.mxu0 0.0
    %4092 = vmatpush2.msra.mxu0 0.0
    %4093 = vmatprep.mubr.f32.mxu0 0.0
    %4094 = vmatmul.mubr.f32.gmra.mxu0 %v3008
    %v4095 = vpop.f32.mrf.mxu0
    %v4096 = vadd.f32 0.0, %v4095
    %v4097 = vpop.f32.mrf.mxu0
    %4098 = vmatprep.mubr.f32.mxu0 0.0
    %4099 = vmatmul.mubr.f32.gmra.mxu0 %v3010
    %v4100 = vpop.f32.mrf.mxu0
    %v4101 = vadd.f32 0.0, %v4100
    %v4102 = vpop.f32.mrf.mxu0
    %4103 = vmatprep.mubr.f32.mxu0 0.0
    %4104 = vmatmul.mubr.f32.gmra.mxu0 %v3012
    %v4105 = vpop.f32.mrf.mxu0
    %v4106 = vadd.f32 0.0, %v4105
    %v4107 = vpop.f32.mrf.mxu0
    %4108 = vmatprep.mubr.f32.mxu0 0.0
    %4109 = vmatmul.mubr.f32.gmra.mxu0 %v3014
    %v4110 = vpop.f32.mrf.mxu0
    %v4111 = vadd.f32 0.0, %v4110
    %v4112 = vpop.f32.mrf.mxu0
    %4113 = vmatprep.mubr.f32.mxu0 0.0
    %4114 = vmatmul.mubr.f32.gmra.mxu0 %v3016
    %v4115 = vpop.f32.mrf.mxu0
    %v4116 = vadd.f32 0.0, %v4115
    %v4117 = vpop.f32.mrf.mxu0
    %4118 = vmatprep.mubr.f32.mxu0 0.0
    %4119 = vmatmul.mubr.f32.gmra.mxu0 %v3018
    %v4120 = vpop.f32.mrf.mxu0
    %v4121 = vadd.f32 0.0, %v4120
    %v4122 = vpop.f32.mrf.mxu0
    %4123 = vmatprep.mubr.f32.mxu0 0.0
    %4124 = vmatmul.mubr.f32.gmra.mxu0 %v3020
    %v4125 = vpop.f32.mrf.mxu0
    %v4126 = vadd.f32 0.0, %v4125
    %v4127 = vpop.f32.mrf.mxu0
    %4128 = vmatprep.mubr.f32.mxu0 0.0
    %4129 = vmatmul.mubr.f32.gmra.mxu0 %v4024
    %v4130 = vpop.f32.mrf.mxu0
    %v4131 = vadd.f32 0.0, %v4130
    %v4132 = vpop.f32.mrf.mxu0
    %4133 = vdwg.mxu0
    %v4134 = vadd.f32 %v4012, %v4096
    %v4135 = vadd.f32 %v4013, %v4101
    %v4136 = vadd.f32 %v4014, %v4106
    %v4137 = vadd.f32 %v4015, %v4111
    %v4138 = vadd.f32 %v4016, %v4116
    %v4139 = vadd.f32 %v4017, %v4121
    %v4140 = vadd.f32 %v4018, %v4126
    %v4141 = vadd.f32 %v4019, %v4131
    %s4142 = scalar_lea.vmem %s5, 144
    %v4143 = vld [vmem:[%s4142] sm:$0xff]
    %v4144 = vld [vmem:[%s4142 + $0x8] sm:$0x1]
    %v4145 = vsel %vm308, %v2864, %v309
    %v4146 = vsel %vm1529, %v4145, 0
    %v4149 = vsel %vm606, %v4144, 0
    %4151 = vmatprep.subr.mxu0 0.0
    %4152 = vmatpush1.msra.mxu0 0.0
    %4153 = vmatprep.subr.mxu0 0.0
    %4154 = vmatpush1.msra.mxu0 0.0
    %4155 = vmatprep.subr.mxu0 0.0
    %4156 = vmatpush1.msra.mxu0 0.0
    %4157 = vmatprep.subr.mxu0 0.0
    %4158 = vmatpush1.msra.mxu0 0.0
    %4159 = vmatprep.subr.mxu0 0.0
    %4160 = vmatpush1.msra.mxu0 0.0
    %4161 = vmatprep.subr.mxu0 0.0
    %4162 = vmatpush1.msra.mxu0 0.0
    %4163 = vmatprep.subr.mxu0 0.0
    %4164 = vmatpush1.msra.mxu0 0.0
    %4165 = vmatprep.subr.mxu0 0.0
    %4166 = vmatpush1.msra.mxu0 0.0
    %4167 = vmatprep.subr.mxu0 0.0
    %4168 = vmatpush1.msra.mxu0 0.0
    %4169 = vmatprep.subr.mxu0 0.0
    %4170 = vmatpush1.msra.mxu0 0.0
    %4171 = vmatprep.subr.mxu0 0.0
    %4172 = vmatpush1.msra.mxu0 0.0
    %4173 = vmatprep.subr.mxu0 0.0
    %4174 = vmatpush1.msra.mxu0 0.0
    %4175 = vmatprep.subr.mxu0 0.0
    %4176 = vmatpush1.msra.mxu0 0.0
    %4177 = vmatprep.subr.mxu0 0.0
    %4178 = vmatpush1.msra.mxu0 0.0
    %4179 = vmatprep.subr.mxu0 0.0
    %4180 = vmatpush1.msra.mxu0 %v4149
    %4181 = vmatprep.subr.mxu0 0.0
    %4182 = vmatpush1.msra.mxu0 %v4143
    %4183 = vmatprep.subr.mxu0 0.0
    %4184 = vmatpush2.msra.mxu0 0.0
    %4185 = vmatprep.subr.mxu0 0.0
    %4186 = vmatpush2.msra.mxu0 0.0
    %4187 = vmatprep.subr.mxu0 0.0
    %4188 = vmatpush2.msra.mxu0 0.0
    %4189 = vmatprep.subr.mxu0 0.0
    %4190 = vmatpush2.msra.mxu0 0.0
    %4191 = vmatprep.subr.mxu0 0.0
    %4192 = vmatpush2.msra.mxu0 0.0
    %4193 = vmatprep.subr.mxu0 0.0
    %4194 = vmatpush2.msra.mxu0 0.0
    %4195 = vmatprep.subr.mxu0 0.0
    %4196 = vmatpush2.msra.mxu0 0.0
    %4197 = vmatprep.subr.mxu0 0.0
    %4198 = vmatpush2.msra.mxu0 0.0
    %4199 = vmatprep.subr.mxu0 0.0
    %4200 = vmatpush2.msra.mxu0 0.0
    %4201 = vmatprep.subr.mxu0 0.0
    %4202 = vmatpush2.msra.mxu0 0.0
    %4203 = vmatprep.subr.mxu0 0.0
    %4204 = vmatpush2.msra.mxu0 0.0
    %4205 = vmatprep.subr.mxu0 0.0
    %4206 = vmatpush2.msra.mxu0 0.0
    %4207 = vmatprep.subr.mxu0 0.0
    %4208 = vmatpush2.msra.mxu0 0.0
    %4209 = vmatprep.subr.mxu0 0.0
    %4210 = vmatpush2.msra.mxu0 0.0
    %4211 = vmatprep.subr.mxu0 0.0
    %4212 = vmatpush2.msra.mxu0 0.0
    %4213 = vmatprep.subr.mxu0 0.0
    %4214 = vmatpush2.msra.mxu0 0.0
    %4215 = vmatprep.mubr.f32.mxu0 0.0
    %4216 = vmatmul.mubr.f32.gmra.mxu0 %v2868
    %v4217 = vpop.f32.mrf.mxu0
    %v4218 = vadd.f32 0.0, %v4217
    %v4219 = vpop.f32.mrf.mxu0
    %4220 = vmatprep.mubr.f32.mxu0 0.0
    %4221 = vmatmul.mubr.f32.gmra.mxu0 %v2870
    %v4222 = vpop.f32.mrf.mxu0
    %v4223 = vadd.f32 0.0, %v4222
    %v4224 = vpop.f32.mrf.mxu0
    %4225 = vmatprep.mubr.f32.mxu0 0.0
    %4226 = vmatmul.mubr.f32.gmra.mxu0 %v2872
    %v4227 = vpop.f32.mrf.mxu0
    %v4228 = vadd.f32 0.0, %v4227
    %v4229 = vpop.f32.mrf.mxu0
    %4230 = vmatprep.mubr.f32.mxu0 0.0
    %4231 = vmatmul.mubr.f32.gmra.mxu0 %v2874
    %v4232 = vpop.f32.mrf.mxu0
    %v4233 = vadd.f32 0.0, %v4232
    %v4234 = vpop.f32.mrf.mxu0
    %4235 = vmatprep.mubr.f32.mxu0 0.0
    %4236 = vmatmul.mubr.f32.gmra.mxu0 %v2876
    %v4237 = vpop.f32.mrf.mxu0
    %v4238 = vadd.f32 0.0, %v4237
    %v4239 = vpop.f32.mrf.mxu0
    %4240 = vmatprep.mubr.f32.mxu0 0.0
    %4241 = vmatmul.mubr.f32.gmra.mxu0 %v2878
    %v4242 = vpop.f32.mrf.mxu0
    %v4243 = vadd.f32 0.0, %v4242
    %v4244 = vpop.f32.mrf.mxu0
    %4245 = vmatprep.mubr.f32.mxu0 0.0
    %4246 = vmatmul.mubr.f32.gmra.mxu0 %v2880
    %v4247 = vpop.f32.mrf.mxu0
    %v4248 = vadd.f32 0.0, %v4247
    %v4249 = vpop.f32.mrf.mxu0
    %4250 = vmatprep.mubr.f32.mxu0 0.0
    %4251 = vmatmul.mubr.f32.gmra.mxu0 %v4146
    %v4252 = vpop.f32.mrf.mxu0
    %v4253 = vadd.f32 0.0, %v4252
    %v4254 = vpop.f32.mrf.mxu0
    %4255 = vdwg.mxu0
    %v4256 = vadd.f32 %v4134, %v4218
    %v4257 = vadd.f32 %v4135, %v4223
    %v4258 = vadd.f32 %v4136, %v4228
    %v4259 = vadd.f32 %v4137, %v4233
    %v4260 = vadd.f32 %v4138, %v4238
    %v4261 = vadd.f32 %v4139, %v4243
    %v4262 = vadd.f32 %v4140, %v4248
    %v4263 = vadd.f32 %v4141, %v4253
    %s4264 = scalar_lea.vmem %s5, 160
    %v4265 = vld [vmem:[%s4264] sm:$0xff]
    %v4266 = vld [vmem:[%s4264 + $0x8] sm:$0x1]
    %v4267 = vsel %vm168, %v3147, %v169
    %v4268 = vsel %vm1529, %v4267, 0
    %v4271 = vsel %vm606, %v4266, 0
    %4273 = vmatprep.subr.mxu0 0.0
    %4274 = vmatpush1.msra.mxu0 0.0
    %4275 = vmatprep.subr.mxu0 0.0
    %4276 = vmatpush1.msra.mxu0 0.0
    %4277 = vmatprep.subr.mxu0 0.0
    %4278 = vmatpush1.msra.mxu0 0.0
    %4279 = vmatprep.subr.mxu0 0.0
    %4280 = vmatpush1.msra.mxu0 0.0
    %4281 = vmatprep.subr.mxu0 0.0
    %4282 = vmatpush1.msra.mxu0 0.0
    %4283 = vmatprep.subr.mxu0 0.0
    %4284 = vmatpush1.msra.mxu0 0.0
    %4285 = vmatprep.subr.mxu0 0.0
    %4286 = vmatpush1.msra.mxu0 0.0
    %4287 = vmatprep.subr.mxu0 0.0
    %4288 = vmatpush1.msra.mxu0 0.0
    %4289 = vmatprep.subr.mxu0 0.0
    %4290 = vmatpush1.msra.mxu0 0.0
    %4291 = vmatprep.subr.mxu0 0.0
    %4292 = vmatpush1.msra.mxu0 0.0
    %4293 = vmatprep.subr.mxu0 0.0
    %4294 = vmatpush1.msra.mxu0 0.0
    %4295 = vmatprep.subr.mxu0 0.0
    %4296 = vmatpush1.msra.mxu0 0.0
    %4297 = vmatprep.subr.mxu0 0.0
    %4298 = vmatpush1.msra.mxu0 0.0
    %4299 = vmatprep.subr.mxu0 0.0
    %4300 = vmatpush1.msra.mxu0 0.0
    %4301 = vmatprep.subr.mxu0 0.0
    %4302 = vmatpush1.msra.mxu0 %v4271
    %4303 = vmatprep.subr.mxu0 0.0
    %4304 = vmatpush1.msra.mxu0 %v4265
    %4305 = vmatprep.subr.mxu0 0.0
    %4306 = vmatpush2.msra.mxu0 0.0
    %4307 = vmatprep.subr.mxu0 0.0
    %4308 = vmatpush2.msra.mxu0 0.0
    %4309 = vmatprep.subr.mxu0 0.0
    %4310 = vmatpush2.msra.mxu0 0.0
    %4311 = vmatprep.subr.mxu0 0.0
    %4312 = vmatpush2.msra.mxu0 0.0
    %4313 = vmatprep.subr.mxu0 0.0
    %4314 = vmatpush2.msra.mxu0 0.0
    %4315 = vmatprep.subr.mxu0 0.0
    %4316 = vmatpush2.msra.mxu0 0.0
    %4317 = vmatprep.subr.mxu0 0.0
    %4318 = vmatpush2.msra.mxu0 0.0
    %4319 = vmatprep.subr.mxu0 0.0
    %4320 = vmatpush2.msra.mxu0 0.0
    %4321 = vmatprep.subr.mxu0 0.0
    %4322 = vmatpush2.msra.mxu0 0.0
    %4323 = vmatprep.subr.mxu0 0.0
    %4324 = vmatpush2.msra.mxu0 0.0
    %4325 = vmatprep.subr.mxu0 0.0
    %4326 = vmatpush2.msra.mxu0 0.0
    %4327 = vmatprep.subr.mxu0 0.0
    %4328 = vmatpush2.msra.mxu0 0.0
    %4329 = vmatprep.subr.mxu0 0.0
    %4330 = vmatpush2.msra.mxu0 0.0
    %4331 = vmatprep.subr.mxu0 0.0
    %4332 = vmatpush2.msra.mxu0 0.0
    %4333 = vmatprep.subr.mxu0 0.0
    %4334 = vmatpush2.msra.mxu0 0.0
    %4335 = vmatprep.subr.mxu0 0.0
    %4336 = vmatpush2.msra.mxu0 0.0
    %4337 = vmatprep.mubr.f32.mxu0 0.0
    %4338 = vmatmul.mubr.f32.gmra.mxu0 %v3151
    %v4339 = vpop.f32.mrf.mxu0
    %v4340 = vadd.f32 0.0, %v4339
    %v4341 = vpop.f32.mrf.mxu0
    %4342 = vmatprep.mubr.f32.mxu0 0.0
    %4343 = vmatmul.mubr.f32.gmra.mxu0 %v3153
    %v4344 = vpop.f32.mrf.mxu0
    %v4345 = vadd.f32 0.0, %v4344
    %v4346 = vpop.f32.mrf.mxu0
    %4347 = vmatprep.mubr.f32.mxu0 0.0
    %4348 = vmatmul.mubr.f32.gmra.mxu0 %v3155
    %v4349 = vpop.f32.mrf.mxu0
    %v4350 = vadd.f32 0.0, %v4349
    %v4351 = vpop.f32.mrf.mxu0
    %4352 = vmatprep.mubr.f32.mxu0 0.0
    %4353 = vmatmul.mubr.f32.gmra.mxu0 %v3157
    %v4354 = vpop.f32.mrf.mxu0
    %v4355 = vadd.f32 0.0, %v4354
    %v4356 = vpop.f32.mrf.mxu0
    %4357 = vmatprep.mubr.f32.mxu0 0.0
    %4358 = vmatmul.mubr.f32.gmra.mxu0 %v3159
    %v4359 = vpop.f32.mrf.mxu0
    %v4360 = vadd.f32 0.0, %v4359
    %v4361 = vpop.f32.mrf.mxu0
    %4362 = vmatprep.mubr.f32.mxu0 0.0
    %4363 = vmatmul.mubr.f32.gmra.mxu0 %v3161
    %v4364 = vpop.f32.mrf.mxu0
    %v4365 = vadd.f32 0.0, %v4364
    %v4366 = vpop.f32.mrf.mxu0
    %4367 = vmatprep.mubr.f32.mxu0 0.0
    %4368 = vmatmul.mubr.f32.gmra.mxu0 %v3163
    %v4369 = vpop.f32.mrf.mxu0
    %v4370 = vadd.f32 0.0, %v4369
    %v4371 = vpop.f32.mrf.mxu0
    %4372 = vmatprep.mubr.f32.mxu0 0.0
    %4373 = vmatmul.mubr.f32.gmra.mxu0 %v4268
    %v4374 = vpop.f32.mrf.mxu0
    %v4375 = vadd.f32 0.0, %v4374
    %v4376 = vpop.f32.mrf.mxu0
    %4377 = vdwg.mxu0
    %v4378 = vadd.f32 %v4256, %v4340
    %v4379 = vadd.f32 %v4257, %v4345
    %v4380 = vadd.f32 %v4258, %v4350
    %v4381 = vadd.f32 %v4259, %v4355
    %v4382 = vadd.f32 %v4260, %v4360
    %v4383 = vadd.f32 %v4261, %v4365
    %v4384 = vadd.f32 %v4262, %v4370
    %v4385 = vadd.f32 %v4263, %v4375
    %v4386 = vld [vmem:[%s6] sm:$0x1]
    %v4388 = vlaneseq
    %v4389 = vshrl.u32 %v4388, 7
    %v4390 = vsub.s32 0, %v4389
    %v4391 = vrot.slane %v4386, %v4390
    %v4393 = vadd.f32 %v4378, %v4391
    %v4394 = vadd.f32 %v4379, %v4391
    %v4395 = vadd.f32 %v4380, %v4391
    %v4396 = vadd.f32 %v4381, %v4391
    %v4397 = vadd.f32 %v4382, %v4391
    %v4398 = vadd.f32 %v4383, %v4391
    %v4399 = vadd.f32 %v4384, %v4391
    %v4400 = vadd.f32 %v4385, %v4391
    %v4401 = vmax.f32 %v4393, 0.0
    %v4402 = vmax.f32 %v4394, 0.0
    %v4403 = vmax.f32 %v4395, 0.0
    %v4404 = vmax.f32 %v4396, 0.0
    %v4405 = vmax.f32 %v4397, 0.0
    %v4406 = vmax.f32 %v4398, 0.0
    %v4407 = vmax.f32 %v4399, 0.0
    %v4408 = vmax.f32 %v4400, 0.0
    %v4409 = vmul.f32 %v4401, %v82
    %v4410 = vmul.f32 %v4402, %v83
    %v4411 = vmul.f32 %v4403, %v84
    %v4412 = vmul.f32 %v4404, %v85
    %v4413 = vmul.f32 %v4405, %v86
    %v4414 = vmul.f32 %v4406, %v87
    %v4415 = vmul.f32 %v4407, %v88
    %v4416 = vmul.f32 %v4408, %v89
    %vm4417 = vcmask 80896
    %v4418 = vsel %vm4417, %v4409, -inf
    %v4419 = vsel %vm4417, %v4410, -inf
    %v4420 = vsel %vm4417, %v4411, -inf
    %v4421 = vmax.f32 %v4418, %v4420
    %v4422 = vsel %vm4417, %v4412, -inf
    %v4423 = vmax.f32 %v4419, %v4422
    %v4424 = vmax.f32 %v4421, %v4423
    %v4425 = vrot.slane %v4424, 4
    %v4426 = vmax.f32 %v4424, %v4425
    %v4427 = vrot.slane %v4426, 2
    %v4428 = vmax.f32 %v4426, %v4427
    %v4429 = vrot.slane %v4428, 1
    %v4430 = vmax.f32 %v4428, %v4429
    %v4431 = vsel %vm4417, %v4413, -inf
    %v4432 = vsel %vm4417, %v4414, -inf
    %v4433 = vsel %vm4417, %v4415, -inf
    %v4434 = vmax.f32 %v4431, %v4433
    %v4435 = vsel %vm4417, %v4416, -inf
    %v4436 = vmax.f32 %v4432, %v4435
    %v4437 = vmax.f32 %v4434, %v4436
    %v4438 = vrot.slane %v4437, 4
    %v4439 = vmax.f32 %v4437, %v4438
    %v4440 = vrot.slane %v4439, 2
    %v4441 = vmax.f32 %v4439, %v4440
    %v4442 = vrot.slane %v4441, 1
    %v4443 = vmax.f32 %v4441, %v4442
    %v4444 = vld [vmem:[%s7] sm:$0xff]
    %v4445 = vld [vmem:[%s7 + $0x8] sm:$0x3]
    %v4446 = vld [vmem:[%s8] sm:$0x1]
    %v4448 = vlaneseq
    %v4449 = vshrl.u32 %v4448, 7
    %v4450 = vsub.s32 0, %v4449
    %v4451 = vrot.slane %v4446, %v4450
    %vm4455 = vcmask 1041409
    %v4456 = vsel %vm4455, %v4443, %v4430
    %v4457 = vsel %vm4417, %v4456, 0
    %v4460 = vsel %vm453, %v4445, 0
    %4462 = vmatprep.subr.mxu0 0.0
    %4463 = vmatpush1.msra.mxu0 0.0
    %4464 = vmatprep.subr.mxu0 0.0
    %4465 = vmatpush1.msra.mxu0 0.0
    %4466 = vmatprep.subr.mxu0 0.0
    %4467 = vmatpush1.msra.mxu0 0.0
    %4468 = vmatprep.subr.mxu0 0.0
    %4469 = vmatpush1.msra.mxu0 0.0
    %4470 = vmatprep.subr.mxu0 0.0
    %4471 = vmatpush1.msra.mxu0 0.0
    %4472 = vmatprep.subr.mxu0 0.0
    %4473 = vmatpush1.msra.mxu0 0.0
    %4474 = vmatprep.subr.mxu0 0.0
    %4475 = vmatpush1.msra.mxu0 0.0
    %4476 = vmatprep.subr.mxu0 0.0
    %4477 = vmatpush1.msra.mxu0 0.0
    %4478 = vmatprep.subr.mxu0 0.0
    %4479 = vmatpush1.msra.mxu0 0.0
    %4480 = vmatprep.subr.mxu0 0.0
    %4481 = vmatpush1.msra.mxu0 0.0
    %4482 = vmatprep.subr.mxu0 0.0
    %4483 = vmatpush1.msra.mxu0 0.0
    %4484 = vmatprep.subr.mxu0 0.0
    %4485 = vmatpush1.msra.mxu0 0.0
    %4486 = vmatprep.subr.mxu0 0.0
    %4487 = vmatpush1.msra.mxu0 0.0
    %4488 = vmatprep.subr.mxu0 0.0
    %4489 = vmatpush1.msra.mxu0 0.0
    %4490 = vmatprep.subr.mxu0 0.0
    %4491 = vmatpush1.msra.mxu0 %v4460
    %4492 = vmatprep.subr.mxu0 0.0
    %4493 = vmatpush1.msra.mxu0 %v4444
    %4494 = vmatprep.subr.mxu0 0.0
    %4495 = vmatpush2.msra.mxu0 0.0
    %4496 = vmatprep.subr.mxu0 0.0
    %4497 = vmatpush2.msra.mxu0 0.0
    %4498 = vmatprep.subr.mxu0 0.0
    %4499 = vmatpush2.msra.mxu0 0.0
    %4500 = vmatprep.subr.mxu0 0.0
    %4501 = vmatpush2.msra.mxu0 0.0
    %4502 = vmatprep.subr.mxu0 0.0
    %4503 = vmatpush2.msra.mxu0 0.0
    %4504 = vmatprep.subr.mxu0 0.0
    %4505 = vmatpush2.msra.mxu0 0.0
    %4506 = vmatprep.subr.mxu0 0.0
    %4507 = vmatpush2.msra.mxu0 0.0
    %4508 = vmatprep.subr.mxu0 0.0
    %4509 = vmatpush2.msra.mxu0 0.0
    %4510 = vmatprep.subr.mxu0 0.0
    %4511 = vmatpush2.msra.mxu0 0.0
    %4512 = vmatprep.subr.mxu0 0.0
    %4513 = vmatpush2.msra.mxu0 0.0
    %4514 = vmatprep.subr.mxu0 0.0
    %4515 = vmatpush2.msra.mxu0 0.0
    %4516 = vmatprep.subr.mxu0 0.0
    %4517 = vmatpush2.msra.mxu0 0.0
    %4518 = vmatprep.subr.mxu0 0.0
    %4519 = vmatpush2.msra.mxu0 0.0
    %4520 = vmatprep.subr.mxu0 0.0
    %4521 = vmatpush2.msra.mxu0 0.0
    %4522 = vmatprep.subr.mxu0 0.0
    %4523 = vmatpush2.msra.mxu0 0.0
    %4524 = vmatprep.subr.mxu0 0.0
    %4525 = vmatpush2.msra.mxu0 0.0
    %4526 = vmatprep.mubr.f32.mxu0 0.0
    %4527 = vmatmul.mubr.f32.gmra.mxu0 %v4457
    %v4528 = vpop.f32.mrf.mxu0
    %v4529 = vadd.f32 %v4451, %v4528
    %v4530 = vpop.f32.mrf.mxu0
    %4531 = vdwg.mxu0
    %4532 = vst [vmem:[#allocation2] sm:$0x3] %v4529
    // Predicated region
    $region38: #{tpu_custom_call.1} parent=1 // pred_check
      _
    $region39: #{tpu_custom_call.1} parent=1 // pred_check_branch
      %4534 = sbr.rel (0) target = $region41
    $region40: #{tpu_custom_call.1} parent=1 // pred_region
      %s4536 = ssub.s32 32, 32
      %4537 = vsyncadd [#allocation3], %s4536
      %s4539 = sshll.u32 [#allocation2], 4
      %s4540 = int_to_ptr.vmem [resolvable:$true] %s4539
      %4542 = dma.vmem_to_hbm [thread:$0]  %s4540, 32, %s9, [#allocation3]
    $region41: #{tpu_custom_call.1} parent=1 // pred_fallthru
      _
    // Predicated region
    $region42: #{tpu_custom_call.1} parent=1 // pred_check
      _
    $region43: #{tpu_custom_call.1} parent=1 // pred_check_branch
      %4544 = sbr.rel (0) target = $region45
    $region44: #{tpu_custom_call.1} parent=1 // pred_region
      %4545 = dma.done [#allocation3], 32
    $region45: #{tpu_custom_call.1} parent=1 // pred_fallthru
      _
    %4546 = vsyncpa [#allocation3], 1

</llo_original>
